<compile_context>
chip_gen: v5e
topology: v5e:2x2
jax: 0.10.0
libtpu: 0.0.40
codegen_flags: <defaults>
</compile_context>

<pallas_src>
import functools

import jax
import jax.numpy as jnp
from jax.experimental import pallas as pl
from jax.experimental.pallas import tpu as pltpu

NEG_INF = -1e9
LANES = 128

# Packed (stacked over layers, scale-folded, padded, bf16 weights) argument order.
PACKED_ORDER = (
    "w_qkv1", "b_qkv1", "w_o1", "b_o1", "ln1_g", "ln1_b",
    "w_q2", "b_q2", "w_kv2", "b_kv2", "w_o2", "b_o2", "ln2_g", "ln2_b",
    "w_fc1", "b_fc1", "w_fc2", "b_fc2", "ln3_g", "ln3_b",
)


# ----------------------------- Pallas kernel ------------------------------
def decoder_kernel(num_heads, num_layers, e_true, batch, t_len, s_len,
                   x_ref, enc_ref, self_bias_ref, cross_bias_ref, *rest):
    weight_refs = rest[:-1]
    out_ref = rest[-1]
    (w_qkv1, b_qkv1, w_o1, b_o1, ln1_g, ln1_b,
     w_q2, b_q2, w_kv2, b_kv2, w_o2, b_o2, ln2_g, ln2_b,
     w_fc1, b_fc1, w_fc2, b_fc2, ln3_g, ln3_b) = weight_refs

    H, E = num_heads, e_true
    D = E // H
    BT, Ep = x_ref.shape                      # (B*T, E_pad) — E_pad is lane-dense
    inv_e = 1.0 / E

    # lane mask: 1.0 on the first E (real) lanes, 0.0 on zero-padding lanes.
    lane_idx = jax.lax.broadcasted_iota(jnp.int32, (1, Ep), 1)
    ln_mask = (lane_idx < E).astype(jnp.float32)

    x = x_ref[...]                            # (B*T, Ep) f32, padded lanes are 0
    enc_bf = enc_ref[...].astype(jnp.bfloat16)  # (B*S, Ep) — cast once, reused every layer
    self_bias = self_bias_ref[...]            # (B, T, T) additive (causal + tgt key-pad)
    cross_bias = cross_bias_ref[...]          # (B, T, S) additive (src key-pad)

    def layernorm(v, g, b):
        # masked LayerNorm over the true E lanes; padded lanes come out exactly 0
        vm = v * ln_mask
        mu = jnp.sum(vm, axis=-1, keepdims=True) * inv_e
        xc = (vm - mu) * ln_mask
        var = jnp.sum(xc * xc, axis=-1, keepdims=True) * inv_e
        return xc * jax.lax.rsqrt(var + 1e-5) * g + b

    def attention(q3, kv3, q_off, k_off, v_off, bias, w_o3, b_o):
        """q3: (B, T, wq) bf16 (scale pre-folded), kv3: (B, s, wkv) bf16 with K at lane
        offset k_off and V at v_off.  Heads are contracted directly into the output
        projection (w_o3 is (H, D, E_pad)) — no transposes / concatenates."""
        acc = jnp.zeros((BT, Ep), jnp.float32)
        for h in range(H):                    # static unroll, tiny H
            qh = q3[:, :, q_off + h * D:q_off + (h + 1) * D]    # (B, T, D)
            kh = kv3[:, :, k_off + h * D:k_off + (h + 1) * D]   # (B, s, D)
            vh = kv3[:, :, v_off + h * D:v_off + (h + 1) * D]   # (B, s, D)
            s = jnp.einsum("btd,bsd->bts", qh, kh,
                           preferred_element_type=jnp.float32)  # (B, T, s) f32
            s = s + bias
            s = s - jnp.max(s, axis=-1, keepdims=True)
            p = jnp.exp(s)
            p = p * pl.reciprocal(jnp.sum(p, axis=-1, keepdims=True), approx=True)
            o = jnp.einsum("bts,bsd->btd", p.astype(jnp.bfloat16), vh,
                           preferred_element_type=jnp.float32)  # (B, T, D) f32
            acc = acc + jnp.dot(o.reshape(BT, D).astype(jnp.bfloat16), w_o3[h],
                                preferred_element_type=jnp.float32)
        return acc + b_o                                        # (B*T, Ep)

    # TODO(synk): for large num_layers switch to lax.fori_loop with dynamic weight
    # indexing (w_qkv1[l]) so vreg live ranges / compile time stay bounded.
    for l in range(num_layers):               # static unroll; activations stay in VMEM
        # --- self attention + residual + LN ---
        qkv = (jnp.dot(x.astype(jnp.bfloat16), w_qkv1[l],
                       preferred_element_type=jnp.float32) + b_qkv1[l])
        qkv = qkv.astype(jnp.bfloat16).reshape(batch, t_len, 3 * E)
        att = attention(qkv, qkv, 0, E, 2 * E, self_bias, w_o1[l], b_o1[l])
        x = layernorm(x + att, ln1_g[l], ln1_b[l])

        # --- cross attention + residual + LN ---
        q2 = (jnp.dot(x.astype(jnp.bfloat16), w_q2[l],
                      preferred_element_type=jnp.float32) + b_q2[l])
        q2 = q2.astype(jnp.bfloat16).reshape(batch, t_len, E)
        kv2 = (jnp.dot(enc_bf, w_kv2[l],
                       preferred_element_type=jnp.float32) + b_kv2[l])
        kv2 = kv2.astype(jnp.bfloat16).reshape(batch, s_len, 2 * E)
        att2 = attention(q2, kv2, 0, 0, E, cross_bias, w_o2[l], b_o2[l])
        x = layernorm(x + att2, ln2_g[l], ln2_b[l])

        # --- feed-forward + residual + LN ---
        y = jnp.dot(x.astype(jnp.bfloat16), w_fc1[l],
                    preferred_element_type=jnp.float32) + b_fc1[l]
        y = jnp.maximum(y, 0.0)
        y = jnp.dot(y.astype(jnp.bfloat16), w_fc2[l],
                    preferred_element_type=jnp.float32) + b_fc2[l]
        x = layernorm(x + y, ln3_g[l], ln3_b[l])

    out_ref[...] = x                          # (B*T, Ep) — lane-dense unmasked stores


# ----------------------------- wrapper ------------------------------
def _pad_axis(a, axis, size):
    if a.shape[axis] == size:
        return a
    cfg = [(0, 0)] * a.ndim
    cfg[axis] = (0, size - a.shape[axis])
    return jnp.pad(a, cfg)


def pack_params(layer_params, num_heads, e_pad, dff_pad):
    """Stack per-layer params along a leading L axis, fold 1/sqrt(head_dim) into the
    Q projections, pre-split cross-attention Q/KV, reshape the output projections to
    (H, D, E_pad) so heads contract directly in the matmul, zero-pad embed / hidden
    dims to lane-dense widths, and cast matmul weights to bf16."""
    E = layer_params[0]["w_qkv1"].shape[0]
    H = num_heads
    D = E // H
    scale = jnp.float32(1.0 / (D ** 0.5))
    bf16 = jnp.bfloat16

    def stack(fn, dtype=None):
        arr = jnp.stack([fn(p) for p in layer_params], axis=0)
        return arr.astype(dtype) if dtype is not None else arr

    packed = {
        # self-attention: fused QKV (scale folded into Q), input dim zero-padded
        "w_qkv1": stack(lambda p: _pad_axis(jnp.concatenate(
            [p["w_qkv1"][:, :E] * scale, p["w_qkv1"][:, E:]], axis=1), 0, e_pad), bf16),
        "b_qkv1": stack(lambda p: jnp.concatenate(
            [p["b_qkv1"][:, :E] * scale, p["b_qkv1"][:, E:]], axis=1)),
        # output projection as (H, D, E_pad): heads contracted inside the matmul
        "w_o1": stack(lambda p: _pad_axis(p["w_o1"].reshape(H, D, E), 2, e_pad), bf16),
        "b_o1": stack(lambda p: _pad_axis(p["b_o1"], 1, e_pad)),
        "ln1_g": stack(lambda p: _pad_axis(p["ln1_g"], 1, e_pad)),  # zero-pad => padded lanes stay 0
        "ln1_b": stack(lambda p: _pad_axis(p["ln1_b"], 1, e_pad)),
        # cross-attention: Q (scale folded) and fused K|V pre-split
        "w_q2": stack(lambda p: _pad_axis(p["w_qkv2"][:, :E] * scale, 0, e_pad), bf16),
        "b_q2": stack(lambda p: p["b_qkv2"][:, :E] * scale),
        "w_kv2": stack(lambda p: _pad_axis(p["w_qkv2"][:, E:], 0, e_pad), bf16),
        "b_kv2": stack(lambda p: p["b_qkv2"][:, E:]),
        "w_o2": stack(lambda p: _pad_axis(p["w_o2"].reshape(H, D, E), 2, e_pad), bf16),
        "b_o2": stack(lambda p: _pad_axis(p["b_o2"], 1, e_pad)),
        "ln2_g": stack(lambda p: _pad_axis(p["ln2_g"], 1, e_pad)),
        "ln2_b": stack(lambda p: _pad_axis(p["ln2_b"], 1, e_pad)),
        # feed-forward
        "w_fc1": stack(lambda p: _pad_axis(_pad_axis(p["w_fc1"], 0, e_pad), 1, dff_pad), bf16),
        "b_fc1": stack(lambda p: _pad_axis(p["b_fc1"], 1, dff_pad)),
        "w_fc2": stack(lambda p: _pad_axis(_pad_axis(p["w_fc2"], 0, dff_pad), 1, e_pad), bf16),
        "b_fc2": stack(lambda p: _pad_axis(p["b_fc2"], 1, e_pad)),
        "ln3_g": stack(lambda p: _pad_axis(p["ln3_g"], 1, e_pad)),
        "ln3_b": stack(lambda p: _pad_axis(p["ln3_b"], 1, e_pad)),
    }
    return [packed[name] for name in PACKED_ORDER]


def decoder_forward(x, encoded, tgt_pad_mask, src_pad_mask, attn_mask_bool,
                    layer_params, num_heads):
    """Full Decoder forward. Boolean masks follow PyTorch semantics (True = masked)."""
    B, T, E = x.shape
    S = encoded.shape[1]
    num_layers = len(layer_params)
    dff = layer_params[0]["w_fc1"].shape[1]
    e_pad = max(LANES, ((E + LANES - 1) // LANES) * LANES)
    dff_pad = max(LANES, ((dff + LANES - 1) // LANES) * LANES)

    # Combine causal mask + target key-padding into ONE additive bias; materialize
    # the full (B,T,T)/(B,T,S) biases here so no broadcast is re-emitted in-kernel
    # per (unrolled) layer.
    tgt_b = jnp.where(tgt_pad_mask, NEG_INF, 0.0).astype(jnp.float32)       # (B, T)
    src_b = jnp.where(src_pad_mask, NEG_INF, 0.0).astype(jnp.float32)       # (B, S)
    causal = jnp.where(attn_mask_bool, NEG_INF, 0.0).astype(jnp.float32)    # (T, T)
    self_bias = causal[None, :, :] + tgt_b[:, None, :]                      # (B, T, T)
    cross_bias = jnp.broadcast_to(src_b[:, None, :], (B, T, S))             # (B, T, S)

    # lane-dense activations: fold batch into rows, zero-pad embed to 128-lane multiple
    def pad_lanes(a, to):
        return a if a.shape[-1] == to else jnp.pad(a, ((0, 0), (0, to - a.shape[-1])))

    x2d = pad_lanes(x.reshape(B * T, E).astype(jnp.float32), e_pad)
    enc2d = pad_lanes(encoded.reshape(B * S, E).astype(jnp.float32), e_pad)

    weights = pack_params(layer_params, num_heads, e_pad, dff_pad)

    def full_spec(a):
        nd = a.ndim
        return pl.BlockSpec(a.shape, lambda i, _nd=nd: (0,) * _nd)

    inputs = [x2d, enc2d, self_bias, cross_bias] + weights
    in_specs = [full_spec(a) for a in inputs]
    out_spec = pl.BlockSpec((B * T, e_pad), lambda i: (0, 0))

    kernel = functools.partial(decoder_kernel, num_heads, num_layers, E, B, T, S)
    out2d = pl.pallas_call(
        kernel,
        out_shape=jax.ShapeDtypeStruct((B * T, e_pad), jnp.float32),
        grid_spec=pltpu.PrefetchScalarGridSpec(
            num_scalar_prefetch=0,
            grid=(1,),                       # whole batch in one invocation
            in_specs=in_specs,
            out_specs=out_spec,
        ),
        compiler_params=pltpu.CompilerParams(
            dimension_semantics=("arbitrary",),
            vmem_limit_bytes=32 * 1024 * 1024),  # explicit (v5e default scoped is 16 MiB)
    )(*inputs)
    # TODO(synk): at real sizes add a parallel token-tile grid axis so both v7x
    # TensorCores stay busy; at T=8 a single block is the right choice.
    return out2d[:, :E].reshape(B, T, E)


# ----------------------------- pure-JAX reference ------------------------------
def _ref_mha(q_in, kv_in, w_qkv, b_qkv, w_o, b_o, kp_bias, a_bias, num_heads):
    hp = jax.lax.Precision.HIGHEST
    B, T, E = q_in.shape
    S = kv_in.shape[1]
    D = E // num_heads
    q = jnp.einsum("bte,ef->btf", q_in, w_qkv[:, :E], precision=hp) + b_qkv[0, :E]
    k = jnp.einsum("bse,ef->bsf", kv_in, w_qkv[:, E:2 * E], precision=hp) + b_qkv[0, E:2 * E]
    v = jnp.einsum("bse,ef->bsf", kv_in, w_qkv[:, 2 * E:], precision=hp) + b_qkv[0, 2 * E:]
    q = q.reshape(B, T, num_heads, D).transpose(0, 2, 1, 3)
    k = k.reshape(B, S, num_heads, D).transpose(0, 2, 1, 3)
    v = v.reshape(B, S, num_heads, D).transpose(0, 2, 1, 3)
    s = jnp.einsum("bhtd,bhsd->bhts", q, k, precision=hp) / (D ** 0.5)
    s = s + kp_bias[:, :, None, :]
    if a_bias is not None:
        s = s + a_bias[None, None]
    p = jax.nn.softmax(s, axis=-1)
    o = jnp.einsum("bhts,bhsd->bhtd", p, v, precision=hp)
    o = o.transpose(0, 2, 1, 3).reshape(B, T, E)
    return jnp.einsum("bte,ef->btf", o, w_o, precision=hp) + b_o[0]


def _ref_layernorm(x, g, b, eps=1e-5):
    mu = jnp.mean(x, axis=-1, keepdims=True)
    var = jnp.mean((x - mu) ** 2, axis=-1, keepdims=True)
    return (x - mu) * jax.lax.rsqrt(var + eps) * g + b


def decoder_ref(x, encoded, tgt_pad_mask, src_pad_mask, attn_mask_bool,
                layer_params, num_heads):
    hp = jax.lax.Precision.HIGHEST
    B, T, _ = x.shape
    S = encoded.shape[1]
    tgt_bias = jnp.where(tgt_pad_mask, NEG_INF, 0.0).astype(jnp.float32).reshape(B, 1, T)
    src_bias = jnp.where(src_pad_mask, NEG_INF, 0.0).astype(jnp.float32).reshape(B, 1, S)
    attn_bias = jnp.where(attn_mask_bool, NEG_INF, 0.0).astype(jnp.float32)
    for p in layer_params:
        att = _ref_mha(x, x, p["w_qkv1"], p["b_qkv1"], p["w_o1"], p["b_o1"],
                       tgt_bias, attn_bias, num_heads)
        att_norm = _ref_layernorm(att + x, p["ln1_g"], p["ln1_b"])
        att2 = _ref_mha(att_norm, encoded, p["w_qkv2"], p["b_qkv2"], p["w_o2"], p["b_o2"],
                        src_bias, None, num_heads)
        att2_norm = _ref_layernorm(att_norm + att2, p["ln2_g"], p["ln2_b"])
        y = jnp.einsum("bte,eh->bth", att2_norm, p["w_fc1"], precision=hp) + p["b_fc1"][0]
        y = jnp.maximum(y, 0.0)
        y = jnp.einsum("bth,he->bte", y, p["w_fc2"], precision=hp) + p["b_fc2"][0]
        x = _ref_layernorm(y + att2_norm, p["ln3_g"], p["ln3_b"])
    return x


# ----------------------------- parameter init ------------------------------
def init_params(key, num_layers, embed_dim, d_hidden):
    E, H = embed_dim, d_hidden
    layers = []
    for i in range(num_layers):
        keys = jax.random.split(jax.random.fold_in(key, i), 10)

        def nrm(k, shape):
            return (0.02 * jax.random.normal(k, shape)).astype(jnp.float32)

        layers.append(dict(
            # self-attention (weights pre-transposed to (in, out) layout)
            w_qkv1=nrm(keys[0], (E, 3 * E)), b_qkv1=nrm(keys[1], (1, 3 * E)),
            w_o1=nrm(keys[2], (E, E)),       b_o1=jnp.zeros((1, E), jnp.float32),
            ln1_g=jnp.ones((1, E), jnp.float32), ln1_b=jnp.zeros((1, E), jnp.float32),
            # cross-attention
            w_qkv2=nrm(keys[3], (E, 3 * E)), b_qkv2=nrm(keys[4], (1, 3 * E)),
            w_o2=nrm(keys[5], (E, E)),       b_o2=jnp.zeros((1, E), jnp.float32),
            ln2_g=jnp.ones((1, E), jnp.float32), ln2_b=jnp.zeros((1, E), jnp.float32),
            # feed-forward
            w_fc1=nrm(keys[6], (E, H)),      b_fc1=nrm(keys[7], (1, H)),
            w_fc2=nrm(keys[8], (H, E)),      b_fc2=nrm(keys[9], (1, E)),
            ln3_g=jnp.ones((1, E), jnp.float32), ln3_b=jnp.zeros((1, E), jnp.float32),
        ))
    return layers


# ----------------------------- main ------------------------------
if __name__ == "__main__":
    NUM_LAYERS = 2
    EMBED_DIM = 32
    NUM_HEADS = 4
    D_HIDDEN = 64
    B, T, S = 2, 8, 8

    key = jax.random.PRNGKey(0)
    kx, kenc, kp = jax.random.split(key, 3)
    x = jax.random.normal(kx, (B, T, EMBED_DIM), jnp.float32)
    encoded = jax.random.normal(kenc, (B, S, EMBED_DIM), jnp.float32)

    # PyTorch-style boolean masks: True = position is padded / not attended.
    tgt_pad_mask = jnp.zeros((B, T), bool).at[1, T - 1].set(True)
    src_pad_mask = jnp.zeros((B, S), bool).at[1, S - 1].set(True)
    attn_mask = jnp.triu(jnp.ones((T, T), bool), k=1)   # causal mask

    params = init_params(kp, NUM_LAYERS, EMBED_DIM, D_HIDDEN)

    out = decoder_forward(x, encoded, tgt_pad_mask, src_pad_mask, attn_mask,
                          params, NUM_HEADS)
    out = jax.block_until_ready(out)

    ref = decoder_ref(x, encoded, tgt_pad_mask, src_pad_mask, attn_mask,
                      params, NUM_HEADS)
    max_diff = float(jnp.max(jnp.abs(out - ref)))
    assert bool(jnp.all(jnp.isfinite(out))), "non-finite values in kernel output"
    assert max_diff < 5e-2, f"kernel/reference mismatch, max_diff={max_diff}"

    print("KERNEL_OK")
</pallas_src>

<mosaic_0001>
module attributes {stable_mosaic.version = 11 : i64} {
  func.func @decoder_kernel(%arg0: i32, %arg1: memref<16x128xf32, #tpu.memory_space<vmem>>, %arg2: memref<16x128xf32, #tpu.memory_space<vmem>>, %arg3: memref<2x8x8xf32, #tpu.memory_space<vmem>>, %arg4: memref<2x8x8xf32, #tpu.memory_space<vmem>>, %arg5: memref<2x128x96xbf16, #tpu.memory_space<vmem>>, %arg6: memref<2x1x96xf32, #tpu.memory_space<vmem>>, %arg7: memref<2x4x8x128xbf16, #tpu.memory_space<vmem>>, %arg8: memref<2x1x128xf32, #tpu.memory_space<vmem>>, %arg9: memref<2x1x128xf32, #tpu.memory_space<vmem>>, %arg10: memref<2x1x128xf32, #tpu.memory_space<vmem>>, %arg11: memref<2x128x32xbf16, #tpu.memory_space<vmem>>, %arg12: memref<2x1x32xf32, #tpu.memory_space<vmem>>, %arg13: memref<2x128x64xbf16, #tpu.memory_space<vmem>>, %arg14: memref<2x1x64xf32, #tpu.memory_space<vmem>>, %arg15: memref<2x4x8x128xbf16, #tpu.memory_space<vmem>>, %arg16: memref<2x1x128xf32, #tpu.memory_space<vmem>>, %arg17: memref<2x1x128xf32, #tpu.memory_space<vmem>>, %arg18: memref<2x1x128xf32, #tpu.memory_space<vmem>>, %arg19: memref<2x128x128xbf16, #tpu.memory_space<vmem>>, %arg20: memref<2x1x128xf32, #tpu.memory_space<vmem>>, %arg21: memref<2x128x128xbf16, #tpu.memory_space<vmem>>, %arg22: memref<2x1x128xf32, #tpu.memory_space<vmem>>, %arg23: memref<2x1x128xf32, #tpu.memory_space<vmem>>, %arg24: memref<2x1x128xf32, #tpu.memory_space<vmem>>, %arg25: memref<16x128xf32, #tpu.memory_space<vmem>>) attributes {dimension_semantics = [#tpu.dimension_semantics<arbitrary>], iteration_bounds = array<i64: 1>, scalar_prefetch = 0 : i64, scratch_operands = 0 : i64, tpu.core_type = #tpu.core_type<tc>, window_params = [{pipeline_mode = #tpu.pipeline_mode<synchronous>, transform_indices = @transform_0, window_bounds = array<i64: 16, 128>}, {pipeline_mode = #tpu.pipeline_mode<synchronous>, transform_indices = @transform_1, window_bounds = array<i64: 16, 128>}, {pipeline_mode = #tpu.pipeline_mode<synchronous>, transform_indices = @transform_2, window_bounds = array<i64: 2, 8, 8>}, {pipeline_mode = #tpu.pipeline_mode<synchronous>, transform_indices = @transform_3, window_bounds = array<i64: 2, 8, 8>}, {pipeline_mode = #tpu.pipeline_mode<synchronous>, transform_indices = @transform_4, window_bounds = array<i64: 2, 128, 96>}, {pipeline_mode = #tpu.pipeline_mode<synchronous>, transform_indices = @transform_5, window_bounds = array<i64: 2, 1, 96>}, {pipeline_mode = #tpu.pipeline_mode<synchronous>, transform_indices = @transform_6, window_bounds = array<i64: 2, 4, 8, 128>}, {pipeline_mode = #tpu.pipeline_mode<synchronous>, transform_indices = @transform_7, window_bounds = array<i64: 2, 1, 128>}, {pipeline_mode = #tpu.pipeline_mode<synchronous>, transform_indices = @transform_8, window_bounds = array<i64: 2, 1, 128>}, {pipeline_mode = #tpu.pipeline_mode<synchronous>, transform_indices = @transform_9, window_bounds = array<i64: 2, 1, 128>}, {pipeline_mode = #tpu.pipeline_mode<synchronous>, transform_indices = @transform_10, window_bounds = array<i64: 2, 128, 32>}, {pipeline_mode = #tpu.pipeline_mode<synchronous>, transform_indices = @transform_11, window_bounds = array<i64: 2, 1, 32>}, {pipeline_mode = #tpu.pipeline_mode<synchronous>, transform_indices = @transform_12, window_bounds = array<i64: 2, 128, 64>}, {pipeline_mode = #tpu.pipeline_mode<synchronous>, transform_indices = @transform_13, window_bounds = array<i64: 2, 1, 64>}, {pipeline_mode = #tpu.pipeline_mode<synchronous>, transform_indices = @transform_14, window_bounds = array<i64: 2, 4, 8, 128>}, {pipeline_mode = #tpu.pipeline_mode<synchronous>, transform_indices = @transform_15, window_bounds = array<i64: 2, 1, 128>}, {pipeline_mode = #tpu.pipeline_mode<synchronous>, transform_indices = @transform_16, window_bounds = array<i64: 2, 1, 128>}, {pipeline_mode = #tpu.pipeline_mode<synchronous>, transform_indices = @transform_17, window_bounds = array<i64: 2, 1, 128>}, {pipeline_mode = #tpu.pipeline_mode<synchronous>, transform_indices = @transform_18, window_bounds = array<i64: 2, 128, 128>}, {pipeline_mode = #tpu.pipeline_mode<synchronous>, transform_indices = @transform_19, window_bounds = array<i64: 2, 1, 128>}, {pipeline_mode = #tpu.pipeline_mode<synchronous>, transform_indices = @transform_20, window_bounds = array<i64: 2, 128, 128>}, {pipeline_mode = #tpu.pipeline_mode<synchronous>, transform_indices = @transform_21, window_bounds = array<i64: 2, 1, 128>}, {pipeline_mode = #tpu.pipeline_mode<synchronous>, transform_indices = @transform_22, window_bounds = array<i64: 2, 1, 128>}, {pipeline_mode = #tpu.pipeline_mode<synchronous>, transform_indices = @transform_23, window_bounds = array<i64: 2, 1, 128>}, {pipeline_mode = #tpu.pipeline_mode<synchronous>, transform_indices = @transform_24, window_bounds = array<i64: 16, 128>}]} {
    %0 = tpu.iota {dimensions = array<i32: 1>} : vector<1x128xi32>
    %c32_i32 = arith.constant 32 : i32
    %1 = vector.broadcast %c32_i32 : i32 to vector<1x128xi32>
    %2 = arith.cmpi slt, %0, %1 : vector<1x128xi32>
    %3 = arith.extui %2 : vector<1x128xi1> to vector<1x128xi32>
    %4 = arith.sitofp %3 : vector<1x128xi32> to vector<1x128xf32>
    %c0 = arith.constant 0 : index
    %c0_0 = arith.constant 0 : index
    %5 = vector.load %arg1[%c0, %c0_0] : memref<16x128xf32, #tpu.memory_space<vmem>>, vector<16x128xf32>
    %c0_1 = arith.constant 0 : index
    %c0_2 = arith.constant 0 : index
    %6 = vector.load %arg2[%c0_1, %c0_2] : memref<16x128xf32, #tpu.memory_space<vmem>>, vector<16x128xf32>
    %7 = arith.truncf %6 : vector<16x128xf32> to vector<16x128xbf16>
    %c0_3 = arith.constant 0 : index
    %c0_4 = arith.constant 0 : index
    %c0_5 = arith.constant 0 : index
    %8 = vector.load %arg3[%c0_3, %c0_4, %c0_5] : memref<2x8x8xf32, #tpu.memory_space<vmem>>, vector<2x8x8xf32>
    %c0_6 = arith.constant 0 : index
    %c0_7 = arith.constant 0 : index
    %c0_8 = arith.constant 0 : index
    %9 = vector.load %arg4[%c0_6, %c0_7, %c0_8] : memref<2x8x8xf32, #tpu.memory_space<vmem>>, vector<2x8x8xf32>
    %10 = arith.truncf %5 : vector<16x128xf32> to vector<16x128xbf16>
    %c0_9 = arith.constant 0 : index
    %c0_10 = arith.constant 0 : index
    %c0_11 = arith.constant 0 : index
    %11 = vector.load %arg5[%c0_9, %c0_10, %c0_11] : memref<2x128x96xbf16, #tpu.memory_space<vmem>>, vector<1x128x96xbf16>
    %12 = vector.shape_cast %11 : vector<1x128x96xbf16> to vector<128x96xbf16>
    %cst = arith.constant dense<0.000000e+00> : vector<16x96xf32>
    %13 = tpu.matmul %10, %12, %cst {dimension_numbers = #tpu.dot_dimension_numbers<[1], [0], [0], [1], [0, 0, 1, 1], [], []>} : vector<16x128xbf16>, vector<128x96xbf16>, vector<16x96xf32> -> vector<16x96xf32>
    %c0_12 = arith.constant 0 : index
    %c0_13 = arith.constant 0 : index
    %c0_14 = arith.constant 0 : index
    %14 = vector.load %arg6[%c0_12, %c0_13, %c0_14] : memref<2x1x96xf32, #tpu.memory_space<vmem>>, vector<1x1x96xf32>
    %15 = vector.shape_cast %14 : vector<1x1x96xf32> to vector<1x96xf32>
    %16 = vector.broadcast %15 : vector<1x96xf32> to vector<16x96xf32>
    %17 = arith.addf %13, %16 : vector<16x96xf32>
    %18 = arith.truncf %17 : vector<16x96xf32> to vector<16x96xbf16>
    %19 = vector.shape_cast %18 : vector<16x96xbf16> to vector<2x8x96xbf16>
    %c0_15 = arith.constant 0 : index
    %c0_16 = arith.constant 0 : index
    %c0_17 = arith.constant 0 : index
    %c0_18 = arith.constant 0 : index
    %20 = vector.load %arg7[%c0_15, %c0_16, %c0_17, %c0_18] : memref<2x4x8x128xbf16, #tpu.memory_space<vmem>>, vector<1x4x8x128xbf16>
    %21 = vector.shape_cast %20 : vector<1x4x8x128xbf16> to vector<4x8x128xbf16>
    %c0_19 = arith.constant 0 : index
    %c0_20 = arith.constant 0 : index
    %c0_21 = arith.constant 0 : index
    %22 = vector.load %arg8[%c0_19, %c0_20, %c0_21] : memref<2x1x128xf32, #tpu.memory_space<vmem>>, vector<1x1x128xf32>
    %23 = vector.shape_cast %22 : vector<1x1x128xf32> to vector<1x128xf32>
    %cst_22 = arith.constant 0.000000e+00 : f32
    %24 = vector.broadcast %cst_22 : f32 to vector<16x128xf32>
    %25 = vector.extract_strided_slice %19 {offsets = [0, 0, 0], sizes = [2, 8, 8], strides = [1, 1, 1]} : vector<2x8x96xbf16> to vector<2x8x8xbf16>
    %26 = vector.extract_strided_slice %19 {offsets = [0, 0, 32], sizes = [2, 8, 8], strides = [1, 1, 1]} : vector<2x8x96xbf16> to vector<2x8x8xbf16>
    %27 = vector.extract_strided_slice %19 {offsets = [0, 0, 64], sizes = [2, 8, 8], strides = [1, 1, 1]} : vector<2x8x96xbf16> to vector<2x8x8xbf16>
    "tpu.trace_start"() <{level = 10 : i32, message = "btd,bsd->bts"}> : () -> ()
    %cst_23 = arith.constant dense<0.000000e+00> : vector<2x8x8xf32>
    %28 = tpu.matmul %25, %26, %cst_23 {dimension_numbers = #tpu.dot_dimension_numbers<[2], [2], [1], [1], [0, 0, 0, 1, 1, 1], [0], [0]>} : vector<2x8x8xbf16>, vector<2x8x8xbf16>, vector<2x8x8xf32> -> vector<2x8x8xf32>
    "tpu.trace_stop"() : () -> ()
    %29 = arith.addf %28, %8 : vector<2x8x8xf32>
    %cst_24 = arith.constant dense<0xFF800000> : vector<2x8xf32>
    %30 = vector.multi_reduction <maximumf>, %29, %cst_24 [2] : vector<2x8x8xf32> to vector<2x8xf32>
    %31 = vector.shape_cast %30 : vector<2x8xf32> to vector<2x8x1xf32>
    %32 = vector.broadcast %31 : vector<2x8x1xf32> to vector<2x8x8xf32>
    %33 = arith.subf %29, %32 : vector<2x8x8xf32>
    %34 = math.exp %33 : vector<2x8x8xf32>
    %cst_25 = arith.constant dense<0.000000e+00> : vector<2x8xf32>
    %35 = vector.multi_reduction <add>, %34, %cst_25 [2] : vector<2x8x8xf32> to vector<2x8xf32>
    %36 = vector.shape_cast %35 : vector<2x8xf32> to vector<2x8x1xf32>
    %37 = tpu.reciprocal %36 {approx = true} : vector<2x8x1xf32> -> vector<2x8x1xf32>
    %38 = vector.broadcast %37 : vector<2x8x1xf32> to vector<2x8x8xf32>
    %39 = arith.mulf %34, %38 : vector<2x8x8xf32>
    %40 = arith.truncf %39 : vector<2x8x8xf32> to vector<2x8x8xbf16>
    "tpu.trace_start"() <{level = 10 : i32, message = "bts,bsd->btd"}> : () -> ()
    %cst_26 = arith.constant dense<0.000000e+00> : vector<2x8x8xf32>
    %41 = tpu.matmul %40, %27, %cst_26 {dimension_numbers = #tpu.dot_dimension_numbers<[2], [1], [1], [2], [0, 0, 0, 1, 1, 2], [0], [0]>} : vector<2x8x8xbf16>, vector<2x8x8xbf16>, vector<2x8x8xf32> -> vector<2x8x8xf32>
    "tpu.trace_stop"() : () -> ()
    %42 = vector.shape_cast %41 : vector<2x8x8xf32> to vector<16x8xf32>
    %43 = arith.truncf %42 : vector<16x8xf32> to vector<16x8xbf16>
    %44 = vector.extract_strided_slice %21 {offsets = [0, 0, 0], sizes = [1, 8, 128], strides = [1, 1, 1]} : vector<4x8x128xbf16> to vector<1x8x128xbf16>
    %45 = vector.shape_cast %44 : vector<1x8x128xbf16> to vector<8x128xbf16>
    %cst_27 = arith.constant dense<0.000000e+00> : vector<16x128xf32>
    %46 = tpu.matmul %43, %45, %cst_27 {dimension_numbers = #tpu.dot_dimension_numbers<[1], [0], [0], [1], [0, 0, 1, 1], [], []>} : vector<16x8xbf16>, vector<8x128xbf16>, vector<16x128xf32> -> vector<16x128xf32>
    %47 = arith.addf %24, %46 : vector<16x128xf32>
    %48 = vector.extract_strided_slice %19 {offsets = [0, 0, 8], sizes = [2, 8, 8], strides = [1, 1, 1]} : vector<2x8x96xbf16> to vector<2x8x8xbf16>
    %49 = vector.extract_strided_slice %19 {offsets = [0, 0, 40], sizes = [2, 8, 8], strides = [1, 1, 1]} : vector<2x8x96xbf16> to vector<2x8x8xbf16>
    %50 = vector.extract_strided_slice %19 {offsets = [0, 0, 72], sizes = [2, 8, 8], strides = [1, 1, 1]} : vector<2x8x96xbf16> to vector<2x8x8xbf16>
    "tpu.trace_start"() <{level = 10 : i32, message = "btd,bsd->bts"}> : () -> ()
    %cst_28 = arith.constant dense<0.000000e+00> : vector<2x8x8xf32>
    %51 = tpu.matmul %48, %49, %cst_28 {dimension_numbers = #tpu.dot_dimension_numbers<[2], [2], [1], [1], [0, 0, 0, 1, 1, 1], [0], [0]>} : vector<2x8x8xbf16>, vector<2x8x8xbf16>, vector<2x8x8xf32> -> vector<2x8x8xf32>
    "tpu.trace_stop"() : () -> ()
    %52 = arith.addf %51, %8 : vector<2x8x8xf32>
    %cst_29 = arith.constant dense<0xFF800000> : vector<2x8xf32>
    %53 = vector.multi_reduction <maximumf>, %52, %cst_29 [2] : vector<2x8x8xf32> to vector<2x8xf32>
    %54 = vector.shape_cast %53 : vector<2x8xf32> to vector<2x8x1xf32>
    %55 = vector.broadcast %54 : vector<2x8x1xf32> to vector<2x8x8xf32>
    %56 = arith.subf %52, %55 : vector<2x8x8xf32>
    %57 = math.exp %56 : vector<2x8x8xf32>
    %cst_30 = arith.constant dense<0.000000e+00> : vector<2x8xf32>
    %58 = vector.multi_reduction <add>, %57, %cst_30 [2] : vector<2x8x8xf32> to vector<2x8xf32>
    %59 = vector.shape_cast %58 : vector<2x8xf32> to vector<2x8x1xf32>
    %60 = tpu.reciprocal %59 {approx = true} : vector<2x8x1xf32> -> vector<2x8x1xf32>
    %61 = vector.broadcast %60 : vector<2x8x1xf32> to vector<2x8x8xf32>
    %62 = arith.mulf %57, %61 : vector<2x8x8xf32>
    %63 = arith.truncf %62 : vector<2x8x8xf32> to vector<2x8x8xbf16>
    "tpu.trace_start"() <{level = 10 : i32, message = "bts,bsd->btd"}> : () -> ()
    %cst_31 = arith.constant dense<0.000000e+00> : vector<2x8x8xf32>
    %64 = tpu.matmul %63, %50, %cst_31 {dimension_numbers = #tpu.dot_dimension_numbers<[2], [1], [1], [2], [0, 0, 0, 1, 1, 2], [0], [0]>} : vector<2x8x8xbf16>, vector<2x8x8xbf16>, vector<2x8x8xf32> -> vector<2x8x8xf32>
    "tpu.trace_stop"() : () -> ()
    %65 = vector.shape_cast %64 : vector<2x8x8xf32> to vector<16x8xf32>
    %66 = arith.truncf %65 : vector<16x8xf32> to vector<16x8xbf16>
    %67 = vector.extract_strided_slice %21 {offsets = [1, 0, 0], sizes = [1, 8, 128], strides = [1, 1, 1]} : vector<4x8x128xbf16> to vector<1x8x128xbf16>
    %68 = vector.shape_cast %67 : vector<1x8x128xbf16> to vector<8x128xbf16>
    %cst_32 = arith.constant dense<0.000000e+00> : vector<16x128xf32>
    %69 = tpu.matmul %66, %68, %cst_32 {dimension_numbers = #tpu.dot_dimension_numbers<[1], [0], [0], [1], [0, 0, 1, 1], [], []>} : vector<16x8xbf16>, vector<8x128xbf16>, vector<16x128xf32> -> vector<16x128xf32>
    %70 = arith.addf %47, %69 : vector<16x128xf32>
    %71 = vector.extract_strided_slice %19 {offsets = [0, 0, 16], sizes = [2, 8, 8], strides = [1, 1, 1]} : vector<2x8x96xbf16> to vector<2x8x8xbf16>
    %72 = vector.extract_strided_slice %19 {offsets = [0, 0, 48], sizes = [2, 8, 8], strides = [1, 1, 1]} : vector<2x8x96xbf16> to vector<2x8x8xbf16>
    %73 = vector.extract_strided_slice %19 {offsets = [0, 0, 80], sizes = [2, 8, 8], strides = [1, 1, 1]} : vector<2x8x96xbf16> to vector<2x8x8xbf16>
    "tpu.trace_start"() <{level = 10 : i32, message = "btd,bsd->bts"}> : () -> ()
    %cst_33 = arith.constant dense<0.000000e+00> : vector<2x8x8xf32>
    %74 = tpu.matmul %71, %72, %cst_33 {dimension_numbers = #tpu.dot_dimension_numbers<[2], [2], [1], [1], [0, 0, 0, 1, 1, 1], [0], [0]>} : vector<2x8x8xbf16>, vector<2x8x8xbf16>, vector<2x8x8xf32> -> vector<2x8x8xf32>
    "tpu.trace_stop"() : () -> ()
    %75 = arith.addf %74, %8 : vector<2x8x8xf32>
    %cst_34 = arith.constant dense<0xFF800000> : vector<2x8xf32>
    %76 = vector.multi_reduction <maximumf>, %75, %cst_34 [2] : vector<2x8x8xf32> to vector<2x8xf32>
    %77 = vector.shape_cast %76 : vector<2x8xf32> to vector<2x8x1xf32>
    %78 = vector.broadcast %77 : vector<2x8x1xf32> to vector<2x8x8xf32>
    %79 = arith.subf %75, %78 : vector<2x8x8xf32>
    %80 = math.exp %79 : vector<2x8x8xf32>
    %cst_35 = arith.constant dense<0.000000e+00> : vector<2x8xf32>
    %81 = vector.multi_reduction <add>, %80, %cst_35 [2] : vector<2x8x8xf32> to vector<2x8xf32>
    %82 = vector.shape_cast %81 : vector<2x8xf32> to vector<2x8x1xf32>
    %83 = tpu.reciprocal %82 {approx = true} : vector<2x8x1xf32> -> vector<2x8x1xf32>
    %84 = vector.broadcast %83 : vector<2x8x1xf32> to vector<2x8x8xf32>
    %85 = arith.mulf %80, %84 : vector<2x8x8xf32>
    %86 = arith.truncf %85 : vector<2x8x8xf32> to vector<2x8x8xbf16>
    "tpu.trace_start"() <{level = 10 : i32, message = "bts,bsd->btd"}> : () -> ()
    %cst_36 = arith.constant dense<0.000000e+00> : vector<2x8x8xf32>
    %87 = tpu.matmul %86, %73, %cst_36 {dimension_numbers = #tpu.dot_dimension_numbers<[2], [1], [1], [2], [0, 0, 0, 1, 1, 2], [0], [0]>} : vector<2x8x8xbf16>, vector<2x8x8xbf16>, vector<2x8x8xf32> -> vector<2x8x8xf32>
    "tpu.trace_stop"() : () -> ()
    %88 = vector.shape_cast %87 : vector<2x8x8xf32> to vector<16x8xf32>
    %89 = arith.truncf %88 : vector<16x8xf32> to vector<16x8xbf16>
    %90 = vector.extract_strided_slice %21 {offsets = [2, 0, 0], sizes = [1, 8, 128], strides = [1, 1, 1]} : vector<4x8x128xbf16> to vector<1x8x128xbf16>
    %91 = vector.shape_cast %90 : vector<1x8x128xbf16> to vector<8x128xbf16>
    %cst_37 = arith.constant dense<0.000000e+00> : vector<16x128xf32>
    %92 = tpu.matmul %89, %91, %cst_37 {dimension_numbers = #tpu.dot_dimension_numbers<[1], [0], [0], [1], [0, 0, 1, 1], [], []>} : vector<16x8xbf16>, vector<8x128xbf16>, vector<16x128xf32> -> vector<16x128xf32>
    %93 = arith.addf %70, %92 : vector<16x128xf32>
    %94 = vector.extract_strided_slice %19 {offsets = [0, 0, 24], sizes = [2, 8, 8], strides = [1, 1, 1]} : vector<2x8x96xbf16> to vector<2x8x8xbf16>
    %95 = vector.extract_strided_slice %19 {offsets = [0, 0, 56], sizes = [2, 8, 8], strides = [1, 1, 1]} : vector<2x8x96xbf16> to vector<2x8x8xbf16>
    %96 = vector.extract_strided_slice %19 {offsets = [0, 0, 88], sizes = [2, 8, 8], strides = [1, 1, 1]} : vector<2x8x96xbf16> to vector<2x8x8xbf16>
    "tpu.trace_start"() <{level = 10 : i32, message = "btd,bsd->bts"}> : () -> ()
    %cst_38 = arith.constant dense<0.000000e+00> : vector<2x8x8xf32>
    %97 = tpu.matmul %94, %95, %cst_38 {dimension_numbers = #tpu.dot_dimension_numbers<[2], [2], [1], [1], [0, 0, 0, 1, 1, 1], [0], [0]>} : vector<2x8x8xbf16>, vector<2x8x8xbf16>, vector<2x8x8xf32> -> vector<2x8x8xf32>
    "tpu.trace_stop"() : () -> ()
    %98 = arith.addf %97, %8 : vector<2x8x8xf32>
    %cst_39 = arith.constant dense<0xFF800000> : vector<2x8xf32>
    %99 = vector.multi_reduction <maximumf>, %98, %cst_39 [2] : vector<2x8x8xf32> to vector<2x8xf32>
    %100 = vector.shape_cast %99 : vector<2x8xf32> to vector<2x8x1xf32>
    %101 = vector.broadcast %100 : vector<2x8x1xf32> to vector<2x8x8xf32>
    %102 = arith.subf %98, %101 : vector<2x8x8xf32>
    %103 = math.exp %102 : vector<2x8x8xf32>
    %cst_40 = arith.constant dense<0.000000e+00> : vector<2x8xf32>
    %104 = vector.multi_reduction <add>, %103, %cst_40 [2] : vector<2x8x8xf32> to vector<2x8xf32>
    %105 = vector.shape_cast %104 : vector<2x8xf32> to vector<2x8x1xf32>
    %106 = tpu.reciprocal %105 {approx = true} : vector<2x8x1xf32> -> vector<2x8x1xf32>
    %107 = vector.broadcast %106 : vector<2x8x1xf32> to vector<2x8x8xf32>
    %108 = arith.mulf %103, %107 : vector<2x8x8xf32>
    %109 = arith.truncf %108 : vector<2x8x8xf32> to vector<2x8x8xbf16>
    "tpu.trace_start"() <{level = 10 : i32, message = "bts,bsd->btd"}> : () -> ()
    %cst_41 = arith.constant dense<0.000000e+00> : vector<2x8x8xf32>
    %110 = tpu.matmul %109, %96, %cst_41 {dimension_numbers = #tpu.dot_dimension_numbers<[2], [1], [1], [2], [0, 0, 0, 1, 1, 2], [0], [0]>} : vector<2x8x8xbf16>, vector<2x8x8xbf16>, vector<2x8x8xf32> -> vector<2x8x8xf32>
    "tpu.trace_stop"() : () -> ()
    %111 = vector.shape_cast %110 : vector<2x8x8xf32> to vector<16x8xf32>
    %112 = arith.truncf %111 : vector<16x8xf32> to vector<16x8xbf16>
    %113 = vector.extract_strided_slice %21 {offsets = [3, 0, 0], sizes = [1, 8, 128], strides = [1, 1, 1]} : vector<4x8x128xbf16> to vector<1x8x128xbf16>
    %114 = vector.shape_cast %113 : vector<1x8x128xbf16> to vector<8x128xbf16>
    %cst_42 = arith.constant dense<0.000000e+00> : vector<16x128xf32>
    %115 = tpu.matmul %112, %114, %cst_42 {dimension_numbers = #tpu.dot_dimension_numbers<[1], [0], [0], [1], [0, 0, 1, 1], [], []>} : vector<16x8xbf16>, vector<8x128xbf16>, vector<16x128xf32> -> vector<16x128xf32>
    %116 = arith.addf %93, %115 : vector<16x128xf32>
    %117 = vector.broadcast %23 : vector<1x128xf32> to vector<16x128xf32>
    %118 = arith.addf %116, %117 : vector<16x128xf32>
    %119 = arith.addf %5, %118 : vector<16x128xf32>
    %c0_43 = arith.constant 0 : index
    %c0_44 = arith.constant 0 : index
    %c0_45 = arith.constant 0 : index
    %120 = vector.load %arg9[%c0_43, %c0_44, %c0_45] : memref<2x1x128xf32, #tpu.memory_space<vmem>>, vector<1x1x128xf32>
    %121 = vector.shape_cast %120 : vector<1x1x128xf32> to vector<1x128xf32>
    %c0_46 = arith.constant 0 : index
    %c0_47 = arith.constant 0 : index
    %c0_48 = arith.constant 0 : index
    %122 = vector.load %arg10[%c0_46, %c0_47, %c0_48] : memref<2x1x128xf32, #tpu.memory_space<vmem>>, vector<1x1x128xf32>
    %123 = vector.shape_cast %122 : vector<1x1x128xf32> to vector<1x128xf32>
    %124 = vector.broadcast %4 : vector<1x128xf32> to vector<16x128xf32>
    %125 = arith.mulf %119, %124 : vector<16x128xf32>
    %cst_49 = arith.constant dense<0.000000e+00> : vector<16xf32>
    %126 = vector.multi_reduction <add>, %125, %cst_49 [1] : vector<16x128xf32> to vector<16xf32>
    %127 = vector.shape_cast %126 : vector<16xf32> to vector<16x1xf32>
    %cst_50 = arith.constant 3.125000e-02 : f32
    %128 = vector.broadcast %cst_50 : f32 to vector<16x1xf32>
    %129 = arith.mulf %127, %128 : vector<16x1xf32>
    %130 = vector.broadcast %129 : vector<16x1xf32> to vector<16x128xf32>
    %131 = arith.subf %125, %130 : vector<16x128xf32>
    %132 = vector.broadcast %4 : vector<1x128xf32> to vector<16x128xf32>
    %133 = arith.mulf %131, %132 : vector<16x128xf32>
    %134 = arith.mulf %133, %133 : vector<16x128xf32>
    %cst_51 = arith.constant dense<0.000000e+00> : vector<16xf32>
    %135 = vector.multi_reduction <add>, %134, %cst_51 [1] : vector<16x128xf32> to vector<16xf32>
    %136 = vector.shape_cast %135 : vector<16xf32> to vector<16x1xf32>
    %cst_52 = arith.constant 3.125000e-02 : f32
    %137 = vector.broadcast %cst_52 : f32 to vector<16x1xf32>
    %138 = arith.mulf %136, %137 : vector<16x1xf32>
    %cst_53 = arith.constant 9.99999974E-6 : f32
    %139 = vector.broadcast %cst_53 : f32 to vector<16x1xf32>
    %140 = arith.addf %138, %139 : vector<16x1xf32>
    %141 = math.rsqrt %140 : vector<16x1xf32>
    %142 = vector.broadcast %141 : vector<16x1xf32> to vector<16x128xf32>
    %143 = arith.mulf %133, %142 : vector<16x128xf32>
    %144 = vector.broadcast %121 : vector<1x128xf32> to vector<16x128xf32>
    %145 = arith.mulf %143, %144 : vector<16x128xf32>
    %146 = vector.broadcast %123 : vector<1x128xf32> to vector<16x128xf32>
    %147 = arith.addf %145, %146 : vector<16x128xf32>
    %148 = arith.truncf %147 : vector<16x128xf32> to vector<16x128xbf16>
    %c0_54 = arith.constant 0 : index
    %c0_55 = arith.constant 0 : index
    %c0_56 = arith.constant 0 : index
    %149 = vector.load %arg11[%c0_54, %c0_55, %c0_56] : memref<2x128x32xbf16, #tpu.memory_space<vmem>>, vector<1x128x32xbf16>
    %150 = vector.shape_cast %149 : vector<1x128x32xbf16> to vector<128x32xbf16>
    %cst_57 = arith.constant dense<0.000000e+00> : vector<16x32xf32>
    %151 = tpu.matmul %148, %150, %cst_57 {dimension_numbers = #tpu.dot_dimension_numbers<[1], [0], [0], [1], [0, 0, 1, 1], [], []>} : vector<16x128xbf16>, vector<128x32xbf16>, vector<16x32xf32> -> vector<16x32xf32>
    %c0_58 = arith.constant 0 : index
    %c0_59 = arith.constant 0 : index
    %c0_60 = arith.constant 0 : index
    %152 = vector.load %arg12[%c0_58, %c0_59, %c0_60] : memref<2x1x32xf32, #tpu.memory_space<vmem>>, vector<1x1x32xf32>
    %153 = vector.shape_cast %152 : vector<1x1x32xf32> to vector<1x32xf32>
    %154 = vector.broadcast %153 : vector<1x32xf32> to vector<16x32xf32>
    %155 = arith.addf %151, %154 : vector<16x32xf32>
    %156 = arith.truncf %155 : vector<16x32xf32> to vector<16x32xbf16>
    %157 = vector.shape_cast %156 : vector<16x32xbf16> to vector<2x8x32xbf16>
    %c0_61 = arith.constant 0 : index
    %c0_62 = arith.constant 0 : index
    %c0_63 = arith.constant 0 : index
    %158 = vector.load %arg13[%c0_61, %c0_62, %c0_63] : memref<2x128x64xbf16, #tpu.memory_space<vmem>>, vector<1x128x64xbf16>
    %159 = vector.shape_cast %158 : vector<1x128x64xbf16> to vector<128x64xbf16>
    %cst_64 = arith.constant dense<0.000000e+00> : vector<16x64xf32>
    %160 = tpu.matmul %7, %159, %cst_64 {dimension_numbers = #tpu.dot_dimension_numbers<[1], [0], [0], [1], [0, 0, 1, 1], [], []>} : vector<16x128xbf16>, vector<128x64xbf16>, vector<16x64xf32> -> vector<16x64xf32>
    %c0_65 = arith.constant 0 : index
    %c0_66 = arith.constant 0 : index
    %c0_67 = arith.constant 0 : index
    %161 = vector.load %arg14[%c0_65, %c0_66, %c0_67] : memref<2x1x64xf32, #tpu.memory_space<vmem>>, vector<1x1x64xf32>
    %162 = vector.shape_cast %161 : vector<1x1x64xf32> to vector<1x64xf32>
    %163 = vector.broadcast %162 : vector<1x64xf32> to vector<16x64xf32>
    %164 = arith.addf %160, %163 : vector<16x64xf32>
    %165 = arith.truncf %164 : vector<16x64xf32> to vector<16x64xbf16>
    %166 = vector.shape_cast %165 : vector<16x64xbf16> to vector<2x8x64xbf16>
    %c0_68 = arith.constant 0 : index
    %c0_69 = arith.constant 0 : index
    %c0_70 = arith.constant 0 : index
    %c0_71 = arith.constant 0 : index
    %167 = vector.load %arg15[%c0_68, %c0_69, %c0_70, %c0_71] : memref<2x4x8x128xbf16, #tpu.memory_space<vmem>>, vector<1x4x8x128xbf16>
    %168 = vector.shape_cast %167 : vector<1x4x8x128xbf16> to vector<4x8x128xbf16>
    %c0_72 = arith.constant 0 : index
    %c0_73 = arith.constant 0 : index
    %c0_74 = arith.constant 0 : index
    %169 = vector.load %arg16[%c0_72, %c0_73, %c0_74] : memref<2x1x128xf32, #tpu.memory_space<vmem>>, vector<1x1x128xf32>
    %170 = vector.shape_cast %169 : vector<1x1x128xf32> to vector<1x128xf32>
    %cst_75 = arith.constant 0.000000e+00 : f32
    %171 = vector.broadcast %cst_75 : f32 to vector<16x128xf32>
    %172 = vector.extract_strided_slice %157 {offsets = [0, 0, 0], sizes = [2, 8, 8], strides = [1, 1, 1]} : vector<2x8x32xbf16> to vector<2x8x8xbf16>
    %173 = vector.extract_strided_slice %166 {offsets = [0, 0, 0], sizes = [2, 8, 8], strides = [1, 1, 1]} : vector<2x8x64xbf16> to vector<2x8x8xbf16>
    %174 = vector.extract_strided_slice %166 {offsets = [0, 0, 32], sizes = [2, 8, 8], strides = [1, 1, 1]} : vector<2x8x64xbf16> to vector<2x8x8xbf16>
    "tpu.trace_start"() <{level = 10 : i32, message = "btd,bsd->bts"}> : () -> ()
    %cst_76 = arith.constant dense<0.000000e+00> : vector<2x8x8xf32>
    %175 = tpu.matmul %172, %173, %cst_76 {dimension_numbers = #tpu.dot_dimension_numbers<[2], [2], [1], [1], [0, 0, 0, 1, 1, 1], [0], [0]>} : vector<2x8x8xbf16>, vector<2x8x8xbf16>, vector<2x8x8xf32> -> vector<2x8x8xf32>
    "tpu.trace_stop"() : () -> ()
    %176 = arith.addf %175, %9 : vector<2x8x8xf32>
    %cst_77 = arith.constant dense<0xFF800000> : vector<2x8xf32>
    %177 = vector.multi_reduction <maximumf>, %176, %cst_77 [2] : vector<2x8x8xf32> to vector<2x8xf32>
    %178 = vector.shape_cast %177 : vector<2x8xf32> to vector<2x8x1xf32>
    %179 = vector.broadcast %178 : vector<2x8x1xf32> to vector<2x8x8xf32>
    %180 = arith.subf %176, %179 : vector<2x8x8xf32>
    %181 = math.exp %180 : vector<2x8x8xf32>
    %cst_78 = arith.constant dense<0.000000e+00> : vector<2x8xf32>
    %182 = vector.multi_reduction <add>, %181, %cst_78 [2] : vector<2x8x8xf32> to vector<2x8xf32>
    %183 = vector.shape_cast %182 : vector<2x8xf32> to vector<2x8x1xf32>
    %184 = tpu.reciprocal %183 {approx = true} : vector<2x8x1xf32> -> vector<2x8x1xf32>
    %185 = vector.broadcast %184 : vector<2x8x1xf32> to vector<2x8x8xf32>
    %186 = arith.mulf %181, %185 : vector<2x8x8xf32>
    %187 = arith.truncf %186 : vector<2x8x8xf32> to vector<2x8x8xbf16>
    "tpu.trace_start"() <{level = 10 : i32, message = "bts,bsd->btd"}> : () -> ()
    %cst_79 = arith.constant dense<0.000000e+00> : vector<2x8x8xf32>
    %188 = tpu.matmul %187, %174, %cst_79 {dimension_numbers = #tpu.dot_dimension_numbers<[2], [1], [1], [2], [0, 0, 0, 1, 1, 2], [0], [0]>} : vector<2x8x8xbf16>, vector<2x8x8xbf16>, vector<2x8x8xf32> -> vector<2x8x8xf32>
    "tpu.trace_stop"() : () -> ()
    %189 = vector.shape_cast %188 : vector<2x8x8xf32> to vector<16x8xf32>
    %190 = arith.truncf %189 : vector<16x8xf32> to vector<16x8xbf16>
    %191 = vector.extract_strided_slice %168 {offsets = [0, 0, 0], sizes = [1, 8, 128], strides = [1, 1, 1]} : vector<4x8x128xbf16> to vector<1x8x128xbf16>
    %192 = vector.shape_cast %191 : vector<1x8x128xbf16> to vector<8x128xbf16>
    %cst_80 = arith.constant dense<0.000000e+00> : vector<16x128xf32>
    %193 = tpu.matmul %190, %192, %cst_80 {dimension_numbers = #tpu.dot_dimension_numbers<[1], [0], [0], [1], [0, 0, 1, 1], [], []>} : vector<16x8xbf16>, vector<8x128xbf16>, vector<16x128xf32> -> vector<16x128xf32>
    %194 = arith.addf %171, %193 : vector<16x128xf32>
    %195 = vector.extract_strided_slice %157 {offsets = [0, 0, 8], sizes = [2, 8, 8], strides = [1, 1, 1]} : vector<2x8x32xbf16> to vector<2x8x8xbf16>
    %196 = vector.extract_strided_slice %166 {offsets = [0, 0, 8], sizes = [2, 8, 8], strides = [1, 1, 1]} : vector<2x8x64xbf16> to vector<2x8x8xbf16>
    %197 = vector.extract_strided_slice %166 {offsets = [0, 0, 40], sizes = [2, 8, 8], strides = [1, 1, 1]} : vector<2x8x64xbf16> to vector<2x8x8xbf16>
    "tpu.trace_start"() <{level = 10 : i32, message = "btd,bsd->bts"}> : () -> ()
    %cst_81 = arith.constant dense<0.000000e+00> : vector<2x8x8xf32>
    %198 = tpu.matmul %195, %196, %cst_81 {dimension_numbers = #tpu.dot_dimension_numbers<[2], [2], [1], [1], [0, 0, 0, 1, 1, 1], [0], [0]>} : vector<2x8x8xbf16>, vector<2x8x8xbf16>, vector<2x8x8xf32> -> vector<2x8x8xf32>
    "tpu.trace_stop"() : () -> ()
    %199 = arith.addf %198, %9 : vector<2x8x8xf32>
    %cst_82 = arith.constant dense<0xFF800000> : vector<2x8xf32>
    %200 = vector.multi_reduction <maximumf>, %199, %cst_82 [2] : vector<2x8x8xf32> to vector<2x8xf32>
    %201 = vector.shape_cast %200 : vector<2x8xf32> to vector<2x8x1xf32>
    %202 = vector.broadcast %201 : vector<2x8x1xf32> to vector<2x8x8xf32>
    %203 = arith.subf %199, %202 : vector<2x8x8xf32>
    %204 = math.exp %203 : vector<2x8x8xf32>
    %cst_83 = arith.constant dense<0.000000e+00> : vector<2x8xf32>
    %205 = vector.multi_reduction <add>, %204, %cst_83 [2] : vector<2x8x8xf32> to vector<2x8xf32>
    %206 = vector.shape_cast %205 : vector<2x8xf32> to vector<2x8x1xf32>
    %207 = tpu.reciprocal %206 {approx = true} : vector<2x8x1xf32> -> vector<2x8x1xf32>
    %208 = vector.broadcast %207 : vector<2x8x1xf32> to vector<2x8x8xf32>
    %209 = arith.mulf %204, %208 : vector<2x8x8xf32>
    %210 = arith.truncf %209 : vector<2x8x8xf32> to vector<2x8x8xbf16>
    "tpu.trace_start"() <{level = 10 : i32, message = "bts,bsd->btd"}> : () -> ()
    %cst_84 = arith.constant dense<0.000000e+00> : vector<2x8x8xf32>
    %211 = tpu.matmul %210, %197, %cst_84 {dimension_numbers = #tpu.dot_dimension_numbers<[2], [1], [1], [2], [0, 0, 0, 1, 1, 2], [0], [0]>} : vector<2x8x8xbf16>, vector<2x8x8xbf16>, vector<2x8x8xf32> -> vector<2x8x8xf32>
    "tpu.trace_stop"() : () -> ()
    %212 = vector.shape_cast %211 : vector<2x8x8xf32> to vector<16x8xf32>
    %213 = arith.truncf %212 : vector<16x8xf32> to vector<16x8xbf16>
    %214 = vector.extract_strided_slice %168 {offsets = [1, 0, 0], sizes = [1, 8, 128], strides = [1, 1, 1]} : vector<4x8x128xbf16> to vector<1x8x128xbf16>
    %215 = vector.shape_cast %214 : vector<1x8x128xbf16> to vector<8x128xbf16>
    %cst_85 = arith.constant dense<0.000000e+00> : vector<16x128xf32>
    %216 = tpu.matmul %213, %215, %cst_85 {dimension_numbers = #tpu.dot_dimension_numbers<[1], [0], [0], [1], [0, 0, 1, 1], [], []>} : vector<16x8xbf16>, vector<8x128xbf16>, vector<16x128xf32> -> vector<16x128xf32>
    %217 = arith.addf %194, %216 : vector<16x128xf32>
    %218 = vector.extract_strided_slice %157 {offsets = [0, 0, 16], sizes = [2, 8, 8], strides = [1, 1, 1]} : vector<2x8x32xbf16> to vector<2x8x8xbf16>
    %219 = vector.extract_strided_slice %166 {offsets = [0, 0, 16], sizes = [2, 8, 8], strides = [1, 1, 1]} : vector<2x8x64xbf16> to vector<2x8x8xbf16>
    %220 = vector.extract_strided_slice %166 {offsets = [0, 0, 48], sizes = [2, 8, 8], strides = [1, 1, 1]} : vector<2x8x64xbf16> to vector<2x8x8xbf16>
    "tpu.trace_start"() <{level = 10 : i32, message = "btd,bsd->bts"}> : () -> ()
    %cst_86 = arith.constant dense<0.000000e+00> : vector<2x8x8xf32>
    %221 = tpu.matmul %218, %219, %cst_86 {dimension_numbers = #tpu.dot_dimension_numbers<[2], [2], [1], [1], [0, 0, 0, 1, 1, 1], [0], [0]>} : vector<2x8x8xbf16>, vector<2x8x8xbf16>, vector<2x8x8xf32> -> vector<2x8x8xf32>
    "tpu.trace_stop"() : () -> ()
    %222 = arith.addf %221, %9 : vector<2x8x8xf32>
    %cst_87 = arith.constant dense<0xFF800000> : vector<2x8xf32>
    %223 = vector.multi_reduction <maximumf>, %222, %cst_87 [2] : vector<2x8x8xf32> to vector<2x8xf32>
    %224 = vector.shape_cast %223 : vector<2x8xf32> to vector<2x8x1xf32>
    %225 = vector.broadcast %224 : vector<2x8x1xf32> to vector<2x8x8xf32>
    %226 = arith.subf %222, %225 : vector<2x8x8xf32>
    %227 = math.exp %226 : vector<2x8x8xf32>
    %cst_88 = arith.constant dense<0.000000e+00> : vector<2x8xf32>
    %228 = vector.multi_reduction <add>, %227, %cst_88 [2] : vector<2x8x8xf32> to vector<2x8xf32>
    %229 = vector.shape_cast %228 : vector<2x8xf32> to vector<2x8x1xf32>
    %230 = tpu.reciprocal %229 {approx = true} : vector<2x8x1xf32> -> vector<2x8x1xf32>
    %231 = vector.broadcast %230 : vector<2x8x1xf32> to vector<2x8x8xf32>
    %232 = arith.mulf %227, %231 : vector<2x8x8xf32>
    %233 = arith.truncf %232 : vector<2x8x8xf32> to vector<2x8x8xbf16>
    "tpu.trace_start"() <{level = 10 : i32, message = "bts,bsd->btd"}> : () -> ()
    %cst_89 = arith.constant dense<0.000000e+00> : vector<2x8x8xf32>
    %234 = tpu.matmul %233, %220, %cst_89 {dimension_numbers = #tpu.dot_dimension_numbers<[2], [1], [1], [2], [0, 0, 0, 1, 1, 2], [0], [0]>} : vector<2x8x8xbf16>, vector<2x8x8xbf16>, vector<2x8x8xf32> -> vector<2x8x8xf32>
    "tpu.trace_stop"() : () -> ()
    %235 = vector.shape_cast %234 : vector<2x8x8xf32> to vector<16x8xf32>
    %236 = arith.truncf %235 : vector<16x8xf32> to vector<16x8xbf16>
    %237 = vector.extract_strided_slice %168 {offsets = [2, 0, 0], sizes = [1, 8, 128], strides = [1, 1, 1]} : vector<4x8x128xbf16> to vector<1x8x128xbf16>
    %238 = vector.shape_cast %237 : vector<1x8x128xbf16> to vector<8x128xbf16>
    %cst_90 = arith.constant dense<0.000000e+00> : vector<16x128xf32>
    %239 = tpu.matmul %236, %238, %cst_90 {dimension_numbers = #tpu.dot_dimension_numbers<[1], [0], [0], [1], [0, 0, 1, 1], [], []>} : vector<16x8xbf16>, vector<8x128xbf16>, vector<16x128xf32> -> vector<16x128xf32>
    %240 = arith.addf %217, %239 : vector<16x128xf32>
    %241 = vector.extract_strided_slice %157 {offsets = [0, 0, 24], sizes = [2, 8, 8], strides = [1, 1, 1]} : vector<2x8x32xbf16> to vector<2x8x8xbf16>
    %242 = vector.extract_strided_slice %166 {offsets = [0, 0, 24], sizes = [2, 8, 8], strides = [1, 1, 1]} : vector<2x8x64xbf16> to vector<2x8x8xbf16>
    %243 = vector.extract_strided_slice %166 {offsets = [0, 0, 56], sizes = [2, 8, 8], strides = [1, 1, 1]} : vector<2x8x64xbf16> to vector<2x8x8xbf16>
    "tpu.trace_start"() <{level = 10 : i32, message = "btd,bsd->bts"}> : () -> ()
    %cst_91 = arith.constant dense<0.000000e+00> : vector<2x8x8xf32>
    %244 = tpu.matmul %241, %242, %cst_91 {dimension_numbers = #tpu.dot_dimension_numbers<[2], [2], [1], [1], [0, 0, 0, 1, 1, 1], [0], [0]>} : vector<2x8x8xbf16>, vector<2x8x8xbf16>, vector<2x8x8xf32> -> vector<2x8x8xf32>
    "tpu.trace_stop"() : () -> ()
    %245 = arith.addf %244, %9 : vector<2x8x8xf32>
    %cst_92 = arith.constant dense<0xFF800000> : vector<2x8xf32>
    %246 = vector.multi_reduction <maximumf>, %245, %cst_92 [2] : vector<2x8x8xf32> to vector<2x8xf32>
    %247 = vector.shape_cast %246 : vector<2x8xf32> to vector<2x8x1xf32>
    %248 = vector.broadcast %247 : vector<2x8x1xf32> to vector<2x8x8xf32>
    %249 = arith.subf %245, %248 : vector<2x8x8xf32>
    %250 = math.exp %249 : vector<2x8x8xf32>
    %cst_93 = arith.constant dense<0.000000e+00> : vector<2x8xf32>
    %251 = vector.multi_reduction <add>, %250, %cst_93 [2] : vector<2x8x8xf32> to vector<2x8xf32>
    %252 = vector.shape_cast %251 : vector<2x8xf32> to vector<2x8x1xf32>
    %253 = tpu.reciprocal %252 {approx = true} : vector<2x8x1xf32> -> vector<2x8x1xf32>
    %254 = vector.broadcast %253 : vector<2x8x1xf32> to vector<2x8x8xf32>
    %255 = arith.mulf %250, %254 : vector<2x8x8xf32>
    %256 = arith.truncf %255 : vector<2x8x8xf32> to vector<2x8x8xbf16>
    "tpu.trace_start"() <{level = 10 : i32, message = "bts,bsd->btd"}> : () -> ()
    %cst_94 = arith.constant dense<0.000000e+00> : vector<2x8x8xf32>
    %257 = tpu.matmul %256, %243, %cst_94 {dimension_numbers = #tpu.dot_dimension_numbers<[2], [1], [1], [2], [0, 0, 0, 1, 1, 2], [0], [0]>} : vector<2x8x8xbf16>, vector<2x8x8xbf16>, vector<2x8x8xf32> -> vector<2x8x8xf32>
    "tpu.trace_stop"() : () -> ()
    %258 = vector.shape_cast %257 : vector<2x8x8xf32> to vector<16x8xf32>
    %259 = arith.truncf %258 : vector<16x8xf32> to vector<16x8xbf16>
    %260 = vector.extract_strided_slice %168 {offsets = [3, 0, 0], sizes = [1, 8, 128], strides = [1, 1, 1]} : vector<4x8x128xbf16> to vector<1x8x128xbf16>
    %261 = vector.shape_cast %260 : vector<1x8x128xbf16> to vector<8x128xbf16>
    %cst_95 = arith.constant dense<0.000000e+00> : vector<16x128xf32>
    %262 = tpu.matmul %259, %261, %cst_95 {dimension_numbers = #tpu.dot_dimension_numbers<[1], [0], [0], [1], [0, 0, 1, 1], [], []>} : vector<16x8xbf16>, vector<8x128xbf16>, vector<16x128xf32> -> vector<16x128xf32>
    %263 = arith.addf %240, %262 : vector<16x128xf32>
    %264 = vector.broadcast %170 : vector<1x128xf32> to vector<16x128xf32>
    %265 = arith.addf %263, %264 : vector<16x128xf32>
    %266 = arith.addf %147, %265 : vector<16x128xf32>
    %c0_96 = arith.constant 0 : index
    %c0_97 = arith.constant 0 : index
    %c0_98 = arith.constant 0 : index
    %267 = vector.load %arg17[%c0_96, %c0_97, %c0_98] : memref<2x1x128xf32, #tpu.memory_space<vmem>>, vector<1x1x128xf32>
    %268 = vector.shape_cast %267 : vector<1x1x128xf32> to vector<1x128xf32>
    %c0_99 = arith.constant 0 : index
    %c0_100 = arith.constant 0 : index
    %c0_101 = arith.constant 0 : index
    %269 = vector.load %arg18[%c0_99, %c0_100, %c0_101] : memref<2x1x128xf32, #tpu.memory_space<vmem>>, vector<1x1x128xf32>
    %270 = vector.shape_cast %269 : vector<1x1x128xf32> to vector<1x128xf32>
    %271 = vector.broadcast %4 : vector<1x128xf32> to vector<16x128xf32>
    %272 = arith.mulf %266, %271 : vector<16x128xf32>
    %cst_102 = arith.constant dense<0.000000e+00> : vector<16xf32>
    %273 = vector.multi_reduction <add>, %272, %cst_102 [1] : vector<16x128xf32> to vector<16xf32>
    %274 = vector.shape_cast %273 : vector<16xf32> to vector<16x1xf32>
    %cst_103 = arith.constant 3.125000e-02 : f32
    %275 = vector.broadcast %cst_103 : f32 to vector<16x1xf32>
    %276 = arith.mulf %274, %275 : vector<16x1xf32>
    %277 = vector.broadcast %276 : vector<16x1xf32> to vector<16x128xf32>
    %278 = arith.subf %272, %277 : vector<16x128xf32>
    %279 = vector.broadcast %4 : vector<1x128xf32> to vector<16x128xf32>
    %280 = arith.mulf %278, %279 : vector<16x128xf32>
    %281 = arith.mulf %280, %280 : vector<16x128xf32>
    %cst_104 = arith.constant dense<0.000000e+00> : vector<16xf32>
    %282 = vector.multi_reduction <add>, %281, %cst_104 [1] : vector<16x128xf32> to vector<16xf32>
    %283 = vector.shape_cast %282 : vector<16xf32> to vector<16x1xf32>
    %cst_105 = arith.constant 3.125000e-02 : f32
    %284 = vector.broadcast %cst_105 : f32 to vector<16x1xf32>
    %285 = arith.mulf %283, %284 : vector<16x1xf32>
    %cst_106 = arith.constant 9.99999974E-6 : f32
    %286 = vector.broadcast %cst_106 : f32 to vector<16x1xf32>
    %287 = arith.addf %285, %286 : vector<16x1xf32>
    %288 = math.rsqrt %287 : vector<16x1xf32>
    %289 = vector.broadcast %288 : vector<16x1xf32> to vector<16x128xf32>
    %290 = arith.mulf %280, %289 : vector<16x128xf32>
    %291 = vector.broadcast %268 : vector<1x128xf32> to vector<16x128xf32>
    %292 = arith.mulf %290, %291 : vector<16x128xf32>
    %293 = vector.broadcast %270 : vector<1x128xf32> to vector<16x128xf32>
    %294 = arith.addf %292, %293 : vector<16x128xf32>
    %295 = arith.truncf %294 : vector<16x128xf32> to vector<16x128xbf16>
    %c0_107 = arith.constant 0 : index
    %c0_108 = arith.constant 0 : index
    %c0_109 = arith.constant 0 : index
    %296 = vector.load %arg19[%c0_107, %c0_108, %c0_109] : memref<2x128x128xbf16, #tpu.memory_space<vmem>>, vector<1x128x128xbf16>
    %297 = vector.shape_cast %296 : vector<1x128x128xbf16> to vector<128x128xbf16>
    %cst_110 = arith.constant dense<0.000000e+00> : vector<16x128xf32>
    %298 = tpu.matmul %295, %297, %cst_110 {dimension_numbers = #tpu.dot_dimension_numbers<[1], [0], [0], [1], [0, 0, 1, 1], [], []>} : vector<16x128xbf16>, vector<128x128xbf16>, vector<16x128xf32> -> vector<16x128xf32>
    %c0_111 = arith.constant 0 : index
    %c0_112 = arith.constant 0 : index
    %c0_113 = arith.constant 0 : index
    %299 = vector.load %arg20[%c0_111, %c0_112, %c0_113] : memref<2x1x128xf32, #tpu.memory_space<vmem>>, vector<1x1x128xf32>
    %300 = vector.shape_cast %299 : vector<1x1x128xf32> to vector<1x128xf32>
    %301 = vector.broadcast %300 : vector<1x128xf32> to vector<16x128xf32>
    %302 = arith.addf %298, %301 : vector<16x128xf32>
    %cst_114 = arith.constant 0.000000e+00 : f32
    %303 = vector.broadcast %cst_114 : f32 to vector<16x128xf32>
    %304 = arith.maximumf %302, %303 : vector<16x128xf32>
    %305 = arith.truncf %304 : vector<16x128xf32> to vector<16x128xbf16>
    %c0_115 = arith.constant 0 : index
    %c0_116 = arith.constant 0 : index
    %c0_117 = arith.constant 0 : index
    %306 = vector.load %arg21[%c0_115, %c0_116, %c0_117] : memref<2x128x128xbf16, #tpu.memory_space<vmem>>, vector<1x128x128xbf16>
    %307 = vector.shape_cast %306 : vector<1x128x128xbf16> to vector<128x128xbf16>
    %cst_118 = arith.constant dense<0.000000e+00> : vector<16x128xf32>
    %308 = tpu.matmul %305, %307, %cst_118 {dimension_numbers = #tpu.dot_dimension_numbers<[1], [0], [0], [1], [0, 0, 1, 1], [], []>} : vector<16x128xbf16>, vector<128x128xbf16>, vector<16x128xf32> -> vector<16x128xf32>
    %c0_119 = arith.constant 0 : index
    %c0_120 = arith.constant 0 : index
    %c0_121 = arith.constant 0 : index
    %309 = vector.load %arg22[%c0_119, %c0_120, %c0_121] : memref<2x1x128xf32, #tpu.memory_space<vmem>>, vector<1x1x128xf32>
    %310 = vector.shape_cast %309 : vector<1x1x128xf32> to vector<1x128xf32>
    %311 = vector.broadcast %310 : vector<1x128xf32> to vector<16x128xf32>
    %312 = arith.addf %308, %311 : vector<16x128xf32>
    %313 = arith.addf %294, %312 : vector<16x128xf32>
    %c0_122 = arith.constant 0 : index
    %c0_123 = arith.constant 0 : index
    %c0_124 = arith.constant 0 : index
    %314 = vector.load %arg23[%c0_122, %c0_123, %c0_124] : memref<2x1x128xf32, #tpu.memory_space<vmem>>, vector<1x1x128xf32>
    %315 = vector.shape_cast %314 : vector<1x1x128xf32> to vector<1x128xf32>
    %c0_125 = arith.constant 0 : index
    %c0_126 = arith.constant 0 : index
    %c0_127 = arith.constant 0 : index
    %316 = vector.load %arg24[%c0_125, %c0_126, %c0_127] : memref<2x1x128xf32, #tpu.memory_space<vmem>>, vector<1x1x128xf32>
    %317 = vector.shape_cast %316 : vector<1x1x128xf32> to vector<1x128xf32>
    %318 = vector.broadcast %4 : vector<1x128xf32> to vector<16x128xf32>
    %319 = arith.mulf %313, %318 : vector<16x128xf32>
    %cst_128 = arith.constant dense<0.000000e+00> : vector<16xf32>
    %320 = vector.multi_reduction <add>, %319, %cst_128 [1] : vector<16x128xf32> to vector<16xf32>
    %321 = vector.shape_cast %320 : vector<16xf32> to vector<16x1xf32>
    %cst_129 = arith.constant 3.125000e-02 : f32
    %322 = vector.broadcast %cst_129 : f32 to vector<16x1xf32>
    %323 = arith.mulf %321, %322 : vector<16x1xf32>
    %324 = vector.broadcast %323 : vector<16x1xf32> to vector<16x128xf32>
    %325 = arith.subf %319, %324 : vector<16x128xf32>
    %326 = vector.broadcast %4 : vector<1x128xf32> to vector<16x128xf32>
    %327 = arith.mulf %325, %326 : vector<16x128xf32>
    %328 = arith.mulf %327, %327 : vector<16x128xf32>
    %cst_130 = arith.constant dense<0.000000e+00> : vector<16xf32>
    %329 = vector.multi_reduction <add>, %328, %cst_130 [1] : vector<16x128xf32> to vector<16xf32>
    %330 = vector.shape_cast %329 : vector<16xf32> to vector<16x1xf32>
    %cst_131 = arith.constant 3.125000e-02 : f32
    %331 = vector.broadcast %cst_131 : f32 to vector<16x1xf32>
    %332 = arith.mulf %330, %331 : vector<16x1xf32>
    %cst_132 = arith.constant 9.99999974E-6 : f32
    %333 = vector.broadcast %cst_132 : f32 to vector<16x1xf32>
    %334 = arith.addf %332, %333 : vector<16x1xf32>
    %335 = math.rsqrt %334 : vector<16x1xf32>
    %336 = vector.broadcast %335 : vector<16x1xf32> to vector<16x128xf32>
    %337 = arith.mulf %327, %336 : vector<16x128xf32>
    %338 = vector.broadcast %315 : vector<1x128xf32> to vector<16x128xf32>
    %339 = arith.mulf %337, %338 : vector<16x128xf32>
    %340 = vector.broadcast %317 : vector<1x128xf32> to vector<16x128xf32>
    %341 = arith.addf %339, %340 : vector<16x128xf32>
    %342 = arith.truncf %341 : vector<16x128xf32> to vector<16x128xbf16>
    %c1 = arith.constant 1 : index
    %c0_133 = arith.constant 0 : index
    %c0_134 = arith.constant 0 : index
    %343 = vector.load %arg5[%c1, %c0_133, %c0_134] : memref<2x128x96xbf16, #tpu.memory_space<vmem>>, vector<1x128x96xbf16>
    %344 = vector.shape_cast %343 : vector<1x128x96xbf16> to vector<128x96xbf16>
    %cst_135 = arith.constant dense<0.000000e+00> : vector<16x96xf32>
    %345 = tpu.matmul %342, %344, %cst_135 {dimension_numbers = #tpu.dot_dimension_numbers<[1], [0], [0], [1], [0, 0, 1, 1], [], []>} : vector<16x128xbf16>, vector<128x96xbf16>, vector<16x96xf32> -> vector<16x96xf32>
    %c1_136 = arith.constant 1 : index
    %c0_137 = arith.constant 0 : index
    %c0_138 = arith.constant 0 : index
    %346 = vector.load %arg6[%c1_136, %c0_137, %c0_138] : memref<2x1x96xf32, #tpu.memory_space<vmem>>, vector<1x1x96xf32>
    %347 = vector.shape_cast %346 : vector<1x1x96xf32> to vector<1x96xf32>
    %348 = vector.broadcast %347 : vector<1x96xf32> to vector<16x96xf32>
    %349 = arith.addf %345, %348 : vector<16x96xf32>
    %350 = arith.truncf %349 : vector<16x96xf32> to vector<16x96xbf16>
    %351 = vector.shape_cast %350 : vector<16x96xbf16> to vector<2x8x96xbf16>
    %c1_139 = arith.constant 1 : index
    %c0_140 = arith.constant 0 : index
    %c0_141 = arith.constant 0 : index
    %c0_142 = arith.constant 0 : index
    %352 = vector.load %arg7[%c1_139, %c0_140, %c0_141, %c0_142] : memref<2x4x8x128xbf16, #tpu.memory_space<vmem>>, vector<1x4x8x128xbf16>
    %353 = vector.shape_cast %352 : vector<1x4x8x128xbf16> to vector<4x8x128xbf16>
    %c1_143 = arith.constant 1 : index
    %c0_144 = arith.constant 0 : index
    %c0_145 = arith.constant 0 : index
    %354 = vector.load %arg8[%c1_143, %c0_144, %c0_145] : memref<2x1x128xf32, #tpu.memory_space<vmem>>, vector<1x1x128xf32>
    %355 = vector.shape_cast %354 : vector<1x1x128xf32> to vector<1x128xf32>
    %cst_146 = arith.constant 0.000000e+00 : f32
    %356 = vector.broadcast %cst_146 : f32 to vector<16x128xf32>
    %357 = vector.extract_strided_slice %351 {offsets = [0, 0, 0], sizes = [2, 8, 8], strides = [1, 1, 1]} : vector<2x8x96xbf16> to vector<2x8x8xbf16>
    %358 = vector.extract_strided_slice %351 {offsets = [0, 0, 32], sizes = [2, 8, 8], strides = [1, 1, 1]} : vector<2x8x96xbf16> to vector<2x8x8xbf16>
    %359 = vector.extract_strided_slice %351 {offsets = [0, 0, 64], sizes = [2, 8, 8], strides = [1, 1, 1]} : vector<2x8x96xbf16> to vector<2x8x8xbf16>
    "tpu.trace_start"() <{level = 10 : i32, message = "btd,bsd->bts"}> : () -> ()
    %cst_147 = arith.constant dense<0.000000e+00> : vector<2x8x8xf32>
    %360 = tpu.matmul %357, %358, %cst_147 {dimension_numbers = #tpu.dot_dimension_numbers<[2], [2], [1], [1], [0, 0, 0, 1, 1, 1], [0], [0]>} : vector<2x8x8xbf16>, vector<2x8x8xbf16>, vector<2x8x8xf32> -> vector<2x8x8xf32>
    "tpu.trace_stop"() : () -> ()
    %361 = arith.addf %360, %8 : vector<2x8x8xf32>
    %cst_148 = arith.constant dense<0xFF800000> : vector<2x8xf32>
    %362 = vector.multi_reduction <maximumf>, %361, %cst_148 [2] : vector<2x8x8xf32> to vector<2x8xf32>
    %363 = vector.shape_cast %362 : vector<2x8xf32> to vector<2x8x1xf32>
    %364 = vector.broadcast %363 : vector<2x8x1xf32> to vector<2x8x8xf32>
    %365 = arith.subf %361, %364 : vector<2x8x8xf32>
    %366 = math.exp %365 : vector<2x8x8xf32>
    %cst_149 = arith.constant dense<0.000000e+00> : vector<2x8xf32>
    %367 = vector.multi_reduction <add>, %366, %cst_149 [2] : vector<2x8x8xf32> to vector<2x8xf32>
    %368 = vector.shape_cast %367 : vector<2x8xf32> to vector<2x8x1xf32>
    %369 = tpu.reciprocal %368 {approx = true} : vector<2x8x1xf32> -> vector<2x8x1xf32>
    %370 = vector.broadcast %369 : vector<2x8x1xf32> to vector<2x8x8xf32>
    %371 = arith.mulf %366, %370 : vector<2x8x8xf32>
    %372 = arith.truncf %371 : vector<2x8x8xf32> to vector<2x8x8xbf16>
    "tpu.trace_start"() <{level = 10 : i32, message = "bts,bsd->btd"}> : () -> ()
    %cst_150 = arith.constant dense<0.000000e+00> : vector<2x8x8xf32>
    %373 = tpu.matmul %372, %359, %cst_150 {dimension_numbers = #tpu.dot_dimension_numbers<[2], [1], [1], [2], [0, 0, 0, 1, 1, 2], [0], [0]>} : vector<2x8x8xbf16>, vector<2x8x8xbf16>, vector<2x8x8xf32> -> vector<2x8x8xf32>
    "tpu.trace_stop"() : () -> ()
    %374 = vector.shape_cast %373 : vector<2x8x8xf32> to vector<16x8xf32>
    %375 = arith.truncf %374 : vector<16x8xf32> to vector<16x8xbf16>
    %376 = vector.extract_strided_slice %353 {offsets = [0, 0, 0], sizes = [1, 8, 128], strides = [1, 1, 1]} : vector<4x8x128xbf16> to vector<1x8x128xbf16>
    %377 = vector.shape_cast %376 : vector<1x8x128xbf16> to vector<8x128xbf16>
    %cst_151 = arith.constant dense<0.000000e+00> : vector<16x128xf32>
    %378 = tpu.matmul %375, %377, %cst_151 {dimension_numbers = #tpu.dot_dimension_numbers<[1], [0], [0], [1], [0, 0, 1, 1], [], []>} : vector<16x8xbf16>, vector<8x128xbf16>, vector<16x128xf32> -> vector<16x128xf32>
    %379 = arith.addf %356, %378 : vector<16x128xf32>
    %380 = vector.extract_strided_slice %351 {offsets = [0, 0, 8], sizes = [2, 8, 8], strides = [1, 1, 1]} : vector<2x8x96xbf16> to vector<2x8x8xbf16>
    %381 = vector.extract_strided_slice %351 {offsets = [0, 0, 40], sizes = [2, 8, 8], strides = [1, 1, 1]} : vector<2x8x96xbf16> to vector<2x8x8xbf16>
    %382 = vector.extract_strided_slice %351 {offsets = [0, 0, 72], sizes = [2, 8, 8], strides = [1, 1, 1]} : vector<2x8x96xbf16> to vector<2x8x8xbf16>
    "tpu.trace_start"() <{level = 10 : i32, message = "btd,bsd->bts"}> : () -> ()
    %cst_152 = arith.constant dense<0.000000e+00> : vector<2x8x8xf32>
    %383 = tpu.matmul %380, %381, %cst_152 {dimension_numbers = #tpu.dot_dimension_numbers<[2], [2], [1], [1], [0, 0, 0, 1, 1, 1], [0], [0]>} : vector<2x8x8xbf16>, vector<2x8x8xbf16>, vector<2x8x8xf32> -> vector<2x8x8xf32>
    "tpu.trace_stop"() : () -> ()
    %384 = arith.addf %383, %8 : vector<2x8x8xf32>
    %cst_153 = arith.constant dense<0xFF800000> : vector<2x8xf32>
    %385 = vector.multi_reduction <maximumf>, %384, %cst_153 [2] : vector<2x8x8xf32> to vector<2x8xf32>
    %386 = vector.shape_cast %385 : vector<2x8xf32> to vector<2x8x1xf32>
    %387 = vector.broadcast %386 : vector<2x8x1xf32> to vector<2x8x8xf32>
    %388 = arith.subf %384, %387 : vector<2x8x8xf32>
    %389 = math.exp %388 : vector<2x8x8xf32>
    %cst_154 = arith.constant dense<0.000000e+00> : vector<2x8xf32>
    %390 = vector.multi_reduction <add>, %389, %cst_154 [2] : vector<2x8x8xf32> to vector<2x8xf32>
    %391 = vector.shape_cast %390 : vector<2x8xf32> to vector<2x8x1xf32>
    %392 = tpu.reciprocal %391 {approx = true} : vector<2x8x1xf32> -> vector<2x8x1xf32>
    %393 = vector.broadcast %392 : vector<2x8x1xf32> to vector<2x8x8xf32>
    %394 = arith.mulf %389, %393 : vector<2x8x8xf32>
    %395 = arith.truncf %394 : vector<2x8x8xf32> to vector<2x8x8xbf16>
    "tpu.trace_start"() <{level = 10 : i32, message = "bts,bsd->btd"}> : () -> ()
    %cst_155 = arith.constant dense<0.000000e+00> : vector<2x8x8xf32>
    %396 = tpu.matmul %395, %382, %cst_155 {dimension_numbers = #tpu.dot_dimension_numbers<[2], [1], [1], [2], [0, 0, 0, 1, 1, 2], [0], [0]>} : vector<2x8x8xbf16>, vector<2x8x8xbf16>, vector<2x8x8xf32> -> vector<2x8x8xf32>
    "tpu.trace_stop"() : () -> ()
    %397 = vector.shape_cast %396 : vector<2x8x8xf32> to vector<16x8xf32>
    %398 = arith.truncf %397 : vector<16x8xf32> to vector<16x8xbf16>
    %399 = vector.extract_strided_slice %353 {offsets = [1, 0, 0], sizes = [1, 8, 128], strides = [1, 1, 1]} : vector<4x8x128xbf16> to vector<1x8x128xbf16>
    %400 = vector.shape_cast %399 : vector<1x8x128xbf16> to vector<8x128xbf16>
    %cst_156 = arith.constant dense<0.000000e+00> : vector<16x128xf32>
    %401 = tpu.matmul %398, %400, %cst_156 {dimension_numbers = #tpu.dot_dimension_numbers<[1], [0], [0], [1], [0, 0, 1, 1], [], []>} : vector<16x8xbf16>, vector<8x128xbf16>, vector<16x128xf32> -> vector<16x128xf32>
    %402 = arith.addf %379, %401 : vector<16x128xf32>
    %403 = vector.extract_strided_slice %351 {offsets = [0, 0, 16], sizes = [2, 8, 8], strides = [1, 1, 1]} : vector<2x8x96xbf16> to vector<2x8x8xbf16>
    %404 = vector.extract_strided_slice %351 {offsets = [0, 0, 48], sizes = [2, 8, 8], strides = [1, 1, 1]} : vector<2x8x96xbf16> to vector<2x8x8xbf16>
    %405 = vector.extract_strided_slice %351 {offsets = [0, 0, 80], sizes = [2, 8, 8], strides = [1, 1, 1]} : vector<2x8x96xbf16> to vector<2x8x8xbf16>
    "tpu.trace_start"() <{level = 10 : i32, message = "btd,bsd->bts"}> : () -> ()
    %cst_157 = arith.constant dense<0.000000e+00> : vector<2x8x8xf32>
    %406 = tpu.matmul %403, %404, %cst_157 {dimension_numbers = #tpu.dot_dimension_numbers<[2], [2], [1], [1], [0, 0, 0, 1, 1, 1], [0], [0]>} : vector<2x8x8xbf16>, vector<2x8x8xbf16>, vector<2x8x8xf32> -> vector<2x8x8xf32>
    "tpu.trace_stop"() : () -> ()
    %407 = arith.addf %406, %8 : vector<2x8x8xf32>
    %cst_158 = arith.constant dense<0xFF800000> : vector<2x8xf32>
    %408 = vector.multi_reduction <maximumf>, %407, %cst_158 [2] : vector<2x8x8xf32> to vector<2x8xf32>
    %409 = vector.shape_cast %408 : vector<2x8xf32> to vector<2x8x1xf32>
    %410 = vector.broadcast %409 : vector<2x8x1xf32> to vector<2x8x8xf32>
    %411 = arith.subf %407, %410 : vector<2x8x8xf32>
    %412 = math.exp %411 : vector<2x8x8xf32>
    %cst_159 = arith.constant dense<0.000000e+00> : vector<2x8xf32>
    %413 = vector.multi_reduction <add>, %412, %cst_159 [2] : vector<2x8x8xf32> to vector<2x8xf32>
    %414 = vector.shape_cast %413 : vector<2x8xf32> to vector<2x8x1xf32>
    %415 = tpu.reciprocal %414 {approx = true} : vector<2x8x1xf32> -> vector<2x8x1xf32>
    %416 = vector.broadcast %415 : vector<2x8x1xf32> to vector<2x8x8xf32>
    %417 = arith.mulf %412, %416 : vector<2x8x8xf32>
    %418 = arith.truncf %417 : vector<2x8x8xf32> to vector<2x8x8xbf16>
    "tpu.trace_start"() <{level = 10 : i32, message = "bts,bsd->btd"}> : () -> ()
    %cst_160 = arith.constant dense<0.000000e+00> : vector<2x8x8xf32>
    %419 = tpu.matmul %418, %405, %cst_160 {dimension_numbers = #tpu.dot_dimension_numbers<[2], [1], [1], [2], [0, 0, 0, 1, 1, 2], [0], [0]>} : vector<2x8x8xbf16>, vector<2x8x8xbf16>, vector<2x8x8xf32> -> vector<2x8x8xf32>
    "tpu.trace_stop"() : () -> ()
    %420 = vector.shape_cast %419 : vector<2x8x8xf32> to vector<16x8xf32>
    %421 = arith.truncf %420 : vector<16x8xf32> to vector<16x8xbf16>
    %422 = vector.extract_strided_slice %353 {offsets = [2, 0, 0], sizes = [1, 8, 128], strides = [1, 1, 1]} : vector<4x8x128xbf16> to vector<1x8x128xbf16>
    %423 = vector.shape_cast %422 : vector<1x8x128xbf16> to vector<8x128xbf16>
    %cst_161 = arith.constant dense<0.000000e+00> : vector<16x128xf32>
    %424 = tpu.matmul %421, %423, %cst_161 {dimension_numbers = #tpu.dot_dimension_numbers<[1], [0], [0], [1], [0, 0, 1, 1], [], []>} : vector<16x8xbf16>, vector<8x128xbf16>, vector<16x128xf32> -> vector<16x128xf32>
    %425 = arith.addf %402, %424 : vector<16x128xf32>
    %426 = vector.extract_strided_slice %351 {offsets = [0, 0, 24], sizes = [2, 8, 8], strides = [1, 1, 1]} : vector<2x8x96xbf16> to vector<2x8x8xbf16>
    %427 = vector.extract_strided_slice %351 {offsets = [0, 0, 56], sizes = [2, 8, 8], strides = [1, 1, 1]} : vector<2x8x96xbf16> to vector<2x8x8xbf16>
    %428 = vector.extract_strided_slice %351 {offsets = [0, 0, 88], sizes = [2, 8, 8], strides = [1, 1, 1]} : vector<2x8x96xbf16> to vector<2x8x8xbf16>
    "tpu.trace_start"() <{level = 10 : i32, message = "btd,bsd->bts"}> : () -> ()
    %cst_162 = arith.constant dense<0.000000e+00> : vector<2x8x8xf32>
    %429 = tpu.matmul %426, %427, %cst_162 {dimension_numbers = #tpu.dot_dimension_numbers<[2], [2], [1], [1], [0, 0, 0, 1, 1, 1], [0], [0]>} : vector<2x8x8xbf16>, vector<2x8x8xbf16>, vector<2x8x8xf32> -> vector<2x8x8xf32>
    "tpu.trace_stop"() : () -> ()
    %430 = arith.addf %429, %8 : vector<2x8x8xf32>
    %cst_163 = arith.constant dense<0xFF800000> : vector<2x8xf32>
    %431 = vector.multi_reduction <maximumf>, %430, %cst_163 [2] : vector<2x8x8xf32> to vector<2x8xf32>
    %432 = vector.shape_cast %431 : vector<2x8xf32> to vector<2x8x1xf32>
    %433 = vector.broadcast %432 : vector<2x8x1xf32> to vector<2x8x8xf32>
    %434 = arith.subf %430, %433 : vector<2x8x8xf32>
    %435 = math.exp %434 : vector<2x8x8xf32>
    %cst_164 = arith.constant dense<0.000000e+00> : vector<2x8xf32>
    %436 = vector.multi_reduction <add>, %435, %cst_164 [2] : vector<2x8x8xf32> to vector<2x8xf32>
    %437 = vector.shape_cast %436 : vector<2x8xf32> to vector<2x8x1xf32>
    %438 = tpu.reciprocal %437 {approx = true} : vector<2x8x1xf32> -> vector<2x8x1xf32>
    %439 = vector.broadcast %438 : vector<2x8x1xf32> to vector<2x8x8xf32>
    %440 = arith.mulf %435, %439 : vector<2x8x8xf32>
    %441 = arith.truncf %440 : vector<2x8x8xf32> to vector<2x8x8xbf16>
    "tpu.trace_start"() <{level = 10 : i32, message = "bts,bsd->btd"}> : () -> ()
    %cst_165 = arith.constant dense<0.000000e+00> : vector<2x8x8xf32>
    %442 = tpu.matmul %441, %428, %cst_165 {dimension_numbers = #tpu.dot_dimension_numbers<[2], [1], [1], [2], [0, 0, 0, 1, 1, 2], [0], [0]>} : vector<2x8x8xbf16>, vector<2x8x8xbf16>, vector<2x8x8xf32> -> vector<2x8x8xf32>
    "tpu.trace_stop"() : () -> ()
    %443 = vector.shape_cast %442 : vector<2x8x8xf32> to vector<16x8xf32>
    %444 = arith.truncf %443 : vector<16x8xf32> to vector<16x8xbf16>
    %445 = vector.extract_strided_slice %353 {offsets = [3, 0, 0], sizes = [1, 8, 128], strides = [1, 1, 1]} : vector<4x8x128xbf16> to vector<1x8x128xbf16>
    %446 = vector.shape_cast %445 : vector<1x8x128xbf16> to vector<8x128xbf16>
    %cst_166 = arith.constant dense<0.000000e+00> : vector<16x128xf32>
    %447 = tpu.matmul %444, %446, %cst_166 {dimension_numbers = #tpu.dot_dimension_numbers<[1], [0], [0], [1], [0, 0, 1, 1], [], []>} : vector<16x8xbf16>, vector<8x128xbf16>, vector<16x128xf32> -> vector<16x128xf32>
    %448 = arith.addf %425, %447 : vector<16x128xf32>
    %449 = vector.broadcast %355 : vector<1x128xf32> to vector<16x128xf32>
    %450 = arith.addf %448, %449 : vector<16x128xf32>
    %451 = arith.addf %341, %450 : vector<16x128xf32>
    %c1_167 = arith.constant 1 : index
    %c0_168 = arith.constant 0 : index
    %c0_169 = arith.constant 0 : index
    %452 = vector.load %arg9[%c1_167, %c0_168, %c0_169] : memref<2x1x128xf32, #tpu.memory_space<vmem>>, vector<1x1x128xf32>
    %453 = vector.shape_cast %452 : vector<1x1x128xf32> to vector<1x128xf32>
    %c1_170 = arith.constant 1 : index
    %c0_171 = arith.constant 0 : index
    %c0_172 = arith.constant 0 : index
    %454 = vector.load %arg10[%c1_170, %c0_171, %c0_172] : memref<2x1x128xf32, #tpu.memory_space<vmem>>, vector<1x1x128xf32>
    %455 = vector.shape_cast %454 : vector<1x1x128xf32> to vector<1x128xf32>
    %456 = vector.broadcast %4 : vector<1x128xf32> to vector<16x128xf32>
    %457 = arith.mulf %451, %456 : vector<16x128xf32>
    %cst_173 = arith.constant dense<0.000000e+00> : vector<16xf32>
    %458 = vector.multi_reduction <add>, %457, %cst_173 [1] : vector<16x128xf32> to vector<16xf32>
    %459 = vector.shape_cast %458 : vector<16xf32> to vector<16x1xf32>
    %cst_174 = arith.constant 3.125000e-02 : f32
    %460 = vector.broadcast %cst_174 : f32 to vector<16x1xf32>
    %461 = arith.mulf %459, %460 : vector<16x1xf32>
    %462 = vector.broadcast %461 : vector<16x1xf32> to vector<16x128xf32>
    %463 = arith.subf %457, %462 : vector<16x128xf32>
    %464 = vector.broadcast %4 : vector<1x128xf32> to vector<16x128xf32>
    %465 = arith.mulf %463, %464 : vector<16x128xf32>
    %466 = arith.mulf %465, %465 : vector<16x128xf32>
    %cst_175 = arith.constant dense<0.000000e+00> : vector<16xf32>
    %467 = vector.multi_reduction <add>, %466, %cst_175 [1] : vector<16x128xf32> to vector<16xf32>
    %468 = vector.shape_cast %467 : vector<16xf32> to vector<16x1xf32>
    %cst_176 = arith.constant 3.125000e-02 : f32
    %469 = vector.broadcast %cst_176 : f32 to vector<16x1xf32>
    %470 = arith.mulf %468, %469 : vector<16x1xf32>
    %cst_177 = arith.constant 9.99999974E-6 : f32
    %471 = vector.broadcast %cst_177 : f32 to vector<16x1xf32>
    %472 = arith.addf %470, %471 : vector<16x1xf32>
    %473 = math.rsqrt %472 : vector<16x1xf32>
    %474 = vector.broadcast %473 : vector<16x1xf32> to vector<16x128xf32>
    %475 = arith.mulf %465, %474 : vector<16x128xf32>
    %476 = vector.broadcast %453 : vector<1x128xf32> to vector<16x128xf32>
    %477 = arith.mulf %475, %476 : vector<16x128xf32>
    %478 = vector.broadcast %455 : vector<1x128xf32> to vector<16x128xf32>
    %479 = arith.addf %477, %478 : vector<16x128xf32>
    %480 = arith.truncf %479 : vector<16x128xf32> to vector<16x128xbf16>
    %c1_178 = arith.constant 1 : index
    %c0_179 = arith.constant 0 : index
    %c0_180 = arith.constant 0 : index
    %481 = vector.load %arg11[%c1_178, %c0_179, %c0_180] : memref<2x128x32xbf16, #tpu.memory_space<vmem>>, vector<1x128x32xbf16>
    %482 = vector.shape_cast %481 : vector<1x128x32xbf16> to vector<128x32xbf16>
    %cst_181 = arith.constant dense<0.000000e+00> : vector<16x32xf32>
    %483 = tpu.matmul %480, %482, %cst_181 {dimension_numbers = #tpu.dot_dimension_numbers<[1], [0], [0], [1], [0, 0, 1, 1], [], []>} : vector<16x128xbf16>, vector<128x32xbf16>, vector<16x32xf32> -> vector<16x32xf32>
    %c1_182 = arith.constant 1 : index
    %c0_183 = arith.constant 0 : index
    %c0_184 = arith.constant 0 : index
    %484 = vector.load %arg12[%c1_182, %c0_183, %c0_184] : memref<2x1x32xf32, #tpu.memory_space<vmem>>, vector<1x1x32xf32>
    %485 = vector.shape_cast %484 : vector<1x1x32xf32> to vector<1x32xf32>
    %486 = vector.broadcast %485 : vector<1x32xf32> to vector<16x32xf32>
    %487 = arith.addf %483, %486 : vector<16x32xf32>
    %488 = arith.truncf %487 : vector<16x32xf32> to vector<16x32xbf16>
    %489 = vector.shape_cast %488 : vector<16x32xbf16> to vector<2x8x32xbf16>
    %c1_185 = arith.constant 1 : index
    %c0_186 = arith.constant 0 : index
    %c0_187 = arith.constant 0 : index
    %490 = vector.load %arg13[%c1_185, %c0_186, %c0_187] : memref<2x128x64xbf16, #tpu.memory_space<vmem>>, vector<1x128x64xbf16>
    %491 = vector.shape_cast %490 : vector<1x128x64xbf16> to vector<128x64xbf16>
    %cst_188 = arith.constant dense<0.000000e+00> : vector<16x64xf32>
    %492 = tpu.matmul %7, %491, %cst_188 {dimension_numbers = #tpu.dot_dimension_numbers<[1], [0], [0], [1], [0, 0, 1, 1], [], []>} : vector<16x128xbf16>, vector<128x64xbf16>, vector<16x64xf32> -> vector<16x64xf32>
    %c1_189 = arith.constant 1 : index
    %c0_190 = arith.constant 0 : index
    %c0_191 = arith.constant 0 : index
    %493 = vector.load %arg14[%c1_189, %c0_190, %c0_191] : memref<2x1x64xf32, #tpu.memory_space<vmem>>, vector<1x1x64xf32>
    %494 = vector.shape_cast %493 : vector<1x1x64xf32> to vector<1x64xf32>
    %495 = vector.broadcast %494 : vector<1x64xf32> to vector<16x64xf32>
    %496 = arith.addf %492, %495 : vector<16x64xf32>
    %497 = arith.truncf %496 : vector<16x64xf32> to vector<16x64xbf16>
    %498 = vector.shape_cast %497 : vector<16x64xbf16> to vector<2x8x64xbf16>
    %c1_192 = arith.constant 1 : index
    %c0_193 = arith.constant 0 : index
    %c0_194 = arith.constant 0 : index
    %c0_195 = arith.constant 0 : index
    %499 = vector.load %arg15[%c1_192, %c0_193, %c0_194, %c0_195] : memref<2x4x8x128xbf16, #tpu.memory_space<vmem>>, vector<1x4x8x128xbf16>
    %500 = vector.shape_cast %499 : vector<1x4x8x128xbf16> to vector<4x8x128xbf16>
    %c1_196 = arith.constant 1 : index
    %c0_197 = arith.constant 0 : index
    %c0_198 = arith.constant 0 : index
    %501 = vector.load %arg16[%c1_196, %c0_197, %c0_198] : memref<2x1x128xf32, #tpu.memory_space<vmem>>, vector<1x1x128xf32>
    %502 = vector.shape_cast %501 : vector<1x1x128xf32> to vector<1x128xf32>
    %cst_199 = arith.constant 0.000000e+00 : f32
    %503 = vector.broadcast %cst_199 : f32 to vector<16x128xf32>
    %504 = vector.extract_strided_slice %489 {offsets = [0, 0, 0], sizes = [2, 8, 8], strides = [1, 1, 1]} : vector<2x8x32xbf16> to vector<2x8x8xbf16>
    %505 = vector.extract_strided_slice %498 {offsets = [0, 0, 0], sizes = [2, 8, 8], strides = [1, 1, 1]} : vector<2x8x64xbf16> to vector<2x8x8xbf16>
    %506 = vector.extract_strided_slice %498 {offsets = [0, 0, 32], sizes = [2, 8, 8], strides = [1, 1, 1]} : vector<2x8x64xbf16> to vector<2x8x8xbf16>
    "tpu.trace_start"() <{level = 10 : i32, message = "btd,bsd->bts"}> : () -> ()
    %cst_200 = arith.constant dense<0.000000e+00> : vector<2x8x8xf32>
    %507 = tpu.matmul %504, %505, %cst_200 {dimension_numbers = #tpu.dot_dimension_numbers<[2], [2], [1], [1], [0, 0, 0, 1, 1, 1], [0], [0]>} : vector<2x8x8xbf16>, vector<2x8x8xbf16>, vector<2x8x8xf32> -> vector<2x8x8xf32>
    "tpu.trace_stop"() : () -> ()
    %508 = arith.addf %507, %9 : vector<2x8x8xf32>
    %cst_201 = arith.constant dense<0xFF800000> : vector<2x8xf32>
    %509 = vector.multi_reduction <maximumf>, %508, %cst_201 [2] : vector<2x8x8xf32> to vector<2x8xf32>
    %510 = vector.shape_cast %509 : vector<2x8xf32> to vector<2x8x1xf32>
    %511 = vector.broadcast %510 : vector<2x8x1xf32> to vector<2x8x8xf32>
    %512 = arith.subf %508, %511 : vector<2x8x8xf32>
    %513 = math.exp %512 : vector<2x8x8xf32>
    %cst_202 = arith.constant dense<0.000000e+00> : vector<2x8xf32>
    %514 = vector.multi_reduction <add>, %513, %cst_202 [2] : vector<2x8x8xf32> to vector<2x8xf32>
    %515 = vector.shape_cast %514 : vector<2x8xf32> to vector<2x8x1xf32>
    %516 = tpu.reciprocal %515 {approx = true} : vector<2x8x1xf32> -> vector<2x8x1xf32>
    %517 = vector.broadcast %516 : vector<2x8x1xf32> to vector<2x8x8xf32>
    %518 = arith.mulf %513, %517 : vector<2x8x8xf32>
    %519 = arith.truncf %518 : vector<2x8x8xf32> to vector<2x8x8xbf16>
    "tpu.trace_start"() <{level = 10 : i32, message = "bts,bsd->btd"}> : () -> ()
    %cst_203 = arith.constant dense<0.000000e+00> : vector<2x8x8xf32>
    %520 = tpu.matmul %519, %506, %cst_203 {dimension_numbers = #tpu.dot_dimension_numbers<[2], [1], [1], [2], [0, 0, 0, 1, 1, 2], [0], [0]>} : vector<2x8x8xbf16>, vector<2x8x8xbf16>, vector<2x8x8xf32> -> vector<2x8x8xf32>
    "tpu.trace_stop"() : () -> ()
    %521 = vector.shape_cast %520 : vector<2x8x8xf32> to vector<16x8xf32>
    %522 = arith.truncf %521 : vector<16x8xf32> to vector<16x8xbf16>
    %523 = vector.extract_strided_slice %500 {offsets = [0, 0, 0], sizes = [1, 8, 128], strides = [1, 1, 1]} : vector<4x8x128xbf16> to vector<1x8x128xbf16>
    %524 = vector.shape_cast %523 : vector<1x8x128xbf16> to vector<8x128xbf16>
    %cst_204 = arith.constant dense<0.000000e+00> : vector<16x128xf32>
    %525 = tpu.matmul %522, %524, %cst_204 {dimension_numbers = #tpu.dot_dimension_numbers<[1], [0], [0], [1], [0, 0, 1, 1], [], []>} : vector<16x8xbf16>, vector<8x128xbf16>, vector<16x128xf32> -> vector<16x128xf32>
    %526 = arith.addf %503, %525 : vector<16x128xf32>
    %527 = vector.extract_strided_slice %489 {offsets = [0, 0, 8], sizes = [2, 8, 8], strides = [1, 1, 1]} : vector<2x8x32xbf16> to vector<2x8x8xbf16>
    %528 = vector.extract_strided_slice %498 {offsets = [0, 0, 8], sizes = [2, 8, 8], strides = [1, 1, 1]} : vector<2x8x64xbf16> to vector<2x8x8xbf16>
    %529 = vector.extract_strided_slice %498 {offsets = [0, 0, 40], sizes = [2, 8, 8], strides = [1, 1, 1]} : vector<2x8x64xbf16> to vector<2x8x8xbf16>
    "tpu.trace_start"() <{level = 10 : i32, message = "btd,bsd->bts"}> : () -> ()
    %cst_205 = arith.constant dense<0.000000e+00> : vector<2x8x8xf32>
    %530 = tpu.matmul %527, %528, %cst_205 {dimension_numbers = #tpu.dot_dimension_numbers<[2], [2], [1], [1], [0, 0, 0, 1, 1, 1], [0], [0]>} : vector<2x8x8xbf16>, vector<2x8x8xbf16>, vector<2x8x8xf32> -> vector<2x8x8xf32>
    "tpu.trace_stop"() : () -> ()
    %531 = arith.addf %530, %9 : vector<2x8x8xf32>
    %cst_206 = arith.constant dense<0xFF800000> : vector<2x8xf32>
    %532 = vector.multi_reduction <maximumf>, %531, %cst_206 [2] : vector<2x8x8xf32> to vector<2x8xf32>
    %533 = vector.shape_cast %532 : vector<2x8xf32> to vector<2x8x1xf32>
    %534 = vector.broadcast %533 : vector<2x8x1xf32> to vector<2x8x8xf32>
    %535 = arith.subf %531, %534 : vector<2x8x8xf32>
    %536 = math.exp %535 : vector<2x8x8xf32>
    %cst_207 = arith.constant dense<0.000000e+00> : vector<2x8xf32>
    %537 = vector.multi_reduction <add>, %536, %cst_207 [2] : vector<2x8x8xf32> to vector<2x8xf32>
    %538 = vector.shape_cast %537 : vector<2x8xf32> to vector<2x8x1xf32>
    %539 = tpu.reciprocal %538 {approx = true} : vector<2x8x1xf32> -> vector<2x8x1xf32>
    %540 = vector.broadcast %539 : vector<2x8x1xf32> to vector<2x8x8xf32>
    %541 = arith.mulf %536, %540 : vector<2x8x8xf32>
    %542 = arith.truncf %541 : vector<2x8x8xf32> to vector<2x8x8xbf16>
    "tpu.trace_start"() <{level = 10 : i32, message = "bts,bsd->btd"}> : () -> ()
    %cst_208 = arith.constant dense<0.000000e+00> : vector<2x8x8xf32>
    %543 = tpu.matmul %542, %529, %cst_208 {dimension_numbers = #tpu.dot_dimension_numbers<[2], [1], [1], [2], [0, 0, 0, 1, 1, 2], [0], [0]>} : vector<2x8x8xbf16>, vector<2x8x8xbf16>, vector<2x8x8xf32> -> vector<2x8x8xf32>
    "tpu.trace_stop"() : () -> ()
    %544 = vector.shape_cast %543 : vector<2x8x8xf32> to vector<16x8xf32>
    %545 = arith.truncf %544 : vector<16x8xf32> to vector<16x8xbf16>
    %546 = vector.extract_strided_slice %500 {offsets = [1, 0, 0], sizes = [1, 8, 128], strides = [1, 1, 1]} : vector<4x8x128xbf16> to vector<1x8x128xbf16>
    %547 = vector.shape_cast %546 : vector<1x8x128xbf16> to vector<8x128xbf16>
    %cst_209 = arith.constant dense<0.000000e+00> : vector<16x128xf32>
    %548 = tpu.matmul %545, %547, %cst_209 {dimension_numbers = #tpu.dot_dimension_numbers<[1], [0], [0], [1], [0, 0, 1, 1], [], []>} : vector<16x8xbf16>, vector<8x128xbf16>, vector<16x128xf32> -> vector<16x128xf32>
    %549 = arith.addf %526, %548 : vector<16x128xf32>
    %550 = vector.extract_strided_slice %489 {offsets = [0, 0, 16], sizes = [2, 8, 8], strides = [1, 1, 1]} : vector<2x8x32xbf16> to vector<2x8x8xbf16>
    %551 = vector.extract_strided_slice %498 {offsets = [0, 0, 16], sizes = [2, 8, 8], strides = [1, 1, 1]} : vector<2x8x64xbf16> to vector<2x8x8xbf16>
    %552 = vector.extract_strided_slice %498 {offsets = [0, 0, 48], sizes = [2, 8, 8], strides = [1, 1, 1]} : vector<2x8x64xbf16> to vector<2x8x8xbf16>
    "tpu.trace_start"() <{level = 10 : i32, message = "btd,bsd->bts"}> : () -> ()
    %cst_210 = arith.constant dense<0.000000e+00> : vector<2x8x8xf32>
    %553 = tpu.matmul %550, %551, %cst_210 {dimension_numbers = #tpu.dot_dimension_numbers<[2], [2], [1], [1], [0, 0, 0, 1, 1, 1], [0], [0]>} : vector<2x8x8xbf16>, vector<2x8x8xbf16>, vector<2x8x8xf32> -> vector<2x8x8xf32>
    "tpu.trace_stop"() : () -> ()
    %554 = arith.addf %553, %9 : vector<2x8x8xf32>
    %cst_211 = arith.constant dense<0xFF800000> : vector<2x8xf32>
    %555 = vector.multi_reduction <maximumf>, %554, %cst_211 [2] : vector<2x8x8xf32> to vector<2x8xf32>
    %556 = vector.shape_cast %555 : vector<2x8xf32> to vector<2x8x1xf32>
    %557 = vector.broadcast %556 : vector<2x8x1xf32> to vector<2x8x8xf32>
    %558 = arith.subf %554, %557 : vector<2x8x8xf32>
    %559 = math.exp %558 : vector<2x8x8xf32>
    %cst_212 = arith.constant dense<0.000000e+00> : vector<2x8xf32>
    %560 = vector.multi_reduction <add>, %559, %cst_212 [2] : vector<2x8x8xf32> to vector<2x8xf32>
    %561 = vector.shape_cast %560 : vector<2x8xf32> to vector<2x8x1xf32>
    %562 = tpu.reciprocal %561 {approx = true} : vector<2x8x1xf32> -> vector<2x8x1xf32>
    %563 = vector.broadcast %562 : vector<2x8x1xf32> to vector<2x8x8xf32>
    %564 = arith.mulf %559, %563 : vector<2x8x8xf32>
    %565 = arith.truncf %564 : vector<2x8x8xf32> to vector<2x8x8xbf16>
    "tpu.trace_start"() <{level = 10 : i32, message = "bts,bsd->btd"}> : () -> ()
    %cst_213 = arith.constant dense<0.000000e+00> : vector<2x8x8xf32>
    %566 = tpu.matmul %565, %552, %cst_213 {dimension_numbers = #tpu.dot_dimension_numbers<[2], [1], [1], [2], [0, 0, 0, 1, 1, 2], [0], [0]>} : vector<2x8x8xbf16>, vector<2x8x8xbf16>, vector<2x8x8xf32> -> vector<2x8x8xf32>
    "tpu.trace_stop"() : () -> ()
    %567 = vector.shape_cast %566 : vector<2x8x8xf32> to vector<16x8xf32>
    %568 = arith.truncf %567 : vector<16x8xf32> to vector<16x8xbf16>
    %569 = vector.extract_strided_slice %500 {offsets = [2, 0, 0], sizes = [1, 8, 128], strides = [1, 1, 1]} : vector<4x8x128xbf16> to vector<1x8x128xbf16>
    %570 = vector.shape_cast %569 : vector<1x8x128xbf16> to vector<8x128xbf16>
    %cst_214 = arith.constant dense<0.000000e+00> : vector<16x128xf32>
    %571 = tpu.matmul %568, %570, %cst_214 {dimension_numbers = #tpu.dot_dimension_numbers<[1], [0], [0], [1], [0, 0, 1, 1], [], []>} : vector<16x8xbf16>, vector<8x128xbf16>, vector<16x128xf32> -> vector<16x128xf32>
    %572 = arith.addf %549, %571 : vector<16x128xf32>
    %573 = vector.extract_strided_slice %489 {offsets = [0, 0, 24], sizes = [2, 8, 8], strides = [1, 1, 1]} : vector<2x8x32xbf16> to vector<2x8x8xbf16>
    %574 = vector.extract_strided_slice %498 {offsets = [0, 0, 24], sizes = [2, 8, 8], strides = [1, 1, 1]} : vector<2x8x64xbf16> to vector<2x8x8xbf16>
    %575 = vector.extract_strided_slice %498 {offsets = [0, 0, 56], sizes = [2, 8, 8], strides = [1, 1, 1]} : vector<2x8x64xbf16> to vector<2x8x8xbf16>
    "tpu.trace_start"() <{level = 10 : i32, message = "btd,bsd->bts"}> : () -> ()
    %cst_215 = arith.constant dense<0.000000e+00> : vector<2x8x8xf32>
    %576 = tpu.matmul %573, %574, %cst_215 {dimension_numbers = #tpu.dot_dimension_numbers<[2], [2], [1], [1], [0, 0, 0, 1, 1, 1], [0], [0]>} : vector<2x8x8xbf16>, vector<2x8x8xbf16>, vector<2x8x8xf32> -> vector<2x8x8xf32>
    "tpu.trace_stop"() : () -> ()
    %577 = arith.addf %576, %9 : vector<2x8x8xf32>
    %cst_216 = arith.constant dense<0xFF800000> : vector<2x8xf32>
    %578 = vector.multi_reduction <maximumf>, %577, %cst_216 [2] : vector<2x8x8xf32> to vector<2x8xf32>
    %579 = vector.shape_cast %578 : vector<2x8xf32> to vector<2x8x1xf32>
    %580 = vector.broadcast %579 : vector<2x8x1xf32> to vector<2x8x8xf32>
    %581 = arith.subf %577, %580 : vector<2x8x8xf32>
    %582 = math.exp %581 : vector<2x8x8xf32>
    %cst_217 = arith.constant dense<0.000000e+00> : vector<2x8xf32>
    %583 = vector.multi_reduction <add>, %582, %cst_217 [2] : vector<2x8x8xf32> to vector<2x8xf32>
    %584 = vector.shape_cast %583 : vector<2x8xf32> to vector<2x8x1xf32>
    %585 = tpu.reciprocal %584 {approx = true} : vector<2x8x1xf32> -> vector<2x8x1xf32>
    %586 = vector.broadcast %585 : vector<2x8x1xf32> to vector<2x8x8xf32>
    %587 = arith.mulf %582, %586 : vector<2x8x8xf32>
    %588 = arith.truncf %587 : vector<2x8x8xf32> to vector<2x8x8xbf16>
    "tpu.trace_start"() <{level = 10 : i32, message = "bts,bsd->btd"}> : () -> ()
    %cst_218 = arith.constant dense<0.000000e+00> : vector<2x8x8xf32>
    %589 = tpu.matmul %588, %575, %cst_218 {dimension_numbers = #tpu.dot_dimension_numbers<[2], [1], [1], [2], [0, 0, 0, 1, 1, 2], [0], [0]>} : vector<2x8x8xbf16>, vector<2x8x8xbf16>, vector<2x8x8xf32> -> vector<2x8x8xf32>
    "tpu.trace_stop"() : () -> ()
    %590 = vector.shape_cast %589 : vector<2x8x8xf32> to vector<16x8xf32>
    %591 = arith.truncf %590 : vector<16x8xf32> to vector<16x8xbf16>
    %592 = vector.extract_strided_slice %500 {offsets = [3, 0, 0], sizes = [1, 8, 128], strides = [1, 1, 1]} : vector<4x8x128xbf16> to vector<1x8x128xbf16>
    %593 = vector.shape_cast %592 : vector<1x8x128xbf16> to vector<8x128xbf16>
    %cst_219 = arith.constant dense<0.000000e+00> : vector<16x128xf32>
    %594 = tpu.matmul %591, %593, %cst_219 {dimension_numbers = #tpu.dot_dimension_numbers<[1], [0], [0], [1], [0, 0, 1, 1], [], []>} : vector<16x8xbf16>, vector<8x128xbf16>, vector<16x128xf32> -> vector<16x128xf32>
    %595 = arith.addf %572, %594 : vector<16x128xf32>
    %596 = vector.broadcast %502 : vector<1x128xf32> to vector<16x128xf32>
    %597 = arith.addf %595, %596 : vector<16x128xf32>
    %598 = arith.addf %479, %597 : vector<16x128xf32>
    %c1_220 = arith.constant 1 : index
    %c0_221 = arith.constant 0 : index
    %c0_222 = arith.constant 0 : index
    %599 = vector.load %arg17[%c1_220, %c0_221, %c0_222] : memref<2x1x128xf32, #tpu.memory_space<vmem>>, vector<1x1x128xf32>
    %600 = vector.shape_cast %599 : vector<1x1x128xf32> to vector<1x128xf32>
    %c1_223 = arith.constant 1 : index
    %c0_224 = arith.constant 0 : index
    %c0_225 = arith.constant 0 : index
    %601 = vector.load %arg18[%c1_223, %c0_224, %c0_225] : memref<2x1x128xf32, #tpu.memory_space<vmem>>, vector<1x1x128xf32>
    %602 = vector.shape_cast %601 : vector<1x1x128xf32> to vector<1x128xf32>
    %603 = vector.broadcast %4 : vector<1x128xf32> to vector<16x128xf32>
    %604 = arith.mulf %598, %603 : vector<16x128xf32>
    %cst_226 = arith.constant dense<0.000000e+00> : vector<16xf32>
    %605 = vector.multi_reduction <add>, %604, %cst_226 [1] : vector<16x128xf32> to vector<16xf32>
    %606 = vector.shape_cast %605 : vector<16xf32> to vector<16x1xf32>
    %cst_227 = arith.constant 3.125000e-02 : f32
    %607 = vector.broadcast %cst_227 : f32 to vector<16x1xf32>
    %608 = arith.mulf %606, %607 : vector<16x1xf32>
    %609 = vector.broadcast %608 : vector<16x1xf32> to vector<16x128xf32>
    %610 = arith.subf %604, %609 : vector<16x128xf32>
    %611 = vector.broadcast %4 : vector<1x128xf32> to vector<16x128xf32>
    %612 = arith.mulf %610, %611 : vector<16x128xf32>
    %613 = arith.mulf %612, %612 : vector<16x128xf32>
    %cst_228 = arith.constant dense<0.000000e+00> : vector<16xf32>
    %614 = vector.multi_reduction <add>, %613, %cst_228 [1] : vector<16x128xf32> to vector<16xf32>
    %615 = vector.shape_cast %614 : vector<16xf32> to vector<16x1xf32>
    %cst_229 = arith.constant 3.125000e-02 : f32
    %616 = vector.broadcast %cst_229 : f32 to vector<16x1xf32>
    %617 = arith.mulf %615, %616 : vector<16x1xf32>
    %cst_230 = arith.constant 9.99999974E-6 : f32
    %618 = vector.broadcast %cst_230 : f32 to vector<16x1xf32>
    %619 = arith.addf %617, %618 : vector<16x1xf32>
    %620 = math.rsqrt %619 : vector<16x1xf32>
    %621 = vector.broadcast %620 : vector<16x1xf32> to vector<16x128xf32>
    %622 = arith.mulf %612, %621 : vector<16x128xf32>
    %623 = vector.broadcast %600 : vector<1x128xf32> to vector<16x128xf32>
    %624 = arith.mulf %622, %623 : vector<16x128xf32>
    %625 = vector.broadcast %602 : vector<1x128xf32> to vector<16x128xf32>
    %626 = arith.addf %624, %625 : vector<16x128xf32>
    %627 = arith.truncf %626 : vector<16x128xf32> to vector<16x128xbf16>
    %c1_231 = arith.constant 1 : index
    %c0_232 = arith.constant 0 : index
    %c0_233 = arith.constant 0 : index
    %628 = vector.load %arg19[%c1_231, %c0_232, %c0_233] : memref<2x128x128xbf16, #tpu.memory_space<vmem>>, vector<1x128x128xbf16>
    %629 = vector.shape_cast %628 : vector<1x128x128xbf16> to vector<128x128xbf16>
    %cst_234 = arith.constant dense<0.000000e+00> : vector<16x128xf32>
    %630 = tpu.matmul %627, %629, %cst_234 {dimension_numbers = #tpu.dot_dimension_numbers<[1], [0], [0], [1], [0, 0, 1, 1], [], []>} : vector<16x128xbf16>, vector<128x128xbf16>, vector<16x128xf32> -> vector<16x128xf32>
    %c1_235 = arith.constant 1 : index
    %c0_236 = arith.constant 0 : index
    %c0_237 = arith.constant 0 : index
    %631 = vector.load %arg20[%c1_235, %c0_236, %c0_237] : memref<2x1x128xf32, #tpu.memory_space<vmem>>, vector<1x1x128xf32>
    %632 = vector.shape_cast %631 : vector<1x1x128xf32> to vector<1x128xf32>
    %633 = vector.broadcast %632 : vector<1x128xf32> to vector<16x128xf32>
    %634 = arith.addf %630, %633 : vector<16x128xf32>
    %cst_238 = arith.constant 0.000000e+00 : f32
    %635 = vector.broadcast %cst_238 : f32 to vector<16x128xf32>
    %636 = arith.maximumf %634, %635 : vector<16x128xf32>
    %637 = arith.truncf %636 : vector<16x128xf32> to vector<16x128xbf16>
    %c1_239 = arith.constant 1 : index
    %c0_240 = arith.constant 0 : index
    %c0_241 = arith.constant 0 : index
    %638 = vector.load %arg21[%c1_239, %c0_240, %c0_241] : memref<2x128x128xbf16, #tpu.memory_space<vmem>>, vector<1x128x128xbf16>
    %639 = vector.shape_cast %638 : vector<1x128x128xbf16> to vector<128x128xbf16>
    %cst_242 = arith.constant dense<0.000000e+00> : vector<16x128xf32>
    %640 = tpu.matmul %637, %639, %cst_242 {dimension_numbers = #tpu.dot_dimension_numbers<[1], [0], [0], [1], [0, 0, 1, 1], [], []>} : vector<16x128xbf16>, vector<128x128xbf16>, vector<16x128xf32> -> vector<16x128xf32>
    %c1_243 = arith.constant 1 : index
    %c0_244 = arith.constant 0 : index
    %c0_245 = arith.constant 0 : index
    %641 = vector.load %arg22[%c1_243, %c0_244, %c0_245] : memref<2x1x128xf32, #tpu.memory_space<vmem>>, vector<1x1x128xf32>
    %642 = vector.shape_cast %641 : vector<1x1x128xf32> to vector<1x128xf32>
    %643 = vector.broadcast %642 : vector<1x128xf32> to vector<16x128xf32>
    %644 = arith.addf %640, %643 : vector<16x128xf32>
    %645 = arith.addf %626, %644 : vector<16x128xf32>
    %c1_246 = arith.constant 1 : index
    %c0_247 = arith.constant 0 : index
    %c0_248 = arith.constant 0 : index
    %646 = vector.load %arg23[%c1_246, %c0_247, %c0_248] : memref<2x1x128xf32, #tpu.memory_space<vmem>>, vector<1x1x128xf32>
    %647 = vector.shape_cast %646 : vector<1x1x128xf32> to vector<1x128xf32>
    %c1_249 = arith.constant 1 : index
    %c0_250 = arith.constant 0 : index
    %c0_251 = arith.constant 0 : index
    %648 = vector.load %arg24[%c1_249, %c0_250, %c0_251] : memref<2x1x128xf32, #tpu.memory_space<vmem>>, vector<1x1x128xf32>
    %649 = vector.shape_cast %648 : vector<1x1x128xf32> to vector<1x128xf32>
    %650 = vector.broadcast %4 : vector<1x128xf32> to vector<16x128xf32>
    %651 = arith.mulf %645, %650 : vector<16x128xf32>
    %cst_252 = arith.constant dense<0.000000e+00> : vector<16xf32>
    %652 = vector.multi_reduction <add>, %651, %cst_252 [1] : vector<16x128xf32> to vector<16xf32>
    %653 = vector.shape_cast %652 : vector<16xf32> to vector<16x1xf32>
    %cst_253 = arith.constant 3.125000e-02 : f32
    %654 = vector.broadcast %cst_253 : f32 to vector<16x1xf32>
    %655 = arith.mulf %653, %654 : vector<16x1xf32>
    %656 = vector.broadcast %655 : vector<16x1xf32> to vector<16x128xf32>
    %657 = arith.subf %651, %656 : vector<16x128xf32>
    %658 = vector.broadcast %4 : vector<1x128xf32> to vector<16x128xf32>
    %659 = arith.mulf %657, %658 : vector<16x128xf32>
    %660 = arith.mulf %659, %659 : vector<16x128xf32>
    %cst_254 = arith.constant dense<0.000000e+00> : vector<16xf32>
    %661 = vector.multi_reduction <add>, %660, %cst_254 [1] : vector<16x128xf32> to vector<16xf32>
    %662 = vector.shape_cast %661 : vector<16xf32> to vector<16x1xf32>
    %cst_255 = arith.constant 3.125000e-02 : f32
    %663 = vector.broadcast %cst_255 : f32 to vector<16x1xf32>
    %664 = arith.mulf %662, %663 : vector<16x1xf32>
    %cst_256 = arith.constant 9.99999974E-6 : f32
    %665 = vector.broadcast %cst_256 : f32 to vector<16x1xf32>
    %666 = arith.addf %664, %665 : vector<16x1xf32>
    %667 = math.rsqrt %666 : vector<16x1xf32>
    %668 = vector.broadcast %667 : vector<16x1xf32> to vector<16x128xf32>
    %669 = arith.mulf %659, %668 : vector<16x128xf32>
    %670 = vector.broadcast %647 : vector<1x128xf32> to vector<16x128xf32>
    %671 = arith.mulf %669, %670 : vector<16x128xf32>
    %672 = vector.broadcast %649 : vector<1x128xf32> to vector<16x128xf32>
    %673 = arith.addf %671, %672 : vector<16x128xf32>
    %c0_257 = arith.constant 0 : index
    %c0_258 = arith.constant 0 : index
    %674 = vector.load %arg25[%c0_257, %c0_258] : memref<16x128xf32, #tpu.memory_space<vmem>>, vector<16x128xf32>
    tpu.vector_store %arg25[%c0_257, %c0_258], %673 {strides = array<i32>} : memref<16x128xf32, #tpu.memory_space<vmem>>, vector<16x128xf32>,
    return
  }
  func.func @transform_0(%arg0: i32) -> (i32, i32) {
    %c0_i32 = arith.constant 0 : i32
    %c0_i32_0 = arith.constant 0 : i32
    %c0_i32_1 = arith.constant 0 : i32
    return %c0_i32, %c0_i32_0 : i32, i32
  }
  func.func @transform_1(%arg0: i32) -> (i32, i32) {
    %c0_i32 = arith.constant 0 : i32
    %c0_i32_0 = arith.constant 0 : i32
    %c0_i32_1 = arith.constant 0 : i32
    return %c0_i32, %c0_i32_0 : i32, i32
  }
  func.func @transform_2(%arg0: i32) -> (i32, i32, i32) {
    %c0_i32 = arith.constant 0 : i32
    %c0_i32_0 = arith.constant 0 : i32
    %c0_i32_1 = arith.constant 0 : i32
    %c0_i32_2 = arith.constant 0 : i32
    return %c0_i32, %c0_i32_0, %c0_i32_1 : i32, i32, i32
  }
  func.func @transform_3(%arg0: i32) -> (i32, i32, i32) {
    %c0_i32 = arith.constant 0 : i32
    %c0_i32_0 = arith.constant 0 : i32
    %c0_i32_1 = arith.constant 0 : i32
    %c0_i32_2 = arith.constant 0 : i32
    return %c0_i32, %c0_i32_0, %c0_i32_1 : i32, i32, i32
  }
  func.func @transform_4(%arg0: i32) -> (i32, i32, i32) {
    %c0_i32 = arith.constant 0 : i32
    %c0_i32_0 = arith.constant 0 : i32
    %c0_i32_1 = arith.constant 0 : i32
    %c0_i32_2 = arith.constant 0 : i32
    return %c0_i32, %c0_i32_0, %c0_i32_1 : i32, i32, i32
  }
  func.func @transform_5(%arg0: i32) -> (i32, i32, i32) {
    %c0_i32 = arith.constant 0 : i32
    %c0_i32_0 = arith.constant 0 : i32
    %c0_i32_1 = arith.constant 0 : i32
    %c0_i32_2 = arith.constant 0 : i32
    return %c0_i32, %c0_i32_0, %c0_i32_1 : i32, i32, i32
  }
  func.func @transform_6(%arg0: i32) -> (i32, i32, i32, i32) {
    %c0_i32 = arith.constant 0 : i32
    %c0_i32_0 = arith.constant 0 : i32
    %c0_i32_1 = arith.constant 0 : i32
    %c0_i32_2 = arith.constant 0 : i32
    %c0_i32_3 = arith.constant 0 : i32
    return %c0_i32, %c0_i32_0, %c0_i32_1, %c0_i32_2 : i32, i32, i32, i32
  }
  func.func @transform_7(%arg0: i32) -> (i32, i32, i32) {
    %c0_i32 = arith.constant 0 : i32
    %c0_i32_0 = arith.constant 0 : i32
    %c0_i32_1 = arith.constant 0 : i32
    %c0_i32_2 = arith.constant 0 : i32
    return %c0_i32, %c0_i32_0, %c0_i32_1 : i32, i32, i32
  }
  func.func @transform_8(%arg0: i32) -> (i32, i32, i32) {
    %c0_i32 = arith.constant 0 : i32
    %c0_i32_0 = arith.constant 0 : i32
    %c0_i32_1 = arith.constant 0 : i32
    %c0_i32_2 = arith.constant 0 : i32
    return %c0_i32, %c0_i32_0, %c0_i32_1 : i32, i32, i32
  }
  func.func @transform_9(%arg0: i32) -> (i32, i32, i32) {
    %c0_i32 = arith.constant 0 : i32
    %c0_i32_0 = arith.constant 0 : i32
    %c0_i32_1 = arith.constant 0 : i32
    %c0_i32_2 = arith.constant 0 : i32
    return %c0_i32, %c0_i32_0, %c0_i32_1 : i32, i32, i32
  }
  func.func @transform_10(%arg0: i32) -> (i32, i32, i32) {
    %c0_i32 = arith.constant 0 : i32
    %c0_i32_0 = arith.constant 0 : i32
    %c0_i32_1 = arith.constant 0 : i32
    %c0_i32_2 = arith.constant 0 : i32
    return %c0_i32, %c0_i32_0, %c0_i32_1 : i32, i32, i32
  }
  func.func @transform_11(%arg0: i32) -> (i32, i32, i32) {
    %c0_i32 = arith.constant 0 : i32
    %c0_i32_0 = arith.constant 0 : i32
    %c0_i32_1 = arith.constant 0 : i32
    %c0_i32_2 = arith.constant 0 : i32
    return %c0_i32, %c0_i32_0, %c0_i32_1 : i32, i32, i32
  }
  func.func @transform_12(%arg0: i32) -> (i32, i32, i32) {
    %c0_i32 = arith.constant 0 : i32
    %c0_i32_0 = arith.constant 0 : i32
    %c0_i32_1 = arith.constant 0 : i32
    %c0_i32_2 = arith.constant 0 : i32
    return %c0_i32, %c0_i32_0, %c0_i32_1 : i32, i32, i32
  }
  func.func @transform_13(%arg0: i32) -> (i32, i32, i32) {
    %c0_i32 = arith.constant 0 : i32
    %c0_i32_0 = arith.constant 0 : i32
    %c0_i32_1 = arith.constant 0 : i32
    %c0_i32_2 = arith.constant 0 : i32
    return %c0_i32, %c0_i32_0, %c0_i32_1 : i32, i32, i32
  }
  func.func @transform_14(%arg0: i32) -> (i32, i32, i32, i32) {
    %c0_i32 = arith.constant 0 : i32
    %c0_i32_0 = arith.constant 0 : i32
    %c0_i32_1 = arith.constant 0 : i32
    %c0_i32_2 = arith.constant 0 : i32
    %c0_i32_3 = arith.constant 0 : i32
    return %c0_i32, %c0_i32_0, %c0_i32_1, %c0_i32_2 : i32, i32, i32, i32
  }
  func.func @transform_15(%arg0: i32) -> (i32, i32, i32) {
    %c0_i32 = arith.constant 0 : i32
    %c0_i32_0 = arith.constant 0 : i32
    %c0_i32_1 = arith.constant 0 : i32
    %c0_i32_2 = arith.constant 0 : i32
    return %c0_i32, %c0_i32_0, %c0_i32_1 : i32, i32, i32
  }
  func.func @transform_16(%arg0: i32) -> (i32, i32, i32) {
    %c0_i32 = arith.constant 0 : i32
    %c0_i32_0 = arith.constant 0 : i32
    %c0_i32_1 = arith.constant 0 : i32
    %c0_i32_2 = arith.constant 0 : i32
    return %c0_i32, %c0_i32_0, %c0_i32_1 : i32, i32, i32
  }
  func.func @transform_17(%arg0: i32) -> (i32, i32, i32) {
    %c0_i32 = arith.constant 0 : i32
    %c0_i32_0 = arith.constant 0 : i32
    %c0_i32_1 = arith.constant 0 : i32
    %c0_i32_2 = arith.constant 0 : i32
    return %c0_i32, %c0_i32_0, %c0_i32_1 : i32, i32, i32
  }
  func.func @transform_18(%arg0: i32) -> (i32, i32, i32) {
    %c0_i32 = arith.constant 0 : i32
    %c0_i32_0 = arith.constant 0 : i32
    %c0_i32_1 = arith.constant 0 : i32
    %c0_i32_2 = arith.constant 0 : i32
    return %c0_i32, %c0_i32_0, %c0_i32_1 : i32, i32, i32
  }
  func.func @transform_19(%arg0: i32) -> (i32, i32, i32) {
    %c0_i32 = arith.constant 0 : i32
    %c0_i32_0 = arith.constant 0 : i32
    %c0_i32_1 = arith.constant 0 : i32
    %c0_i32_2 = arith.constant 0 : i32
    return %c0_i32, %c0_i32_0, %c0_i32_1 : i32, i32, i32
  }
  func.func @transform_20(%arg0: i32) -> (i32, i32, i32) {
    %c0_i32 = arith.constant 0 : i32
    %c0_i32_0 = arith.constant 0 : i32
    %c0_i32_1 = arith.constant 0 : i32
    %c0_i32_2 = arith.constant 0 : i32
    return %c0_i32, %c0_i32_0, %c0_i32_1 : i32, i32, i32
  }
  func.func @transform_21(%arg0: i32) -> (i32, i32, i32) {
    %c0_i32 = arith.constant 0 : i32
    %c0_i32_0 = arith.constant 0 : i32
    %c0_i32_1 = arith.constant 0 : i32
    %c0_i32_2 = arith.constant 0 : i32
    return %c0_i32, %c0_i32_0, %c0_i32_1 : i32, i32, i32
  }
  func.func @transform_22(%arg0: i32) -> (i32, i32, i32) {
    %c0_i32 = arith.constant 0 : i32
    %c0_i32_0 = arith.constant 0 : i32
    %c0_i32_1 = arith.constant 0 : i32
    %c0_i32_2 = arith.constant 0 : i32
    return %c0_i32, %c0_i32_0, %c0_i32_1 : i32, i32, i32
  }
  func.func @transform_23(%arg0: i32) -> (i32, i32, i32) {
    %c0_i32 = arith.constant 0 : i32
    %c0_i32_0 = arith.constant 0 : i32
    %c0_i32_1 = arith.constant 0 : i32
    %c0_i32_2 = arith.constant 0 : i32
    return %c0_i32, %c0_i32_0, %c0_i32_1 : i32, i32, i32
  }
  func.func @transform_24(%arg0: i32) -> (i32, i32) {
    %c0_i32 = arith.constant 0 : i32
    %c0_i32_0 = arith.constant 0 : i32
    %c0_i32_1 = arith.constant 0 : i32
    return %c0_i32, %c0_i32_0 : i32, i32
  }
}

</mosaic_0001>

<llo_original>
// kernel: tpu_custom_call.1
$region0: #{tpu_custom_call.1}
  #allocation0 [shape = 'u32[]', space=smem, size = 0x4, offset = 0x4, fixed_abs, tag = 'smem constant byte address 0x4 - core index']
  #allocation1 [shape = 'u32[72,128]{1,0:T(1,128)}', space=vmem, size = 0x9000, scoped, tag = 'internal scratch']
  %s0 = inlined_call_operand.vmem [shape: f32[16,128], index: 0, kind: input, shape index: {}]
  %s1 = inlined_call_operand.vmem [shape: f32[16,128], index: 1, kind: input, shape index: {}]
  %s2 = inlined_call_operand.vmem [shape: f32[2,8,8], index: 2, kind: input, shape index: {}]
  %s3 = inlined_call_operand.vmem [shape: f32[2,8,8], index: 3, kind: input, shape index: {}]
  %s4 = inlined_call_operand.vmem [shape: bf16[2,128,96], index: 4, kind: input, shape index: {}]
  %s5 = inlined_call_operand.vmem [shape: f32[2,1,96], index: 5, kind: input, shape index: {}]
  %s6 = inlined_call_operand.vmem [shape: bf16[2,4,8,128], index: 6, kind: input, shape index: {}]
  %s7 = inlined_call_operand.vmem [shape: f32[2,1,128], index: 7, kind: input, shape index: {}]
  %s8 = inlined_call_operand.vmem [shape: f32[2,1,128], index: 8, kind: input, shape index: {}]
  %s9 = inlined_call_operand.vmem [shape: f32[2,1,128], index: 9, kind: input, shape index: {}]
  %s10 = inlined_call_operand.vmem [shape: bf16[2,128,32], index: 10, kind: input, shape index: {}]
  %s11 = inlined_call_operand.vmem [shape: f32[2,1,32], index: 11, kind: input, shape index: {}]
  %s12 = inlined_call_operand.vmem [shape: bf16[2,128,64], index: 12, kind: input, shape index: {}]
  %s13 = inlined_call_operand.vmem [shape: f32[2,1,64], index: 13, kind: input, shape index: {}]
  %s14 = inlined_call_operand.vmem [shape: bf16[2,4,8,128], index: 14, kind: input, shape index: {}]
  %s15 = inlined_call_operand.vmem [shape: f32[2,1,128], index: 15, kind: input, shape index: {}]
  %s16 = inlined_call_operand.vmem [shape: f32[2,1,128], index: 16, kind: input, shape index: {}]
  %s17 = inlined_call_operand.vmem [shape: f32[2,1,128], index: 17, kind: input, shape index: {}]
  %s18 = inlined_call_operand.vmem [shape: bf16[2,128,128], index: 18, kind: input, shape index: {}]
  %s19 = inlined_call_operand.vmem [shape: f32[2,1,128], index: 19, kind: input, shape index: {}]
  %s20 = inlined_call_operand.vmem [shape: bf16[2,128,128], index: 20, kind: input, shape index: {}]
  %s21 = inlined_call_operand.vmem [shape: f32[2,1,128], index: 21, kind: input, shape index: {}]
  %s22 = inlined_call_operand.vmem [shape: f32[2,1,128], index: 22, kind: input, shape index: {}]
  %s23 = inlined_call_operand.vmem [shape: f32[2,1,128], index: 23, kind: input, shape index: {}]
  %s24 = inlined_call_operand.hbm [shape: f32[16,128], index: 24, kind: output, shape index: {}]
  %s25 = sld [smem:[#allocation0]]
  $region106: #{tpu_custom_call.1} parent=0
    _
  %s27 = ssub.s32 1, %s25
  %s28 = scalar_select 0, %s27, %s25
  $region1: #{tpu_custom_call.1} parent=0
    #allocation2 [shape = 'u8[8192]{0}', space=vmem, size = 0x2000, scoped, tag = 'output window, operand 0, single buffered']
    #allocation3 [shape = 's32[1]{0}', space=sflag, size = 0x4, scoped, tag = 'scoped memory for tpu_custom_call.1']
    %29 = vsyncpa [#allocation3], 0
    // Predicated region
    $region2: #{tpu_custom_call.1} parent=1 // pred_check
      _
    $region3: #{tpu_custom_call.1} parent=1 // pred_check_branch
      %31 = sbr.rel (0) target = $region5
    $region4: #{tpu_custom_call.1} parent=1 // pred_region
      _
    $region5: #{tpu_custom_call.1} parent=1 // pred_fallthru
      _
    // Predicated region
    $region6: #{tpu_custom_call.1} parent=1 // pred_check
      _
    $region7: #{tpu_custom_call.1} parent=1 // pred_check_branch
      %33 = sbr.rel (0) target = $region9
    $region8: #{tpu_custom_call.1} parent=1 // pred_region
      _
    $region9: #{tpu_custom_call.1} parent=1 // pred_fallthru
      _
    // Predicated region
    $region10: #{tpu_custom_call.1} parent=1 // pred_check
      _
    $region11: #{tpu_custom_call.1} parent=1 // pred_check_branch
      %35 = sbr.rel (0) target = $region13
    $region12: #{tpu_custom_call.1} parent=1 // pred_region
      _
    $region13: #{tpu_custom_call.1} parent=1 // pred_fallthru
      _
    // Predicated region
    $region14: #{tpu_custom_call.1} parent=1 // pred_check
      _
    $region15: #{tpu_custom_call.1} parent=1 // pred_check_branch
      %37 = sbr.rel (0) target = $region17
    $region16: #{tpu_custom_call.1} parent=1 // pred_region
      _
    $region17: #{tpu_custom_call.1} parent=1 // pred_fallthru
      _
    // Predicated region
    $region18: #{tpu_custom_call.1} parent=1 // pred_check
      _
    $region19: #{tpu_custom_call.1} parent=1 // pred_check_branch
      %39 = sbr.rel (0) target = $region21
    $region20: #{tpu_custom_call.1} parent=1 // pred_region
      _
    $region21: #{tpu_custom_call.1} parent=1 // pred_fallthru
      _
    // Predicated region
    $region22: #{tpu_custom_call.1} parent=1 // pred_check
      _
    $region23: #{tpu_custom_call.1} parent=1 // pred_check_branch
      %41 = sbr.rel (0) target = $region25
    $region24: #{tpu_custom_call.1} parent=1 // pred_region
      _
    $region25: #{tpu_custom_call.1} parent=1 // pred_fallthru
      _
    // Predicated region
    $region26: #{tpu_custom_call.1} parent=1 // pred_check
      _
    $region27: #{tpu_custom_call.1} parent=1 // pred_check_branch
      %43 = sbr.rel (0) target = $region29
    $region28: #{tpu_custom_call.1} parent=1 // pred_region
      _
    $region29: #{tpu_custom_call.1} parent=1 // pred_fallthru
      _
    // Predicated region
    $region30: #{tpu_custom_call.1} parent=1 // pred_check
      _
    $region31: #{tpu_custom_call.1} parent=1 // pred_check_branch
      %45 = sbr.rel (0) target = $region33
    $region32: #{tpu_custom_call.1} parent=1 // pred_region
      _
    $region33: #{tpu_custom_call.1} parent=1 // pred_fallthru
      _
    // Predicated region
    $region34: #{tpu_custom_call.1} parent=1 // pred_check
      _
    $region35: #{tpu_custom_call.1} parent=1 // pred_check_branch
      %47 = sbr.rel (0) target = $region37
    $region36: #{tpu_custom_call.1} parent=1 // pred_region
      _
    $region37: #{tpu_custom_call.1} parent=1 // pred_fallthru
      _
    // Predicated region
    $region38: #{tpu_custom_call.1} parent=1 // pred_check
      _
    $region39: #{tpu_custom_call.1} parent=1 // pred_check_branch
      %49 = sbr.rel (0) target = $region41
    $region40: #{tpu_custom_call.1} parent=1 // pred_region
      _
    $region41: #{tpu_custom_call.1} parent=1 // pred_fallthru
      _
    // Predicated region
    $region42: #{tpu_custom_call.1} parent=1 // pred_check
      _
    $region43: #{tpu_custom_call.1} parent=1 // pred_check_branch
      %51 = sbr.rel (0) target = $region45
    $region44: #{tpu_custom_call.1} parent=1 // pred_region
      _
    $region45: #{tpu_custom_call.1} parent=1 // pred_fallthru
      _
    // Predicated region
    $region46: #{tpu_custom_call.1} parent=1 // pred_check
      _
    $region47: #{tpu_custom_call.1} parent=1 // pred_check_branch
      %53 = sbr.rel (0) target = $region49
    $region48: #{tpu_custom_call.1} parent=1 // pred_region
      _
    $region49: #{tpu_custom_call.1} parent=1 // pred_fallthru
      _
    // Predicated region
    $region50: #{tpu_custom_call.1} parent=1 // pred_check
      _
    $region51: #{tpu_custom_call.1} parent=1 // pred_check_branch
      %55 = sbr.rel (0) target = $region53
    $region52: #{tpu_custom_call.1} parent=1 // pred_region
      _
    $region53: #{tpu_custom_call.1} parent=1 // pred_fallthru
      _
    // Predicated region
    $region54: #{tpu_custom_call.1} parent=1 // pred_check
      _
    $region55: #{tpu_custom_call.1} parent=1 // pred_check_branch
      %57 = sbr.rel (0) target = $region57
    $region56: #{tpu_custom_call.1} parent=1 // pred_region
      _
    $region57: #{tpu_custom_call.1} parent=1 // pred_fallthru
      _
    // Predicated region
    $region58: #{tpu_custom_call.1} parent=1 // pred_check
      _
    $region59: #{tpu_custom_call.1} parent=1 // pred_check_branch
      %59 = sbr.rel (0) target = $region61
    $region60: #{tpu_custom_call.1} parent=1 // pred_region
      _
    $region61: #{tpu_custom_call.1} parent=1 // pred_fallthru
      _
    // Predicated region
    $region62: #{tpu_custom_call.1} parent=1 // pred_check
      _
    $region63: #{tpu_custom_call.1} parent=1 // pred_check_branch
      %61 = sbr.rel (0) target = $region65
    $region64: #{tpu_custom_call.1} parent=1 // pred_region
      _
    $region65: #{tpu_custom_call.1} parent=1 // pred_fallthru
      _
    // Predicated region
    $region66: #{tpu_custom_call.1} parent=1 // pred_check
      _
    $region67: #{tpu_custom_call.1} parent=1 // pred_check_branch
      %63 = sbr.rel (0) target = $region69
    $region68: #{tpu_custom_call.1} parent=1 // pred_region
      _
    $region69: #{tpu_custom_call.1} parent=1 // pred_fallthru
      _
    // Predicated region
    $region70: #{tpu_custom_call.1} parent=1 // pred_check
      _
    $region71: #{tpu_custom_call.1} parent=1 // pred_check_branch
      %65 = sbr.rel (0) target = $region73
    $region72: #{tpu_custom_call.1} parent=1 // pred_region
      _
    $region73: #{tpu_custom_call.1} parent=1 // pred_fallthru
      _
    // Predicated region
    $region74: #{tpu_custom_call.1} parent=1 // pred_check
      _
    $region75: #{tpu_custom_call.1} parent=1 // pred_check_branch
      %67 = sbr.rel (0) target = $region77
    $region76: #{tpu_custom_call.1} parent=1 // pred_region
      _
    $region77: #{tpu_custom_call.1} parent=1 // pred_fallthru
      _
    // Predicated region
    $region78: #{tpu_custom_call.1} parent=1 // pred_check
      _
    $region79: #{tpu_custom_call.1} parent=1 // pred_check_branch
      %69 = sbr.rel (0) target = $region81
    $region80: #{tpu_custom_call.1} parent=1 // pred_region
      _
    $region81: #{tpu_custom_call.1} parent=1 // pred_fallthru
      _
    // Predicated region
    $region82: #{tpu_custom_call.1} parent=1 // pred_check
      _
    $region83: #{tpu_custom_call.1} parent=1 // pred_check_branch
      %71 = sbr.rel (0) target = $region85
    $region84: #{tpu_custom_call.1} parent=1 // pred_region
      _
    $region85: #{tpu_custom_call.1} parent=1 // pred_fallthru
      _
    // Predicated region
    $region86: #{tpu_custom_call.1} parent=1 // pred_check
      _
    $region87: #{tpu_custom_call.1} parent=1 // pred_check_branch
      %73 = sbr.rel (0) target = $region89
    $region88: #{tpu_custom_call.1} parent=1 // pred_region
      _
    $region89: #{tpu_custom_call.1} parent=1 // pred_fallthru
      _
    // Predicated region
    $region90: #{tpu_custom_call.1} parent=1 // pred_check
      _
    $region91: #{tpu_custom_call.1} parent=1 // pred_check_branch
      %75 = sbr.rel (0) target = $region93
    $region92: #{tpu_custom_call.1} parent=1 // pred_region
      _
    $region93: #{tpu_custom_call.1} parent=1 // pred_fallthru
      _
    // Predicated region
    $region94: #{tpu_custom_call.1} parent=1 // pred_check
      _
    $region95: #{tpu_custom_call.1} parent=1 // pred_check_branch
      %77 = sbr.rel (0) target = $region97
    $region96: #{tpu_custom_call.1} parent=1 // pred_region
      _
    $region97: #{tpu_custom_call.1} parent=1 // pred_fallthru
      _
    %v79 = vlaneseq
    %v80 = vand.u32 %v79, 127
    %vm81 = vcmp.lt.s32.totalorder %v80, 32
    %v82 = vsel %vm81, 1, 0
    %v83 = vcvt.s32.f32 %v82
    %v84 = vld [vmem:[%s0] sm:$0xff]
    %v85 = vld [vmem:[%s0 + $0x8] sm:$0xff]
    %v86 = vld [vmem:[%s1] sm:$0xff]
    %v87 = vld [vmem:[%s1 + $0x8] sm:$0xff]
    %v88 = vpack.c.bf16 %v87, %v86
    %v89 = vld [vmem:[%s2] sm:$0xff]
    %v90 = vld [vmem:[%s2 + $0x8] sm:$0xff]
    %v91 = vld [vmem:[%s3] sm:$0xff]
    %v92 = vld [vmem:[%s3 + $0x8] sm:$0xff]
    %v93 = vpack.c.bf16 %v85, %v84
    %v94 = vld [vmem:[%s4] sm:$0xf]
    %v95 = vld [vmem:[%s4 + $0x4] sm:$0xf]
    %v96 = vld [vmem:[%s4 + $0x8] sm:$0xf]
    %v97 = vld [vmem:[%s4 + $0xc] sm:$0xf]
    %v98 = vld [vmem:[%s4 + $0x10] sm:$0xf]
    %v99 = vld [vmem:[%s4 + $0x14] sm:$0xf]
    %v100 = vld [vmem:[%s4 + $0x18] sm:$0xf]
    %v101 = vld [vmem:[%s4 + $0x1c] sm:$0xf]
    %v102 = vld [vmem:[%s4 + $0x20] sm:$0xf]
    %v103 = vld [vmem:[%s4 + $0x24] sm:$0xf]
    %v104 = vld [vmem:[%s4 + $0x28] sm:$0xf]
    %v105 = vld [vmem:[%s4 + $0x2c] sm:$0xf]
    %v106 = vld [vmem:[%s4 + $0x30] sm:$0xf]
    %v107 = vld [vmem:[%s4 + $0x34] sm:$0xf]
    %v108 = vld [vmem:[%s4 + $0x38] sm:$0xf]
    %v109 = vld [vmem:[%s4 + $0x3c] sm:$0xf]
    %v110 = vld [vmem:[%s5] sm:$0x1]
    %v112 = vperm.slane %v110, 0
    %v130 = vunpack.c.l.b16 %v94
    %v131 = vunpack.c.l.b16 %v95
    %v132 = vunpack.c.l.b16 %v96
    %v133 = vunpack.c.l.b16 %v97
    %v134 = vunpack.c.l.b16 %v98
    %v135 = vunpack.c.l.b16 %v99
    %v136 = vunpack.c.l.b16 %v100
    %v137 = vunpack.c.l.b16 %v101
    %v138 = vunpack.c.l.b16 %v102
    %v139 = vunpack.c.l.b16 %v103
    %v140 = vunpack.c.l.b16 %v104
    %v141 = vunpack.c.l.b16 %v105
    %v142 = vunpack.c.l.b16 %v106
    %v143 = vunpack.c.l.b16 %v107
    %v144 = vunpack.c.l.b16 %v108
    %v145 = vunpack.c.l.b16 %v109
    %v146 = vpack.c.b16 %v131, %v130
    %v147 = vpack.c.b16 %v133, %v132
    %v148 = vpack.c.b16 %v135, %v134
    %v149 = vpack.c.b16 %v137, %v136
    %v150 = vpack.c.b16 %v139, %v138
    %v151 = vpack.c.b16 %v141, %v140
    %v152 = vpack.c.b16 %v143, %v142
    %v153 = vpack.c.b16 %v145, %v144
    %162 = vmatpush.bf16.msra.mxu0 %v153
    %163 = vmatpush.bf16.msra.mxu0 %v152
    %164 = vmatpush.bf16.msra.mxu0 %v151
    %165 = vmatpush.bf16.msra.mxu0 %v150
    %166 = vmatpush.bf16.msra.mxu0 %v149
    %167 = vmatpush.bf16.msra.mxu0 %v148
    %168 = vmatpush.bf16.msra.mxu0 %v147
    %169 = vmatpush.bf16.msra.mxu0 %v146
    %170 = vmatmul.bf16.gmra.mxu0 %v93
    %v171 = vpop.f32.mrf.mxu0
    %v172 = vadd.f32 %v112, %v171
    %v173 = vpop.f32.mrf.mxu0
    %v174 = vadd.f32 %v112, %v173
    %175 = vdwg.mxu0
    %v176 = vpack.c.bf16 %v172, %v172
    %v177 = vpack.c.bf16 %v174, %v174
    %v178 = vld [vmem:[%s6] sm:$0xf]
    %v179 = vld [vmem:[%s6 + $0x4] sm:$0xf]
    %v180 = vld [vmem:[%s6 + $0x8] sm:$0xf]
    %v181 = vld [vmem:[%s6 + $0xc] sm:$0xf]
    %v182 = vld [vmem:[%s7] sm:$0x1]
    %v184 = vunpack.c.l.b16 %v176
    %v185 = vpack.c.b16 %v184, %v184
    %186 = vrot.lane.b32.xlu0 %v185, 96
    %v187 = vpop.permute.xlu0 %186
    %vm188 = vcmask 64512
    %v190 = vsel %vm188, %v176, 0
    %v193 = vsel %vm188, %v187, 0
    %195 = vmatpush.bf16.xpose.msra.mxu0 0
    %196 = vmatpush.bf16.xpose.msra.mxu0 0
    %197 = vmatpush.bf16.xpose.msra.mxu0 0
    %198 = vmatpush.bf16.xpose.msra.mxu0 0
    %199 = vmatpush.bf16.xpose.msra.mxu0 0
    %200 = vmatpush.bf16.xpose.msra.mxu0 0
    %201 = vmatpush.bf16.xpose.msra.mxu0 0
    %202 = vmatpush.bf16.xpose.msra.mxu0 %v193
    %203 = vmatmul.bf16.gmra.mxu0 %v190
    %v204 = vpop.f32.mrf.mxu0
    %v205 = vadd.f32 %v89, %v204
    %v206 = vpop.f32.mrf.mxu0
    %207 = vdwg.mxu0
    %v209 = vunpack.c.l.b16 %v177
    %v210 = vpack.c.b16 %v209, %v209
    %211 = vrot.lane.b32.xlu0 %v210, 96
    %v212 = vpop.permute.xlu0 %211
    %v214 = vsel %vm188, %v177, 0
    %v217 = vsel %vm188, %v212, 0
    %219 = vmatpush.bf16.xpose.msra.mxu0 0
    %220 = vmatpush.bf16.xpose.msra.mxu0 0
    %221 = vmatpush.bf16.xpose.msra.mxu0 0
    %222 = vmatpush.bf16.xpose.msra.mxu0 0
    %223 = vmatpush.bf16.xpose.msra.mxu0 0
    %224 = vmatpush.bf16.xpose.msra.mxu0 0
    %225 = vmatpush.bf16.xpose.msra.mxu0 0
    %226 = vmatpush.bf16.xpose.msra.mxu0 %v217
    %227 = vmatmul.bf16.gmra.mxu0 %v214
    %v228 = vpop.f32.mrf.mxu0
    %v229 = vadd.f32 %v90, %v228
    %v230 = vpop.f32.mrf.mxu0
    %231 = vdwg.mxu0
    %v232 = vsel %vm188, %v205, -inf
    %233 = vmax.xlane.f32.xlu0 %v232
    %v234 = vpop.xlane.xlu0 %233
    %v235 = vsel %vm188, %v229, -inf
    %236 = vmax.xlane.f32.xlu0 %v235
    %v237 = vpop.xlane.xlu0 %236
    %v238 = vsub.f32 %v205, %v234
    %v239 = vsub.f32 %v229, %v237
    %v240 = vmul.f32 %v238, 1.442695
    %v241 = vpow.pop %v240
    %v242 = vmul.f32 %v239, 1.442695
    %v243 = vpow.pop %v242
    %v244 = vsel %vm188, %v241, 0.0
    %245 = vadd.xlane.f32.xlu0 %v244
    %v246 = vpop.xlane.xlu0 %245
    %v247 = vsel %vm188, %v243, 0.0
    %248 = vadd.xlane.f32.xlu0 %v247
    %v249 = vpop.xlane.xlu0 %248
    %v250 = vrcp.pop %v246
    %v251 = vrcp.pop %v249
    %v252 = vmul.f32 %v241, %v250
    %v253 = vmul.f32 %v243, %v251
    %v254 = vpack.c.bf16 %v252, %v252
    %v255 = vpack.c.bf16 %v253, %v253
    %256 = vrot.lane.b32.xlu0 %v185, 64
    %v257 = vpop.permute.xlu0 %256
    %v259 = vsel %vm188, %v254, 0
    %vm261 = vcmask 1043456
    %v263 = vsel %vm261, %v257, 0
    %265 = vmatpush.bf16.msra.mxu0 0
    %266 = vmatpush.bf16.msra.mxu0 0
    %267 = vmatpush.bf16.msra.mxu0 0
    %268 = vmatpush.bf16.msra.mxu0 0
    %269 = vmatpush.bf16.msra.mxu0 0
    %270 = vmatpush.bf16.msra.mxu0 0
    %271 = vmatpush.bf16.msra.mxu0 0
    %272 = vmatpush.bf16.msra.mxu0 %v263
    %273 = vmatmul.bf16.gmra.mxu0 %v259
    %v274 = vpop.f32.mrf.mxu0
    %v275 = vadd.f32 0.0, %v274
    %v276 = vpop.f32.mrf.mxu0
    %277 = vdwg.mxu0
    %278 = vrot.lane.b32.xlu0 %v210, 64
    %v279 = vpop.permute.xlu0 %278
    %v281 = vsel %vm188, %v255, 0
    %v284 = vsel %vm261, %v279, 0
    %286 = vmatpush.bf16.msra.mxu0 0
    %287 = vmatpush.bf16.msra.mxu0 0
    %288 = vmatpush.bf16.msra.mxu0 0
    %289 = vmatpush.bf16.msra.mxu0 0
    %290 = vmatpush.bf16.msra.mxu0 0
    %291 = vmatpush.bf16.msra.mxu0 0
    %292 = vmatpush.bf16.msra.mxu0 0
    %293 = vmatpush.bf16.msra.mxu0 %v284
    %294 = vmatmul.bf16.gmra.mxu0 %v281
    %v295 = vpop.f32.mrf.mxu0
    %v296 = vadd.f32 0.0, %v295
    %v297 = vpop.f32.mrf.mxu0
    %298 = vdwg.mxu0
    %v299 = vpack.c.bf16 %v296, %v275
    %300 = vrot.lane.b32.xlu0 %v185, 120
    %v301 = vpop.permute.xlu0 %300
    %302 = vrot.lane.b32.xlu0 %v185, 88
    %v303 = vpop.permute.xlu0 %302
    %v305 = vsel %vm188, %v301, 0
    %v308 = vsel %vm188, %v303, 0
    %310 = vmatpush.bf16.xpose.msra.mxu0 0
    %311 = vmatpush.bf16.xpose.msra.mxu0 0
    %312 = vmatpush.bf16.xpose.msra.mxu0 0
    %313 = vmatpush.bf16.xpose.msra.mxu0 0
    %314 = vmatpush.bf16.xpose.msra.mxu0 0
    %315 = vmatpush.bf16.xpose.msra.mxu0 0
    %316 = vmatpush.bf16.xpose.msra.mxu0 0
    %317 = vmatpush.bf16.xpose.msra.mxu0 %v308
    %318 = vmatmul.bf16.gmra.mxu0 %v305
    %v319 = vpop.f32.mrf.mxu0
    %v320 = vadd.f32 %v89, %v319
    %v321 = vpop.f32.mrf.mxu0
    %322 = vdwg.mxu0
    %323 = vrot.lane.b32.xlu0 %v210, 120
    %v324 = vpop.permute.xlu0 %323
    %325 = vrot.lane.b32.xlu0 %v210, 88
    %v326 = vpop.permute.xlu0 %325
    %v328 = vsel %vm188, %v324, 0
    %v331 = vsel %vm188, %v326, 0
    %333 = vmatpush.bf16.xpose.msra.mxu0 0
    %334 = vmatpush.bf16.xpose.msra.mxu0 0
    %335 = vmatpush.bf16.xpose.msra.mxu0 0
    %336 = vmatpush.bf16.xpose.msra.mxu0 0
    %337 = vmatpush.bf16.xpose.msra.mxu0 0
    %338 = vmatpush.bf16.xpose.msra.mxu0 0
    %339 = vmatpush.bf16.xpose.msra.mxu0 0
    %340 = vmatpush.bf16.xpose.msra.mxu0 %v331
    %341 = vmatmul.bf16.gmra.mxu0 %v328
    %v342 = vpop.f32.mrf.mxu0
    %v343 = vadd.f32 %v90, %v342
    %v344 = vpop.f32.mrf.mxu0
    %345 = vdwg.mxu0
    %v346 = vsel %vm188, %v320, -inf
    %347 = vmax.xlane.f32.xlu0 %v346
    %v348 = vpop.xlane.xlu0 %347
    %v349 = vsel %vm188, %v343, -inf
    %350 = vmax.xlane.f32.xlu0 %v349
    %v351 = vpop.xlane.xlu0 %350
    %v352 = vsub.f32 %v320, %v348
    %v353 = vsub.f32 %v343, %v351
    %v354 = vmul.f32 %v352, 1.442695
    %v355 = vpow.pop %v354
    %v356 = vmul.f32 %v353, 1.442695
    %v357 = vpow.pop %v356
    %v358 = vsel %vm188, %v355, 0.0
    %359 = vadd.xlane.f32.xlu0 %v358
    %v360 = vpop.xlane.xlu0 %359
    %v361 = vsel %vm188, %v357, 0.0
    %362 = vadd.xlane.f32.xlu0 %v361
    %v363 = vpop.xlane.xlu0 %362
    %v364 = vrcp.pop %v360
    %v365 = vrcp.pop %v363
    %v366 = vmul.f32 %v355, %v364
    %v367 = vmul.f32 %v357, %v365
    %v368 = vpack.c.bf16 %v366, %v366
    %v369 = vpack.c.bf16 %v367, %v367
    %370 = vrot.lane.b32.xlu0 %v185, 56
    %v371 = vpop.permute.xlu0 %370
    %v373 = vsel %vm188, %v368, 0
    %v376 = vsel %vm261, %v371, 0
    %378 = vmatpush.bf16.msra.mxu0 0
    %379 = vmatpush.bf16.msra.mxu0 0
    %380 = vmatpush.bf16.msra.mxu0 0
    %381 = vmatpush.bf16.msra.mxu0 0
    %382 = vmatpush.bf16.msra.mxu0 0
    %383 = vmatpush.bf16.msra.mxu0 0
    %384 = vmatpush.bf16.msra.mxu0 0
    %385 = vmatpush.bf16.msra.mxu0 %v376
    %386 = vmatmul.bf16.gmra.mxu0 %v373
    %v387 = vpop.f32.mrf.mxu0
    %v388 = vadd.f32 0.0, %v387
    %v389 = vpop.f32.mrf.mxu0
    %390 = vdwg.mxu0
    %391 = vrot.lane.b32.xlu0 %v210, 56
    %v392 = vpop.permute.xlu0 %391
    %v394 = vsel %vm188, %v369, 0
    %v397 = vsel %vm261, %v392, 0
    %399 = vmatpush.bf16.msra.mxu0 0
    %400 = vmatpush.bf16.msra.mxu0 0
    %401 = vmatpush.bf16.msra.mxu0 0
    %402 = vmatpush.bf16.msra.mxu0 0
    %403 = vmatpush.bf16.msra.mxu0 0
    %404 = vmatpush.bf16.msra.mxu0 0
    %405 = vmatpush.bf16.msra.mxu0 0
    %406 = vmatpush.bf16.msra.mxu0 %v397
    %407 = vmatmul.bf16.gmra.mxu0 %v394
    %v408 = vpop.f32.mrf.mxu0
    %v409 = vadd.f32 0.0, %v408
    %v410 = vpop.f32.mrf.mxu0
    %411 = vdwg.mxu0
    %v412 = vpack.c.bf16 %v409, %v388
    %v414 = vsel %vm188, %v412, 0
    %v417 = vsel %vm261, %v179, 0
    %419 = vmatpush.bf16.msra.mxu0 0
    %420 = vmatpush.bf16.msra.mxu0 0
    %421 = vmatpush.bf16.msra.mxu0 0
    %422 = vmatpush.bf16.msra.mxu0 0
    %423 = vmatpush.bf16.msra.mxu0 0
    %424 = vmatpush.bf16.msra.mxu0 0
    %425 = vmatpush.bf16.msra.mxu0 0
    %426 = vmatpush.bf16.msra.mxu0 %v417
    %427 = vmatmul.bf16.gmra.mxu0 %v414
    %v428 = vpop.f32.mrf.mxu0
    %v429 = vadd.f32 0.0, %v428
    %v430 = vpop.f32.mrf.mxu0
    %v431 = vadd.f32 0.0, %v430
    %432 = vdwg.mxu0
    %v434 = vsel %vm188, %v299, 0
    %v437 = vsel %vm261, %v178, 0
    %439 = vmatpush.bf16.msra.mxu0 0
    %440 = vmatpush.bf16.msra.mxu0 0
    %441 = vmatpush.bf16.msra.mxu0 0
    %442 = vmatpush.bf16.msra.mxu0 0
    %443 = vmatpush.bf16.msra.mxu0 0
    %444 = vmatpush.bf16.msra.mxu0 0
    %445 = vmatpush.bf16.msra.mxu0 0
    %446 = vmatpush.bf16.msra.mxu0 %v437
    %447 = vmatmul.bf16.gmra.mxu0 %v434
    %v448 = vpop.f32.mrf.mxu0
    %v449 = vadd.f32 %v429, %v448
    %v450 = vpop.f32.mrf.mxu0
    %v451 = vadd.f32 %v431, %v450
    %452 = vdwg.mxu0
    %453 = vrot.lane.b32.xlu0 %v185, 112
    %v454 = vpop.permute.xlu0 %453
    %455 = vrot.lane.b32.xlu0 %v185, 80
    %v456 = vpop.permute.xlu0 %455
    %v458 = vsel %vm188, %v454, 0
    %v461 = vsel %vm188, %v456, 0
    %463 = vmatpush.bf16.xpose.msra.mxu0 0
    %464 = vmatpush.bf16.xpose.msra.mxu0 0
    %465 = vmatpush.bf16.xpose.msra.mxu0 0
    %466 = vmatpush.bf16.xpose.msra.mxu0 0
    %467 = vmatpush.bf16.xpose.msra.mxu0 0
    %468 = vmatpush.bf16.xpose.msra.mxu0 0
    %469 = vmatpush.bf16.xpose.msra.mxu0 0
    %470 = vmatpush.bf16.xpose.msra.mxu0 %v461
    %471 = vmatmul.bf16.gmra.mxu0 %v458
    %v472 = vpop.f32.mrf.mxu0
    %v473 = vadd.f32 %v89, %v472
    %v474 = vpop.f32.mrf.mxu0
    %475 = vdwg.mxu0
    %476 = vrot.lane.b32.xlu0 %v210, 112
    %v477 = vpop.permute.xlu0 %476
    %478 = vrot.lane.b32.xlu0 %v210, 80
    %v479 = vpop.permute.xlu0 %478
    %v481 = vsel %vm188, %v477, 0
    %v484 = vsel %vm188, %v479, 0
    %486 = vmatpush.bf16.xpose.msra.mxu0 0
    %487 = vmatpush.bf16.xpose.msra.mxu0 0
    %488 = vmatpush.bf16.xpose.msra.mxu0 0
    %489 = vmatpush.bf16.xpose.msra.mxu0 0
    %490 = vmatpush.bf16.xpose.msra.mxu0 0
    %491 = vmatpush.bf16.xpose.msra.mxu0 0
    %492 = vmatpush.bf16.xpose.msra.mxu0 0
    %493 = vmatpush.bf16.xpose.msra.mxu0 %v484
    %494 = vmatmul.bf16.gmra.mxu0 %v481
    %v495 = vpop.f32.mrf.mxu0
    %v496 = vadd.f32 %v90, %v495
    %v497 = vpop.f32.mrf.mxu0
    %498 = vdwg.mxu0
    %v499 = vsel %vm188, %v473, -inf
    %500 = vmax.xlane.f32.xlu0 %v499
    %v501 = vpop.xlane.xlu0 %500
    %v502 = vsel %vm188, %v496, -inf
    %503 = vmax.xlane.f32.xlu0 %v502
    %v504 = vpop.xlane.xlu0 %503
    %v505 = vsub.f32 %v473, %v501
    %v506 = vsub.f32 %v496, %v504
    %v507 = vmul.f32 %v505, 1.442695
    %v508 = vpow.pop %v507
    %v509 = vmul.f32 %v506, 1.442695
    %v510 = vpow.pop %v509
    %v511 = vsel %vm188, %v508, 0.0
    %512 = vadd.xlane.f32.xlu0 %v511
    %v513 = vpop.xlane.xlu0 %512
    %v514 = vsel %vm188, %v510, 0.0
    %515 = vadd.xlane.f32.xlu0 %v514
    %v516 = vpop.xlane.xlu0 %515
    %v517 = vrcp.pop %v513
    %v518 = vrcp.pop %v516
    %v519 = vmul.f32 %v508, %v517
    %v520 = vmul.f32 %v510, %v518
    %v521 = vpack.c.bf16 %v519, %v519
    %v522 = vpack.c.bf16 %v520, %v520
    %523 = vrot.lane.b32.xlu0 %v185, 48
    %v524 = vpop.permute.xlu0 %523
    %v526 = vsel %vm188, %v521, 0
    %v529 = vsel %vm261, %v524, 0
    %531 = vmatpush.bf16.msra.mxu0 0
    %532 = vmatpush.bf16.msra.mxu0 0
    %533 = vmatpush.bf16.msra.mxu0 0
    %534 = vmatpush.bf16.msra.mxu0 0
    %535 = vmatpush.bf16.msra.mxu0 0
    %536 = vmatpush.bf16.msra.mxu0 0
    %537 = vmatpush.bf16.msra.mxu0 0
    %538 = vmatpush.bf16.msra.mxu0 %v529
    %539 = vmatmul.bf16.gmra.mxu0 %v526
    %v540 = vpop.f32.mrf.mxu0
    %v541 = vadd.f32 0.0, %v540
    %v542 = vpop.f32.mrf.mxu0
    %543 = vdwg.mxu0
    %544 = vrot.lane.b32.xlu0 %v210, 48
    %v545 = vpop.permute.xlu0 %544
    %v547 = vsel %vm188, %v522, 0
    %v550 = vsel %vm261, %v545, 0
    %552 = vmatpush.bf16.msra.mxu0 0
    %553 = vmatpush.bf16.msra.mxu0 0
    %554 = vmatpush.bf16.msra.mxu0 0
    %555 = vmatpush.bf16.msra.mxu0 0
    %556 = vmatpush.bf16.msra.mxu0 0
    %557 = vmatpush.bf16.msra.mxu0 0
    %558 = vmatpush.bf16.msra.mxu0 0
    %559 = vmatpush.bf16.msra.mxu0 %v550
    %560 = vmatmul.bf16.gmra.mxu0 %v547
    %v561 = vpop.f32.mrf.mxu0
    %v562 = vadd.f32 0.0, %v561
    %v563 = vpop.f32.mrf.mxu0
    %564 = vdwg.mxu0
    %v565 = vpack.c.bf16 %v562, %v541
    %v567 = vsel %vm188, %v565, 0
    %v570 = vsel %vm261, %v180, 0
    %572 = vmatpush.bf16.msra.mxu0 0
    %573 = vmatpush.bf16.msra.mxu0 0
    %574 = vmatpush.bf16.msra.mxu0 0
    %575 = vmatpush.bf16.msra.mxu0 0
    %576 = vmatpush.bf16.msra.mxu0 0
    %577 = vmatpush.bf16.msra.mxu0 0
    %578 = vmatpush.bf16.msra.mxu0 0
    %579 = vmatpush.bf16.msra.mxu0 %v570
    %580 = vmatmul.bf16.gmra.mxu0 %v567
    %v581 = vpop.f32.mrf.mxu0
    %v582 = vadd.f32 0.0, %v581
    %v583 = vpop.f32.mrf.mxu0
    %v584 = vadd.f32 0.0, %v583
    %585 = vdwg.mxu0
    %v586 = vadd.f32 %v449, %v582
    %v587 = vadd.f32 %v451, %v584
    %588 = vrot.lane.b32.xlu0 %v185, 104
    %v589 = vpop.permute.xlu0 %588
    %590 = vrot.lane.b32.xlu0 %v185, 72
    %v591 = vpop.permute.xlu0 %590
    %v593 = vsel %vm188, %v589, 0
    %v596 = vsel %vm188, %v591, 0
    %598 = vmatpush.bf16.xpose.msra.mxu0 0
    %599 = vmatpush.bf16.xpose.msra.mxu0 0
    %600 = vmatpush.bf16.xpose.msra.mxu0 0
    %601 = vmatpush.bf16.xpose.msra.mxu0 0
    %602 = vmatpush.bf16.xpose.msra.mxu0 0
    %603 = vmatpush.bf16.xpose.msra.mxu0 0
    %604 = vmatpush.bf16.xpose.msra.mxu0 0
    %605 = vmatpush.bf16.xpose.msra.mxu0 %v596
    %606 = vmatmul.bf16.gmra.mxu0 %v593
    %v607 = vpop.f32.mrf.mxu0
    %v608 = vadd.f32 %v89, %v607
    %v609 = vpop.f32.mrf.mxu0
    %610 = vdwg.mxu0
    %611 = vrot.lane.b32.xlu0 %v210, 104
    %v612 = vpop.permute.xlu0 %611
    %613 = vrot.lane.b32.xlu0 %v210, 72
    %v614 = vpop.permute.xlu0 %613
    %v616 = vsel %vm188, %v612, 0
    %v619 = vsel %vm188, %v614, 0
    %621 = vmatpush.bf16.xpose.msra.mxu0 0
    %622 = vmatpush.bf16.xpose.msra.mxu0 0
    %623 = vmatpush.bf16.xpose.msra.mxu0 0
    %624 = vmatpush.bf16.xpose.msra.mxu0 0
    %625 = vmatpush.bf16.xpose.msra.mxu0 0
    %626 = vmatpush.bf16.xpose.msra.mxu0 0
    %627 = vmatpush.bf16.xpose.msra.mxu0 0
    %628 = vmatpush.bf16.xpose.msra.mxu0 %v619
    %629 = vmatmul.bf16.gmra.mxu0 %v616
    %v630 = vpop.f32.mrf.mxu0
    %v631 = vadd.f32 %v90, %v630
    %v632 = vpop.f32.mrf.mxu0
    %633 = vdwg.mxu0
    %v634 = vsel %vm188, %v608, -inf
    %635 = vmax.xlane.f32.xlu0 %v634
    %v636 = vpop.xlane.xlu0 %635
    %v637 = vsel %vm188, %v631, -inf
    %638 = vmax.xlane.f32.xlu0 %v637
    %v639 = vpop.xlane.xlu0 %638
    %v640 = vsub.f32 %v608, %v636
    %v641 = vsub.f32 %v631, %v639
    %v642 = vmul.f32 %v640, 1.442695
    %v643 = vpow.pop %v642
    %v644 = vmul.f32 %v641, 1.442695
    %v645 = vpow.pop %v644
    %v646 = vsel %vm188, %v643, 0.0
    %647 = vadd.xlane.f32.xlu0 %v646
    %v648 = vpop.xlane.xlu0 %647
    %v649 = vsel %vm188, %v645, 0.0
    %650 = vadd.xlane.f32.xlu0 %v649
    %v651 = vpop.xlane.xlu0 %650
    %v652 = vrcp.pop %v648
    %v653 = vrcp.pop %v651
    %v654 = vmul.f32 %v643, %v652
    %v655 = vmul.f32 %v645, %v653
    %v656 = vpack.c.bf16 %v654, %v654
    %v657 = vpack.c.bf16 %v655, %v655
    %658 = vrot.lane.b32.xlu0 %v185, 40
    %v659 = vpop.permute.xlu0 %658
    %v661 = vsel %vm188, %v656, 0
    %v664 = vsel %vm261, %v659, 0
    %666 = vmatpush.bf16.msra.mxu0 0
    %667 = vmatpush.bf16.msra.mxu0 0
    %668 = vmatpush.bf16.msra.mxu0 0
    %669 = vmatpush.bf16.msra.mxu0 0
    %670 = vmatpush.bf16.msra.mxu0 0
    %671 = vmatpush.bf16.msra.mxu0 0
    %672 = vmatpush.bf16.msra.mxu0 0
    %673 = vmatpush.bf16.msra.mxu0 %v664
    %674 = vmatmul.bf16.gmra.mxu0 %v661
    %v675 = vpop.f32.mrf.mxu0
    %v676 = vadd.f32 0.0, %v675
    %v677 = vpop.f32.mrf.mxu0
    %678 = vdwg.mxu0
    %679 = vrot.lane.b32.xlu0 %v210, 40
    %v680 = vpop.permute.xlu0 %679
    %v682 = vsel %vm188, %v657, 0
    %v685 = vsel %vm261, %v680, 0
    %687 = vmatpush.bf16.msra.mxu0 0
    %688 = vmatpush.bf16.msra.mxu0 0
    %689 = vmatpush.bf16.msra.mxu0 0
    %690 = vmatpush.bf16.msra.mxu0 0
    %691 = vmatpush.bf16.msra.mxu0 0
    %692 = vmatpush.bf16.msra.mxu0 0
    %693 = vmatpush.bf16.msra.mxu0 0
    %694 = vmatpush.bf16.msra.mxu0 %v685
    %695 = vmatmul.bf16.gmra.mxu0 %v682
    %v696 = vpop.f32.mrf.mxu0
    %v697 = vadd.f32 0.0, %v696
    %v698 = vpop.f32.mrf.mxu0
    %699 = vdwg.mxu0
    %v700 = vpack.c.bf16 %v697, %v676
    %v702 = vsel %vm188, %v700, 0
    %v705 = vsel %vm261, %v181, 0
    %707 = vmatpush.bf16.msra.mxu0 0
    %708 = vmatpush.bf16.msra.mxu0 0
    %709 = vmatpush.bf16.msra.mxu0 0
    %710 = vmatpush.bf16.msra.mxu0 0
    %711 = vmatpush.bf16.msra.mxu0 0
    %712 = vmatpush.bf16.msra.mxu0 0
    %713 = vmatpush.bf16.msra.mxu0 0
    %714 = vmatpush.bf16.msra.mxu0 %v705
    %715 = vmatmul.bf16.gmra.mxu0 %v702
    %v716 = vpop.f32.mrf.mxu0
    %v717 = vadd.f32 0.0, %v716
    %v718 = vpop.f32.mrf.mxu0
    %v719 = vadd.f32 0.0, %v718
    %720 = vdwg.mxu0
    %v721 = vadd.f32 %v586, %v717
    %v722 = vadd.f32 %v587, %v719
    %v724 = vperm.slane %v182, 0
    %v726 = vadd.f32 %v721, %v724
    %v727 = vadd.f32 %v722, %v724
    %v728 = vadd.f32 %v84, %v726
    %v729 = vadd.f32 %v85, %v727
    %v730 = vld [vmem:[%s8] sm:$0x1]
    %v731 = vld [vmem:[%s9] sm:$0x1]
    %v732 = vmul.f32 %v728, %v83
    %v733 = vmul.f32 %v729, %v83
    %734 = vadd.xlane.f32.xlu0 %v732
    %v735 = vpop.xlane.xlu0 %734
    %736 = vadd.xlane.f32.xlu0 %v733
    %v737 = vpop.xlane.xlu0 %736
    %v738 = vmul.f32 %v735, 0.03125
    %v739 = vmul.f32 %v737, 0.03125
    %v740 = vsub.f32 %v732, %v738
    %v741 = vsub.f32 %v733, %v739
    %v742 = vmul.f32 %v740, %v83
    %v743 = vmul.f32 %v741, %v83
    %v744 = vmul.f32 %v742, %v742
    %v745 = vmul.f32 %v743, %v743
    %746 = vadd.xlane.f32.xlu0 %v744
    %v747 = vpop.xlane.xlu0 %746
    %748 = vadd.xlane.f32.xlu0 %v745
    %v749 = vpop.xlane.xlu0 %748
    %v750 = vmul.f32 %v747, 0.03125
    %v751 = vmul.f32 %v749, 0.03125
    %v752 = vadd.f32 %v750, 1e-05
    %v753 = vadd.f32 %v751, 1e-05
    %v754 = vrsqrt.pop %v752
    %v755 = vmul.f32 %v754, %v752
    %v756 = vmul.f32 %v755, %v754
    %v757 = vmul.f32 0.5, %v756
    %v758 = vsub.f32 1.5, %v757
    %v759 = vmul.f32 %v754, %v758
    %vm760 = vweird.f32 %v752
    %vm761 = vweird.f32 %v754
    %vm762 = vmor %vm760, %vm761
    %v763 = vsel %vm762, %v754, %v759
    %v764 = vrsqrt.pop %v753
    %v765 = vmul.f32 %v764, %v753
    %v766 = vmul.f32 %v765, %v764
    %v767 = vmul.f32 0.5, %v766
    %v768 = vsub.f32 1.5, %v767
    %v769 = vmul.f32 %v764, %v768
    %vm770 = vweird.f32 %v753
    %vm771 = vweird.f32 %v764
    %vm772 = vmor %vm770, %vm771
    %v773 = vsel %vm772, %v764, %v769
    %v774 = vmul.f32 %v742, %v763
    %v775 = vmul.f32 %v743, %v773
    %v777 = vperm.slane %v730, 0
    %v779 = vmul.f32 %v774, %v777
    %v780 = vmul.f32 %v775, %v777
    %v782 = vperm.slane %v731, 0
    %v784 = vadd.f32 %v779, %v782
    %v785 = vadd.f32 %v780, %v782
    %v786 = vpack.c.bf16 %v785, %v784
    %v787 = vld [vmem:[%s10] sm:$0xf]
    %v788 = vld [vmem:[%s10 + $0x4] sm:$0xf]
    %v789 = vld [vmem:[%s10 + $0x8] sm:$0xf]
    %v790 = vld [vmem:[%s10 + $0xc] sm:$0xf]
    %v791 = vld [vmem:[%s10 + $0x10] sm:$0xf]
    %v792 = vld [vmem:[%s10 + $0x14] sm:$0xf]
    %v793 = vld [vmem:[%s10 + $0x18] sm:$0xf]
    %v794 = vld [vmem:[%s10 + $0x1c] sm:$0xf]
    %v795 = vld [vmem:[%s10 + $0x20] sm:$0xf]
    %v796 = vld [vmem:[%s10 + $0x24] sm:$0xf]
    %v797 = vld [vmem:[%s10 + $0x28] sm:$0xf]
    %v798 = vld [vmem:[%s10 + $0x2c] sm:$0xf]
    %v799 = vld [vmem:[%s10 + $0x30] sm:$0xf]
    %v800 = vld [vmem:[%s10 + $0x34] sm:$0xf]
    %v801 = vld [vmem:[%s10 + $0x38] sm:$0xf]
    %v802 = vld [vmem:[%s10 + $0x3c] sm:$0xf]
    %v803 = vld [vmem:[%s11] sm:$0x1]
    %v805 = vperm.slane %v803, 0
    %v823 = vunpack.c.l.b16 %v787
    %v824 = vunpack.c.l.b16 %v788
    %v825 = vunpack.c.l.b16 %v789
    %v826 = vunpack.c.l.b16 %v790
    %v827 = vunpack.c.l.b16 %v791
    %v828 = vunpack.c.l.b16 %v792
    %v829 = vunpack.c.l.b16 %v793
    %v830 = vunpack.c.l.b16 %v794
    %v831 = vunpack.c.l.b16 %v795
    %v832 = vunpack.c.l.b16 %v796
    %v833 = vunpack.c.l.b16 %v797
    %v834 = vunpack.c.l.b16 %v798
    %v835 = vunpack.c.l.b16 %v799
    %v836 = vunpack.c.l.b16 %v800
    %v837 = vunpack.c.l.b16 %v801
    %v838 = vunpack.c.l.b16 %v802
    %v839 = vpack.c.b16 %v824, %v823
    %v840 = vpack.c.b16 %v826, %v825
    %v841 = vpack.c.b16 %v828, %v827
    %v842 = vpack.c.b16 %v830, %v829
    %v843 = vpack.c.b16 %v832, %v831
    %v844 = vpack.c.b16 %v834, %v833
    %v845 = vpack.c.b16 %v836, %v835
    %v846 = vpack.c.b16 %v838, %v837
    %855 = vmatpush.bf16.msra.mxu0 %v846
    %856 = vmatpush.bf16.msra.mxu0 %v845
    %857 = vmatpush.bf16.msra.mxu0 %v844
    %858 = vmatpush.bf16.msra.mxu0 %v843
    %859 = vmatpush.bf16.msra.mxu0 %v842
    %860 = vmatpush.bf16.msra.mxu0 %v841
    %861 = vmatpush.bf16.msra.mxu0 %v840
    %862 = vmatpush.bf16.msra.mxu0 %v839
    %863 = vmatmul.bf16.gmra.mxu0 %v786
    %v864 = vpop.f32.mrf.mxu0
    %v865 = vadd.f32 %v805, %v864
    %v866 = vpop.f32.mrf.mxu0
    %v867 = vadd.f32 %v805, %v866
    %868 = vdwg.mxu0
    %v869 = vpack.c.bf16 %v865, %v865
    %v870 = vpack.c.bf16 %v867, %v867
    %v871 = vld [vmem:[%s12] sm:$0xf]
    %v872 = vld [vmem:[%s12 + $0x4] sm:$0xf]
    %v873 = vld [vmem:[%s12 + $0x8] sm:$0xf]
    %v874 = vld [vmem:[%s12 + $0xc] sm:$0xf]
    %v875 = vld [vmem:[%s12 + $0x10] sm:$0xf]
    %v876 = vld [vmem:[%s12 + $0x14] sm:$0xf]
    %v877 = vld [vmem:[%s12 + $0x18] sm:$0xf]
    %v878 = vld [vmem:[%s12 + $0x1c] sm:$0xf]
    %v879 = vld [vmem:[%s12 + $0x20] sm:$0xf]
    %v880 = vld [vmem:[%s12 + $0x24] sm:$0xf]
    %v881 = vld [vmem:[%s12 + $0x28] sm:$0xf]
    %v882 = vld [vmem:[%s12 + $0x2c] sm:$0xf]
    %v883 = vld [vmem:[%s12 + $0x30] sm:$0xf]
    %v884 = vld [vmem:[%s12 + $0x34] sm:$0xf]
    %v885 = vld [vmem:[%s12 + $0x38] sm:$0xf]
    %v886 = vld [vmem:[%s12 + $0x3c] sm:$0xf]
    %v887 = vld [vmem:[%s13] sm:$0x1]
    %v889 = vperm.slane %v887, 0
    %v907 = vunpack.c.l.b16 %v871
    %v908 = vunpack.c.l.b16 %v872
    %v909 = vunpack.c.l.b16 %v873
    %v910 = vunpack.c.l.b16 %v874
    %v911 = vunpack.c.l.b16 %v875
    %v912 = vunpack.c.l.b16 %v876
    %v913 = vunpack.c.l.b16 %v877
    %v914 = vunpack.c.l.b16 %v878
    %v915 = vunpack.c.l.b16 %v879
    %v916 = vunpack.c.l.b16 %v880
    %v917 = vunpack.c.l.b16 %v881
    %v918 = vunpack.c.l.b16 %v882
    %v919 = vunpack.c.l.b16 %v883
    %v920 = vunpack.c.l.b16 %v884
    %v921 = vunpack.c.l.b16 %v885
    %v922 = vunpack.c.l.b16 %v886
    %v923 = vpack.c.b16 %v908, %v907
    %v924 = vpack.c.b16 %v910, %v909
    %v925 = vpack.c.b16 %v912, %v911
    %v926 = vpack.c.b16 %v914, %v913
    %v927 = vpack.c.b16 %v916, %v915
    %v928 = vpack.c.b16 %v918, %v917
    %v929 = vpack.c.b16 %v920, %v919
    %v930 = vpack.c.b16 %v922, %v921
    %939 = vmatpush.bf16.msra.mxu0 %v930
    %940 = vmatpush.bf16.msra.mxu0 %v929
    %941 = vmatpush.bf16.msra.mxu0 %v928
    %942 = vmatpush.bf16.msra.mxu0 %v927
    %943 = vmatpush.bf16.msra.mxu0 %v926
    %944 = vmatpush.bf16.msra.mxu0 %v925
    %945 = vmatpush.bf16.msra.mxu0 %v924
    %946 = vmatpush.bf16.msra.mxu0 %v923
    %947 = vmatmul.bf16.gmra.mxu0 %v88
    %v948 = vpop.f32.mrf.mxu0
    %v949 = vadd.f32 %v889, %v948
    %v950 = vpop.f32.mrf.mxu0
    %v951 = vadd.f32 %v889, %v950
    %952 = vdwg.mxu0
    %v953 = vpack.c.bf16 %v949, %v949
    %v954 = vpack.c.bf16 %v951, %v951
    %v955 = vld [vmem:[%s14] sm:$0xf]
    %v956 = vld [vmem:[%s14 + $0x4] sm:$0xf]
    %v957 = vld [vmem:[%s14 + $0x8] sm:$0xf]
    %v958 = vld [vmem:[%s14 + $0xc] sm:$0xf]
    %v959 = vld [vmem:[%s15] sm:$0x1]
    %v961 = vsel %vm188, %v869, 0
    %v964 = vsel %vm188, %v953, 0
    %966 = vmatpush.bf16.xpose.msra.mxu0 0
    %967 = vmatpush.bf16.xpose.msra.mxu0 0
    %968 = vmatpush.bf16.xpose.msra.mxu0 0
    %969 = vmatpush.bf16.xpose.msra.mxu0 0
    %970 = vmatpush.bf16.xpose.msra.mxu0 0
    %971 = vmatpush.bf16.xpose.msra.mxu0 0
    %972 = vmatpush.bf16.xpose.msra.mxu0 0
    %973 = vmatpush.bf16.xpose.msra.mxu0 %v964
    %974 = vmatmul.bf16.gmra.mxu0 %v961
    %v975 = vpop.f32.mrf.mxu0
    %v976 = vadd.f32 %v91, %v975
    %v977 = vpop.f32.mrf.mxu0
    %978 = vdwg.mxu0
    %v980 = vsel %vm188, %v870, 0
    %v983 = vsel %vm188, %v954, 0
    %985 = vmatpush.bf16.xpose.msra.mxu0 0
    %986 = vmatpush.bf16.xpose.msra.mxu0 0
    %987 = vmatpush.bf16.xpose.msra.mxu0 0
    %988 = vmatpush.bf16.xpose.msra.mxu0 0
    %989 = vmatpush.bf16.xpose.msra.mxu0 0
    %990 = vmatpush.bf16.xpose.msra.mxu0 0
    %991 = vmatpush.bf16.xpose.msra.mxu0 0
    %992 = vmatpush.bf16.xpose.msra.mxu0 %v983
    %993 = vmatmul.bf16.gmra.mxu0 %v980
    %v994 = vpop.f32.mrf.mxu0
    %v995 = vadd.f32 %v92, %v994
    %v996 = vpop.f32.mrf.mxu0
    %997 = vdwg.mxu0
    %v998 = vsel %vm188, %v976, -inf
    %999 = vmax.xlane.f32.xlu0 %v998
    %v1000 = vpop.xlane.xlu0 %999
    %v1001 = vsel %vm188, %v995, -inf
    %1002 = vmax.xlane.f32.xlu0 %v1001
    %v1003 = vpop.xlane.xlu0 %1002
    %v1004 = vsub.f32 %v976, %v1000
    %v1005 = vsub.f32 %v995, %v1003
    %v1006 = vmul.f32 %v1004, 1.442695
    %v1007 = vpow.pop %v1006
    %v1008 = vmul.f32 %v1005, 1.442695
    %v1009 = vpow.pop %v1008
    %v1010 = vsel %vm188, %v1007, 0.0
    %1011 = vadd.xlane.f32.xlu0 %v1010
    %v1012 = vpop.xlane.xlu0 %1011
    %v1013 = vsel %vm188, %v1009, 0.0
    %1014 = vadd.xlane.f32.xlu0 %v1013
    %v1015 = vpop.xlane.xlu0 %1014
    %v1016 = vrcp.pop %v1012
    %v1017 = vrcp.pop %v1015
    %v1018 = vmul.f32 %v1007, %v1016
    %v1019 = vmul.f32 %v1009, %v1017
    %v1020 = vpack.c.bf16 %v1018, %v1018
    %v1021 = vpack.c.bf16 %v1019, %v1019
    %v1023 = vunpack.c.l.b16 %v953
    %v1024 = vpack.c.b16 %v1023, %v1023
    %1025 = vrot.lane.b32.xlu0 %v1024, 96
    %v1026 = vpop.permute.xlu0 %1025
    %v1028 = vsel %vm188, %v1020, 0
    %v1031 = vsel %vm261, %v1026, 0
    %1033 = vmatpush.bf16.msra.mxu0 0
    %1034 = vmatpush.bf16.msra.mxu0 0
    %1035 = vmatpush.bf16.msra.mxu0 0
    %1036 = vmatpush.bf16.msra.mxu0 0
    %1037 = vmatpush.bf16.msra.mxu0 0
    %1038 = vmatpush.bf16.msra.mxu0 0
    %1039 = vmatpush.bf16.msra.mxu0 0
    %1040 = vmatpush.bf16.msra.mxu0 %v1031
    %1041 = vmatmul.bf16.gmra.mxu0 %v1028
    %v1042 = vpop.f32.mrf.mxu0
    %v1043 = vadd.f32 0.0, %v1042
    %v1044 = vpop.f32.mrf.mxu0
    %1045 = vdwg.mxu0
    %v1047 = vunpack.c.l.b16 %v954
    %v1048 = vpack.c.b16 %v1047, %v1047
    %1049 = vrot.lane.b32.xlu0 %v1048, 96
    %v1050 = vpop.permute.xlu0 %1049
    %v1052 = vsel %vm188, %v1021, 0
    %v1055 = vsel %vm261, %v1050, 0
    %1057 = vmatpush.bf16.msra.mxu0 0
    %1058 = vmatpush.bf16.msra.mxu0 0
    %1059 = vmatpush.bf16.msra.mxu0 0
    %1060 = vmatpush.bf16.msra.mxu0 0
    %1061 = vmatpush.bf16.msra.mxu0 0
    %1062 = vmatpush.bf16.msra.mxu0 0
    %1063 = vmatpush.bf16.msra.mxu0 0
    %1064 = vmatpush.bf16.msra.mxu0 %v1055
    %1065 = vmatmul.bf16.gmra.mxu0 %v1052
    %v1066 = vpop.f32.mrf.mxu0
    %v1067 = vadd.f32 0.0, %v1066
    %v1068 = vpop.f32.mrf.mxu0
    %1069 = vdwg.mxu0
    %v1070 = vpack.c.bf16 %v1067, %v1043
    %v1072 = vunpack.c.l.b16 %v869
    %v1073 = vpack.c.b16 %v1072, %v1072
    %1074 = vrot.lane.b32.xlu0 %v1073, 120
    %v1075 = vpop.permute.xlu0 %1074
    %1076 = vrot.lane.b32.xlu0 %v1024, 120
    %v1077 = vpop.permute.xlu0 %1076
    %v1079 = vsel %vm188, %v1075, 0
    %v1082 = vsel %vm188, %v1077, 0
    %1084 = vmatpush.bf16.xpose.msra.mxu0 0
    %1085 = vmatpush.bf16.xpose.msra.mxu0 0
    %1086 = vmatpush.bf16.xpose.msra.mxu0 0
    %1087 = vmatpush.bf16.xpose.msra.mxu0 0
    %1088 = vmatpush.bf16.xpose.msra.mxu0 0
    %1089 = vmatpush.bf16.xpose.msra.mxu0 0
    %1090 = vmatpush.bf16.xpose.msra.mxu0 0
    %1091 = vmatpush.bf16.xpose.msra.mxu0 %v1082
    %1092 = vmatmul.bf16.gmra.mxu0 %v1079
    %v1093 = vpop.f32.mrf.mxu0
    %v1094 = vadd.f32 %v91, %v1093
    %v1095 = vpop.f32.mrf.mxu0
    %1096 = vdwg.mxu0
    %v1098 = vunpack.c.l.b16 %v870
    %v1099 = vpack.c.b16 %v1098, %v1098
    %1100 = vrot.lane.b32.xlu0 %v1099, 120
    %v1101 = vpop.permute.xlu0 %1100
    %1102 = vrot.lane.b32.xlu0 %v1048, 120
    %v1103 = vpop.permute.xlu0 %1102
    %v1105 = vsel %vm188, %v1101, 0
    %v1108 = vsel %vm188, %v1103, 0
    %1110 = vmatpush.bf16.xpose.msra.mxu0 0
    %1111 = vmatpush.bf16.xpose.msra.mxu0 0
    %1112 = vmatpush.bf16.xpose.msra.mxu0 0
    %1113 = vmatpush.bf16.xpose.msra.mxu0 0
    %1114 = vmatpush.bf16.xpose.msra.mxu0 0
    %1115 = vmatpush.bf16.xpose.msra.mxu0 0
    %1116 = vmatpush.bf16.xpose.msra.mxu0 0
    %1117 = vmatpush.bf16.xpose.msra.mxu0 %v1108
    %1118 = vmatmul.bf16.gmra.mxu0 %v1105
    %v1119 = vpop.f32.mrf.mxu0
    %v1120 = vadd.f32 %v92, %v1119
    %v1121 = vpop.f32.mrf.mxu0
    %1122 = vdwg.mxu0
    %v1123 = vsel %vm188, %v1094, -inf
    %1124 = vmax.xlane.f32.xlu0 %v1123
    %v1125 = vpop.xlane.xlu0 %1124
    %v1126 = vsel %vm188, %v1120, -inf
    %1127 = vmax.xlane.f32.xlu0 %v1126
    %v1128 = vpop.xlane.xlu0 %1127
    %v1129 = vsub.f32 %v1094, %v1125
    %v1130 = vsub.f32 %v1120, %v1128
    %v1131 = vmul.f32 %v1129, 1.442695
    %v1132 = vpow.pop %v1131
    %v1133 = vmul.f32 %v1130, 1.442695
    %v1134 = vpow.pop %v1133
    %v1135 = vsel %vm188, %v1132, 0.0
    %1136 = vadd.xlane.f32.xlu0 %v1135
    %v1137 = vpop.xlane.xlu0 %1136
    %v1138 = vsel %vm188, %v1134, 0.0
    %1139 = vadd.xlane.f32.xlu0 %v1138
    %v1140 = vpop.xlane.xlu0 %1139
    %v1141 = vrcp.pop %v1137
    %v1142 = vrcp.pop %v1140
    %v1143 = vmul.f32 %v1132, %v1141
    %v1144 = vmul.f32 %v1134, %v1142
    %v1145 = vpack.c.bf16 %v1143, %v1143
    %v1146 = vpack.c.bf16 %v1144, %v1144
    %1147 = vrot.lane.b32.xlu0 %v1024, 88
    %v1148 = vpop.permute.xlu0 %1147
    %v1150 = vsel %vm188, %v1145, 0
    %v1153 = vsel %vm261, %v1148, 0
    %1155 = vmatpush.bf16.msra.mxu0 0
    %1156 = vmatpush.bf16.msra.mxu0 0
    %1157 = vmatpush.bf16.msra.mxu0 0
    %1158 = vmatpush.bf16.msra.mxu0 0
    %1159 = vmatpush.bf16.msra.mxu0 0
    %1160 = vmatpush.bf16.msra.mxu0 0
    %1161 = vmatpush.bf16.msra.mxu0 0
    %1162 = vmatpush.bf16.msra.mxu0 %v1153
    %1163 = vmatmul.bf16.gmra.mxu0 %v1150
    %v1164 = vpop.f32.mrf.mxu0
    %v1165 = vadd.f32 0.0, %v1164
    %v1166 = vpop.f32.mrf.mxu0
    %1167 = vdwg.mxu0
    %1168 = vrot.lane.b32.xlu0 %v1048, 88
    %v1169 = vpop.permute.xlu0 %1168
    %v1171 = vsel %vm188, %v1146, 0
    %v1174 = vsel %vm261, %v1169, 0
    %1176 = vmatpush.bf16.msra.mxu0 0
    %1177 = vmatpush.bf16.msra.mxu0 0
    %1178 = vmatpush.bf16.msra.mxu0 0
    %1179 = vmatpush.bf16.msra.mxu0 0
    %1180 = vmatpush.bf16.msra.mxu0 0
    %1181 = vmatpush.bf16.msra.mxu0 0
    %1182 = vmatpush.bf16.msra.mxu0 0
    %1183 = vmatpush.bf16.msra.mxu0 %v1174
    %1184 = vmatmul.bf16.gmra.mxu0 %v1171
    %v1185 = vpop.f32.mrf.mxu0
    %v1186 = vadd.f32 0.0, %v1185
    %v1187 = vpop.f32.mrf.mxu0
    %1188 = vdwg.mxu0
    %v1189 = vpack.c.bf16 %v1186, %v1165
    %v1191 = vsel %vm188, %v1189, 0
    %v1194 = vsel %vm261, %v956, 0
    %1196 = vmatpush.bf16.msra.mxu0 0
    %1197 = vmatpush.bf16.msra.mxu0 0
    %1198 = vmatpush.bf16.msra.mxu0 0
    %1199 = vmatpush.bf16.msra.mxu0 0
    %1200 = vmatpush.bf16.msra.mxu0 0
    %1201 = vmatpush.bf16.msra.mxu0 0
    %1202 = vmatpush.bf16.msra.mxu0 0
    %1203 = vmatpush.bf16.msra.mxu0 %v1194
    %1204 = vmatmul.bf16.gmra.mxu0 %v1191
    %v1205 = vpop.f32.mrf.mxu0
    %v1206 = vadd.f32 0.0, %v1205
    %v1207 = vpop.f32.mrf.mxu0
    %v1208 = vadd.f32 0.0, %v1207
    %1209 = vdwg.mxu0
    %v1211 = vsel %vm188, %v1070, 0
    %v1214 = vsel %vm261, %v955, 0
    %1216 = vmatpush.bf16.msra.mxu0 0
    %1217 = vmatpush.bf16.msra.mxu0 0
    %1218 = vmatpush.bf16.msra.mxu0 0
    %1219 = vmatpush.bf16.msra.mxu0 0
    %1220 = vmatpush.bf16.msra.mxu0 0
    %1221 = vmatpush.bf16.msra.mxu0 0
    %1222 = vmatpush.bf16.msra.mxu0 0
    %1223 = vmatpush.bf16.msra.mxu0 %v1214
    %1224 = vmatmul.bf16.gmra.mxu0 %v1211
    %v1225 = vpop.f32.mrf.mxu0
    %v1226 = vadd.f32 %v1206, %v1225
    %v1227 = vpop.f32.mrf.mxu0
    %v1228 = vadd.f32 %v1208, %v1227
    %1229 = vdwg.mxu0
    %1230 = vrot.lane.b32.xlu0 %v1073, 112
    %v1231 = vpop.permute.xlu0 %1230
    %1232 = vrot.lane.b32.xlu0 %v1024, 112
    %v1233 = vpop.permute.xlu0 %1232
    %v1235 = vsel %vm188, %v1231, 0
    %v1238 = vsel %vm188, %v1233, 0
    %1240 = vmatpush.bf16.xpose.msra.mxu0 0
    %1241 = vmatpush.bf16.xpose.msra.mxu0 0
    %1242 = vmatpush.bf16.xpose.msra.mxu0 0
    %1243 = vmatpush.bf16.xpose.msra.mxu0 0
    %1244 = vmatpush.bf16.xpose.msra.mxu0 0
    %1245 = vmatpush.bf16.xpose.msra.mxu0 0
    %1246 = vmatpush.bf16.xpose.msra.mxu0 0
    %1247 = vmatpush.bf16.xpose.msra.mxu0 %v1238
    %1248 = vmatmul.bf16.gmra.mxu0 %v1235
    %v1249 = vpop.f32.mrf.mxu0
    %v1250 = vadd.f32 %v91, %v1249
    %v1251 = vpop.f32.mrf.mxu0
    %1252 = vdwg.mxu0
    %1253 = vrot.lane.b32.xlu0 %v1099, 112
    %v1254 = vpop.permute.xlu0 %1253
    %1255 = vrot.lane.b32.xlu0 %v1048, 112
    %v1256 = vpop.permute.xlu0 %1255
    %v1258 = vsel %vm188, %v1254, 0
    %v1261 = vsel %vm188, %v1256, 0
    %1263 = vmatpush.bf16.xpose.msra.mxu0 0
    %1264 = vmatpush.bf16.xpose.msra.mxu0 0
    %1265 = vmatpush.bf16.xpose.msra.mxu0 0
    %1266 = vmatpush.bf16.xpose.msra.mxu0 0
    %1267 = vmatpush.bf16.xpose.msra.mxu0 0
    %1268 = vmatpush.bf16.xpose.msra.mxu0 0
    %1269 = vmatpush.bf16.xpose.msra.mxu0 0
    %1270 = vmatpush.bf16.xpose.msra.mxu0 %v1261
    %1271 = vmatmul.bf16.gmra.mxu0 %v1258
    %v1272 = vpop.f32.mrf.mxu0
    %v1273 = vadd.f32 %v92, %v1272
    %v1274 = vpop.f32.mrf.mxu0
    %1275 = vdwg.mxu0
    %v1276 = vsel %vm188, %v1250, -inf
    %1277 = vmax.xlane.f32.xlu0 %v1276
    %v1278 = vpop.xlane.xlu0 %1277
    %v1279 = vsel %vm188, %v1273, -inf
    %1280 = vmax.xlane.f32.xlu0 %v1279
    %v1281 = vpop.xlane.xlu0 %1280
    %v1282 = vsub.f32 %v1250, %v1278
    %v1283 = vsub.f32 %v1273, %v1281
    %v1284 = vmul.f32 %v1282, 1.442695
    %v1285 = vpow.pop %v1284
    %v1286 = vmul.f32 %v1283, 1.442695
    %v1287 = vpow.pop %v1286
    %v1288 = vsel %vm188, %v1285, 0.0
    %1289 = vadd.xlane.f32.xlu0 %v1288
    %v1290 = vpop.xlane.xlu0 %1289
    %v1291 = vsel %vm188, %v1287, 0.0
    %1292 = vadd.xlane.f32.xlu0 %v1291
    %v1293 = vpop.xlane.xlu0 %1292
    %v1294 = vrcp.pop %v1290
    %v1295 = vrcp.pop %v1293
    %v1296 = vmul.f32 %v1285, %v1294
    %v1297 = vmul.f32 %v1287, %v1295
    %v1298 = vpack.c.bf16 %v1296, %v1296
    %v1299 = vpack.c.bf16 %v1297, %v1297
    %1300 = vrot.lane.b32.xlu0 %v1024, 80
    %v1301 = vpop.permute.xlu0 %1300
    %v1303 = vsel %vm188, %v1298, 0
    %v1306 = vsel %vm261, %v1301, 0
    %1308 = vmatpush.bf16.msra.mxu0 0
    %1309 = vmatpush.bf16.msra.mxu0 0
    %1310 = vmatpush.bf16.msra.mxu0 0
    %1311 = vmatpush.bf16.msra.mxu0 0
    %1312 = vmatpush.bf16.msra.mxu0 0
    %1313 = vmatpush.bf16.msra.mxu0 0
    %1314 = vmatpush.bf16.msra.mxu0 0
    %1315 = vmatpush.bf16.msra.mxu0 %v1306
    %1316 = vmatmul.bf16.gmra.mxu0 %v1303
    %v1317 = vpop.f32.mrf.mxu0
    %v1318 = vadd.f32 0.0, %v1317
    %v1319 = vpop.f32.mrf.mxu0
    %1320 = vdwg.mxu0
    %1321 = vrot.lane.b32.xlu0 %v1048, 80
    %v1322 = vpop.permute.xlu0 %1321
    %v1324 = vsel %vm188, %v1299, 0
    %v1327 = vsel %vm261, %v1322, 0
    %1329 = vmatpush.bf16.msra.mxu0 0
    %1330 = vmatpush.bf16.msra.mxu0 0
    %1331 = vmatpush.bf16.msra.mxu0 0
    %1332 = vmatpush.bf16.msra.mxu0 0
    %1333 = vmatpush.bf16.msra.mxu0 0
    %1334 = vmatpush.bf16.msra.mxu0 0
    %1335 = vmatpush.bf16.msra.mxu0 0
    %1336 = vmatpush.bf16.msra.mxu0 %v1327
    %1337 = vmatmul.bf16.gmra.mxu0 %v1324
    %v1338 = vpop.f32.mrf.mxu0
    %v1339 = vadd.f32 0.0, %v1338
    %v1340 = vpop.f32.mrf.mxu0
    %1341 = vdwg.mxu0
    %v1342 = vpack.c.bf16 %v1339, %v1318
    %v1344 = vsel %vm188, %v1342, 0
    %v1347 = vsel %vm261, %v957, 0
    %1349 = vmatpush.bf16.msra.mxu0 0
    %1350 = vmatpush.bf16.msra.mxu0 0
    %1351 = vmatpush.bf16.msra.mxu0 0
    %1352 = vmatpush.bf16.msra.mxu0 0
    %1353 = vmatpush.bf16.msra.mxu0 0
    %1354 = vmatpush.bf16.msra.mxu0 0
    %1355 = vmatpush.bf16.msra.mxu0 0
    %1356 = vmatpush.bf16.msra.mxu0 %v1347
    %1357 = vmatmul.bf16.gmra.mxu0 %v1344
    %v1358 = vpop.f32.mrf.mxu0
    %v1359 = vadd.f32 0.0, %v1358
    %v1360 = vpop.f32.mrf.mxu0
    %v1361 = vadd.f32 0.0, %v1360
    %1362 = vdwg.mxu0
    %v1363 = vadd.f32 %v1226, %v1359
    %v1364 = vadd.f32 %v1228, %v1361
    %1365 = vrot.lane.b32.xlu0 %v1073, 104
    %v1366 = vpop.permute.xlu0 %1365
    %1367 = vrot.lane.b32.xlu0 %v1024, 104
    %v1368 = vpop.permute.xlu0 %1367
    %v1370 = vsel %vm188, %v1366, 0
    %v1373 = vsel %vm188, %v1368, 0
    %1375 = vmatpush.bf16.xpose.msra.mxu0 0
    %1376 = vmatpush.bf16.xpose.msra.mxu0 0
    %1377 = vmatpush.bf16.xpose.msra.mxu0 0
    %1378 = vmatpush.bf16.xpose.msra.mxu0 0
    %1379 = vmatpush.bf16.xpose.msra.mxu0 0
    %1380 = vmatpush.bf16.xpose.msra.mxu0 0
    %1381 = vmatpush.bf16.xpose.msra.mxu0 0
    %1382 = vmatpush.bf16.xpose.msra.mxu0 %v1373
    %1383 = vmatmul.bf16.gmra.mxu0 %v1370
    %v1384 = vpop.f32.mrf.mxu0
    %v1385 = vadd.f32 %v91, %v1384
    %v1386 = vpop.f32.mrf.mxu0
    %1387 = vdwg.mxu0
    %1388 = vrot.lane.b32.xlu0 %v1099, 104
    %v1389 = vpop.permute.xlu0 %1388
    %1390 = vrot.lane.b32.xlu0 %v1048, 104
    %v1391 = vpop.permute.xlu0 %1390
    %v1393 = vsel %vm188, %v1389, 0
    %v1396 = vsel %vm188, %v1391, 0
    %1398 = vmatpush.bf16.xpose.msra.mxu0 0
    %1399 = vmatpush.bf16.xpose.msra.mxu0 0
    %1400 = vmatpush.bf16.xpose.msra.mxu0 0
    %1401 = vmatpush.bf16.xpose.msra.mxu0 0
    %1402 = vmatpush.bf16.xpose.msra.mxu0 0
    %1403 = vmatpush.bf16.xpose.msra.mxu0 0
    %1404 = vmatpush.bf16.xpose.msra.mxu0 0
    %1405 = vmatpush.bf16.xpose.msra.mxu0 %v1396
    %1406 = vmatmul.bf16.gmra.mxu0 %v1393
    %v1407 = vpop.f32.mrf.mxu0
    %v1408 = vadd.f32 %v92, %v1407
    %v1409 = vpop.f32.mrf.mxu0
    %1410 = vdwg.mxu0
    %v1411 = vsel %vm188, %v1385, -inf
    %1412 = vmax.xlane.f32.xlu0 %v1411
    %v1413 = vpop.xlane.xlu0 %1412
    %v1414 = vsel %vm188, %v1408, -inf
    %1415 = vmax.xlane.f32.xlu0 %v1414
    %v1416 = vpop.xlane.xlu0 %1415
    %v1417 = vsub.f32 %v1385, %v1413
    %v1418 = vsub.f32 %v1408, %v1416
    %v1419 = vmul.f32 %v1417, 1.442695
    %v1420 = vpow.pop %v1419
    %v1421 = vmul.f32 %v1418, 1.442695
    %v1422 = vpow.pop %v1421
    %v1423 = vsel %vm188, %v1420, 0.0
    %1424 = vadd.xlane.f32.xlu0 %v1423
    %v1425 = vpop.xlane.xlu0 %1424
    %v1426 = vsel %vm188, %v1422, 0.0
    %1427 = vadd.xlane.f32.xlu0 %v1426
    %v1428 = vpop.xlane.xlu0 %1427
    %v1429 = vrcp.pop %v1425
    %v1430 = vrcp.pop %v1428
    %v1431 = vmul.f32 %v1420, %v1429
    %v1432 = vmul.f32 %v1422, %v1430
    %v1433 = vpack.c.bf16 %v1431, %v1431
    %v1434 = vpack.c.bf16 %v1432, %v1432
    %1435 = vrot.lane.b32.xlu0 %v1024, 72
    %v1436 = vpop.permute.xlu0 %1435
    %v1438 = vsel %vm188, %v1433, 0
    %v1441 = vsel %vm261, %v1436, 0
    %1443 = vmatpush.bf16.msra.mxu0 0
    %1444 = vmatpush.bf16.msra.mxu0 0
    %1445 = vmatpush.bf16.msra.mxu0 0
    %1446 = vmatpush.bf16.msra.mxu0 0
    %1447 = vmatpush.bf16.msra.mxu0 0
    %1448 = vmatpush.bf16.msra.mxu0 0
    %1449 = vmatpush.bf16.msra.mxu0 0
    %1450 = vmatpush.bf16.msra.mxu0 %v1441
    %1451 = vmatmul.bf16.gmra.mxu0 %v1438
    %v1452 = vpop.f32.mrf.mxu0
    %v1453 = vadd.f32 0.0, %v1452
    %v1454 = vpop.f32.mrf.mxu0
    %1455 = vdwg.mxu0
    %1456 = vrot.lane.b32.xlu0 %v1048, 72
    %v1457 = vpop.permute.xlu0 %1456
    %v1459 = vsel %vm188, %v1434, 0
    %v1462 = vsel %vm261, %v1457, 0
    %1464 = vmatpush.bf16.msra.mxu0 0
    %1465 = vmatpush.bf16.msra.mxu0 0
    %1466 = vmatpush.bf16.msra.mxu0 0
    %1467 = vmatpush.bf16.msra.mxu0 0
    %1468 = vmatpush.bf16.msra.mxu0 0
    %1469 = vmatpush.bf16.msra.mxu0 0
    %1470 = vmatpush.bf16.msra.mxu0 0
    %1471 = vmatpush.bf16.msra.mxu0 %v1462
    %1472 = vmatmul.bf16.gmra.mxu0 %v1459
    %v1473 = vpop.f32.mrf.mxu0
    %v1474 = vadd.f32 0.0, %v1473
    %v1475 = vpop.f32.mrf.mxu0
    %1476 = vdwg.mxu0
    %v1477 = vpack.c.bf16 %v1474, %v1453
    %v1479 = vsel %vm188, %v1477, 0
    %v1482 = vsel %vm261, %v958, 0
    %1484 = vmatpush.bf16.msra.mxu0 0
    %1485 = vmatpush.bf16.msra.mxu0 0
    %1486 = vmatpush.bf16.msra.mxu0 0
    %1487 = vmatpush.bf16.msra.mxu0 0
    %1488 = vmatpush.bf16.msra.mxu0 0
    %1489 = vmatpush.bf16.msra.mxu0 0
    %1490 = vmatpush.bf16.msra.mxu0 0
    %1491 = vmatpush.bf16.msra.mxu0 %v1482
    %1492 = vmatmul.bf16.gmra.mxu0 %v1479
    %v1493 = vpop.f32.mrf.mxu0
    %v1494 = vadd.f32 0.0, %v1493
    %v1495 = vpop.f32.mrf.mxu0
    %v1496 = vadd.f32 0.0, %v1495
    %1497 = vdwg.mxu0
    %v1498 = vadd.f32 %v1363, %v1494
    %v1499 = vadd.f32 %v1364, %v1496
    %v1501 = vperm.slane %v959, 0
    %v1503 = vadd.f32 %v1498, %v1501
    %v1504 = vadd.f32 %v1499, %v1501
    %v1505 = vadd.f32 %v784, %v1503
    %v1506 = vadd.f32 %v785, %v1504
    %v1507 = vld [vmem:[%s16] sm:$0x1]
    %v1508 = vld [vmem:[%s17] sm:$0x1]
    %v1509 = vmul.f32 %v1505, %v83
    %v1510 = vmul.f32 %v1506, %v83
    %1511 = vadd.xlane.f32.xlu0 %v1509
    %v1512 = vpop.xlane.xlu0 %1511
    %1513 = vadd.xlane.f32.xlu0 %v1510
    %v1514 = vpop.xlane.xlu0 %1513
    %v1515 = vmul.f32 %v1512, 0.03125
    %v1516 = vmul.f32 %v1514, 0.03125
    %v1517 = vsub.f32 %v1509, %v1515
    %v1518 = vsub.f32 %v1510, %v1516
    %v1519 = vmul.f32 %v1517, %v83
    %v1520 = vmul.f32 %v1518, %v83
    %v1521 = vmul.f32 %v1519, %v1519
    %v1522 = vmul.f32 %v1520, %v1520
    %1523 = vadd.xlane.f32.xlu0 %v1521
    %v1524 = vpop.xlane.xlu0 %1523
    %1525 = vadd.xlane.f32.xlu0 %v1522
    %v1526 = vpop.xlane.xlu0 %1525
    %v1527 = vmul.f32 %v1524, 0.03125
    %v1528 = vmul.f32 %v1526, 0.03125
    %v1529 = vadd.f32 %v1527, 1e-05
    %v1530 = vadd.f32 %v1528, 1e-05
    %v1531 = vrsqrt.pop %v1529
    %v1532 = vmul.f32 %v1531, %v1529
    %v1533 = vmul.f32 %v1532, %v1531
    %v1534 = vmul.f32 0.5, %v1533
    %v1535 = vsub.f32 1.5, %v1534
    %v1536 = vmul.f32 %v1531, %v1535
    %vm1537 = vweird.f32 %v1529
    %vm1538 = vweird.f32 %v1531
    %vm1539 = vmor %vm1537, %vm1538
    %v1540 = vsel %vm1539, %v1531, %v1536
    %v1541 = vrsqrt.pop %v1530
    %v1542 = vmul.f32 %v1541, %v1530
    %v1543 = vmul.f32 %v1542, %v1541
    %v1544 = vmul.f32 0.5, %v1543
    %v1545 = vsub.f32 1.5, %v1544
    %v1546 = vmul.f32 %v1541, %v1545
    %vm1547 = vweird.f32 %v1530
    %vm1548 = vweird.f32 %v1541
    %vm1549 = vmor %vm1547, %vm1548
    %v1550 = vsel %vm1549, %v1541, %v1546
    %v1551 = vmul.f32 %v1519, %v1540
    %v1552 = vmul.f32 %v1520, %v1550
    %v1554 = vperm.slane %v1507, 0
    %v1556 = vmul.f32 %v1551, %v1554
    %v1557 = vmul.f32 %v1552, %v1554
    %v1559 = vperm.slane %v1508, 0
    %v1561 = vadd.f32 %v1556, %v1559
    %v1562 = vadd.f32 %v1557, %v1559
    %v1563 = vpack.c.bf16 %v1562, %v1561
    %v1564 = vld [vmem:[%s18] sm:$0xf]
    %v1565 = vld [vmem:[%s18 + $0x4] sm:$0xf]
    %v1566 = vld [vmem:[%s18 + $0x8] sm:$0xf]
    %v1567 = vld [vmem:[%s18 + $0xc] sm:$0xf]
    %v1568 = vld [vmem:[%s18 + $0x10] sm:$0xf]
    %v1569 = vld [vmem:[%s18 + $0x14] sm:$0xf]
    %v1570 = vld [vmem:[%s18 + $0x18] sm:$0xf]
    %v1571 = vld [vmem:[%s18 + $0x1c] sm:$0xf]
    %v1572 = vld [vmem:[%s18 + $0x20] sm:$0xf]
    %v1573 = vld [vmem:[%s18 + $0x24] sm:$0xf]
    %v1574 = vld [vmem:[%s18 + $0x28] sm:$0xf]
    %v1575 = vld [vmem:[%s18 + $0x2c] sm:$0xf]
    %v1576 = vld [vmem:[%s18 + $0x30] sm:$0xf]
    %v1577 = vld [vmem:[%s18 + $0x34] sm:$0xf]
    %v1578 = vld [vmem:[%s18 + $0x38] sm:$0xf]
    %v1579 = vld [vmem:[%s18 + $0x3c] sm:$0xf]
    %v1580 = vld [vmem:[%s19] sm:$0x1]
    %v1582 = vperm.slane %v1580, 0
    %v1600 = vunpack.c.l.b16 %v1564
    %v1601 = vunpack.c.l.b16 %v1565
    %v1602 = vunpack.c.l.b16 %v1566
    %v1603 = vunpack.c.l.b16 %v1567
    %v1604 = vunpack.c.l.b16 %v1568
    %v1605 = vunpack.c.l.b16 %v1569
    %v1606 = vunpack.c.l.b16 %v1570
    %v1607 = vunpack.c.l.b16 %v1571
    %v1608 = vunpack.c.l.b16 %v1572
    %v1609 = vunpack.c.l.b16 %v1573
    %v1610 = vunpack.c.l.b16 %v1574
    %v1611 = vunpack.c.l.b16 %v1575
    %v1612 = vunpack.c.l.b16 %v1576
    %v1613 = vunpack.c.l.b16 %v1577
    %v1614 = vunpack.c.l.b16 %v1578
    %v1615 = vunpack.c.l.b16 %v1579
    %v1616 = vpack.c.b16 %v1601, %v1600
    %v1617 = vpack.c.b16 %v1603, %v1602
    %v1618 = vpack.c.b16 %v1605, %v1604
    %v1619 = vpack.c.b16 %v1607, %v1606
    %v1620 = vpack.c.b16 %v1609, %v1608
    %v1621 = vpack.c.b16 %v1611, %v1610
    %v1622 = vpack.c.b16 %v1613, %v1612
    %v1623 = vpack.c.b16 %v1615, %v1614
    %1632 = vmatpush.bf16.msra.mxu0 %v1623
    %1633 = vmatpush.bf16.msra.mxu0 %v1622
    %1634 = vmatpush.bf16.msra.mxu0 %v1621
    %1635 = vmatpush.bf16.msra.mxu0 %v1620
    %1636 = vmatpush.bf16.msra.mxu0 %v1619
    %1637 = vmatpush.bf16.msra.mxu0 %v1618
    %1638 = vmatpush.bf16.msra.mxu0 %v1617
    %1639 = vmatpush.bf16.msra.mxu0 %v1616
    %1640 = vmatmul.bf16.gmra.mxu0 %v1563
    %v1641 = vpop.f32.mrf.mxu0
    %v1642 = vadd.f32 %v1582, %v1641
    %v1643 = vpop.f32.mrf.mxu0
    %v1644 = vadd.f32 %v1582, %v1643
    %1645 = vdwg.mxu0
    %v1646 = vmax.f32 %v1642, 0.0
    %v1647 = vmax.f32 %v1644, 0.0
    %v1648 = vpack.c.bf16 %v1647, %v1646
    %v1649 = vld [vmem:[%s20] sm:$0xf]
    %v1650 = vld [vmem:[%s20 + $0x4] sm:$0xf]
    %v1651 = vld [vmem:[%s20 + $0x8] sm:$0xf]
    %v1652 = vld [vmem:[%s20 + $0xc] sm:$0xf]
    %v1653 = vld [vmem:[%s20 + $0x10] sm:$0xf]
    %v1654 = vld [vmem:[%s20 + $0x14] sm:$0xf]
    %v1655 = vld [vmem:[%s20 + $0x18] sm:$0xf]
    %v1656 = vld [vmem:[%s20 + $0x1c] sm:$0xf]
    %v1657 = vld [vmem:[%s20 + $0x20] sm:$0xf]
    %v1658 = vld [vmem:[%s20 + $0x24] sm:$0xf]
    %v1659 = vld [vmem:[%s20 + $0x28] sm:$0xf]
    %v1660 = vld [vmem:[%s20 + $0x2c] sm:$0xf]
    %v1661 = vld [vmem:[%s20 + $0x30] sm:$0xf]
    %v1662 = vld [vmem:[%s20 + $0x34] sm:$0xf]
    %v1663 = vld [vmem:[%s20 + $0x38] sm:$0xf]
    %v1664 = vld [vmem:[%s20 + $0x3c] sm:$0xf]
    %v1665 = vld [vmem:[%s21] sm:$0x1]
    %v1667 = vperm.slane %v1665, 0
    %v1685 = vunpack.c.l.b16 %v1649
    %v1686 = vunpack.c.l.b16 %v1650
    %v1687 = vunpack.c.l.b16 %v1651
    %v1688 = vunpack.c.l.b16 %v1652
    %v1689 = vunpack.c.l.b16 %v1653
    %v1690 = vunpack.c.l.b16 %v1654
    %v1691 = vunpack.c.l.b16 %v1655
    %v1692 = vunpack.c.l.b16 %v1656
    %v1693 = vunpack.c.l.b16 %v1657
    %v1694 = vunpack.c.l.b16 %v1658
    %v1695 = vunpack.c.l.b16 %v1659
    %v1696 = vunpack.c.l.b16 %v1660
    %v1697 = vunpack.c.l.b16 %v1661
    %v1698 = vunpack.c.l.b16 %v1662
    %v1699 = vunpack.c.l.b16 %v1663
    %v1700 = vunpack.c.l.b16 %v1664
    %v1701 = vpack.c.b16 %v1686, %v1685
    %v1702 = vpack.c.b16 %v1688, %v1687
    %v1703 = vpack.c.b16 %v1690, %v1689
    %v1704 = vpack.c.b16 %v1692, %v1691
    %v1705 = vpack.c.b16 %v1694, %v1693
    %v1706 = vpack.c.b16 %v1696, %v1695
    %v1707 = vpack.c.b16 %v1698, %v1697
    %v1708 = vpack.c.b16 %v1700, %v1699
    %1717 = vmatpush.bf16.msra.mxu0 %v1708
    %1718 = vmatpush.bf16.msra.mxu0 %v1707
    %1719 = vmatpush.bf16.msra.mxu0 %v1706
    %1720 = vmatpush.bf16.msra.mxu0 %v1705
    %1721 = vmatpush.bf16.msra.mxu0 %v1704
    %1722 = vmatpush.bf16.msra.mxu0 %v1703
    %1723 = vmatpush.bf16.msra.mxu0 %v1702
    %1724 = vmatpush.bf16.msra.mxu0 %v1701
    %1725 = vmatmul.bf16.gmra.mxu0 %v1648
    %v1726 = vpop.f32.mrf.mxu0
    %v1727 = vadd.f32 %v1667, %v1726
    %v1728 = vpop.f32.mrf.mxu0
    %v1729 = vadd.f32 %v1667, %v1728
    %1730 = vdwg.mxu0
    %v1731 = vadd.f32 %v1561, %v1727
    %v1732 = vadd.f32 %v1562, %v1729
    %v1733 = vld [vmem:[%s22] sm:$0x1]
    %v1734 = vld [vmem:[%s23] sm:$0x1]
    %v1735 = vmul.f32 %v1731, %v83
    %v1736 = vmul.f32 %v1732, %v83
    %1737 = vadd.xlane.f32.xlu0 %v1735
    %v1738 = vpop.xlane.xlu0 %1737
    %1739 = vadd.xlane.f32.xlu0 %v1736
    %v1740 = vpop.xlane.xlu0 %1739
    %v1741 = vmul.f32 %v1738, 0.03125
    %v1742 = vmul.f32 %v1740, 0.03125
    %v1743 = vsub.f32 %v1735, %v1741
    %v1744 = vsub.f32 %v1736, %v1742
    %v1745 = vmul.f32 %v1743, %v83
    %v1746 = vmul.f32 %v1744, %v83
    %v1747 = vmul.f32 %v1745, %v1745
    %v1748 = vmul.f32 %v1746, %v1746
    %1749 = vadd.xlane.f32.xlu0 %v1747
    %v1750 = vpop.xlane.xlu0 %1749
    %1751 = vadd.xlane.f32.xlu0 %v1748
    %v1752 = vpop.xlane.xlu0 %1751
    %v1753 = vmul.f32 %v1750, 0.03125
    %v1754 = vmul.f32 %v1752, 0.03125
    %v1755 = vadd.f32 %v1753, 1e-05
    %v1756 = vadd.f32 %v1754, 1e-05
    %v1757 = vrsqrt.pop %v1755
    %v1758 = vmul.f32 %v1757, %v1755
    %v1759 = vmul.f32 %v1758, %v1757
    %v1760 = vmul.f32 0.5, %v1759
    %v1761 = vsub.f32 1.5, %v1760
    %v1762 = vmul.f32 %v1757, %v1761
    %vm1763 = vweird.f32 %v1755
    %vm1764 = vweird.f32 %v1757
    %vm1765 = vmor %vm1763, %vm1764
    %v1766 = vsel %vm1765, %v1757, %v1762
    %v1767 = vrsqrt.pop %v1756
    %v1768 = vmul.f32 %v1767, %v1756
    %v1769 = vmul.f32 %v1768, %v1767
    %v1770 = vmul.f32 0.5, %v1769
    %v1771 = vsub.f32 1.5, %v1770
    %v1772 = vmul.f32 %v1767, %v1771
    %vm1773 = vweird.f32 %v1756
    %vm1774 = vweird.f32 %v1767
    %vm1775 = vmor %vm1773, %vm1774
    %v1776 = vsel %vm1775, %v1767, %v1772
    %v1777 = vmul.f32 %v1745, %v1766
    %v1778 = vmul.f32 %v1746, %v1776
    %v1780 = vperm.slane %v1733, 0
    %v1782 = vmul.f32 %v1777, %v1780
    %v1783 = vmul.f32 %v1778, %v1780
    %v1785 = vperm.slane %v1734, 0
    %v1787 = vadd.f32 %v1782, %v1785
    %v1788 = vadd.f32 %v1783, %v1785
    %v1789 = vpack.c.bf16 %v1788, %v1787
    %s1790 = scalar_lea.vmem %s4, 64
    %v1791 = vld [vmem:[%s1790] sm:$0xf]
    %v1792 = vld [vmem:[%s1790 + $0x4] sm:$0xf]
    %v1793 = vld [vmem:[%s1790 + $0x8] sm:$0xf]
    %v1794 = vld [vmem:[%s1790 + $0xc] sm:$0xf]
    %v1795 = vld [vmem:[%s1790 + $0x10] sm:$0xf]
    %v1796 = vld [vmem:[%s1790 + $0x14] sm:$0xf]
    %v1797 = vld [vmem:[%s1790 + $0x18] sm:$0xf]
    %v1798 = vld [vmem:[%s1790 + $0x1c] sm:$0xf]
    %v1799 = vld [vmem:[%s1790 + $0x20] sm:$0xf]
    %v1800 = vld [vmem:[%s1790 + $0x24] sm:$0xf]
    %v1801 = vld [vmem:[%s1790 + $0x28] sm:$0xf]
    %v1802 = vld [vmem:[%s1790 + $0x2c] sm:$0xf]
    %v1803 = vld [vmem:[%s1790 + $0x30] sm:$0xf]
    %v1804 = vld [vmem:[%s1790 + $0x34] sm:$0xf]
    %v1805 = vld [vmem:[%s1790 + $0x38] sm:$0xf]
    %v1806 = vld [vmem:[%s1790 + $0x3c] sm:$0xf]
    %s1807 = scalar_lea.vmem %s5, 1
    %v1808 = vld [vmem:[%s1807] sm:$0x1]
    %v1810 = vperm.slane %v1808, 0
    %v1828 = vunpack.c.l.b16 %v1791
    %v1829 = vunpack.c.l.b16 %v1792
    %v1830 = vunpack.c.l.b16 %v1793
    %v1831 = vunpack.c.l.b16 %v1794
    %v1832 = vunpack.c.l.b16 %v1795
    %v1833 = vunpack.c.l.b16 %v1796
    %v1834 = vunpack.c.l.b16 %v1797
    %v1835 = vunpack.c.l.b16 %v1798
    %v1836 = vunpack.c.l.b16 %v1799
    %v1837 = vunpack.c.l.b16 %v1800
    %v1838 = vunpack.c.l.b16 %v1801
    %v1839 = vunpack.c.l.b16 %v1802
    %v1840 = vunpack.c.l.b16 %v1803
    %v1841 = vunpack.c.l.b16 %v1804
    %v1842 = vunpack.c.l.b16 %v1805
    %v1843 = vunpack.c.l.b16 %v1806
    %v1844 = vpack.c.b16 %v1829, %v1828
    %v1845 = vpack.c.b16 %v1831, %v1830
    %v1846 = vpack.c.b16 %v1833, %v1832
    %v1847 = vpack.c.b16 %v1835, %v1834
    %v1848 = vpack.c.b16 %v1837, %v1836
    %v1849 = vpack.c.b16 %v1839, %v1838
    %v1850 = vpack.c.b16 %v1841, %v1840
    %v1851 = vpack.c.b16 %v1843, %v1842
    %1860 = vmatpush.bf16.msra.mxu0 %v1851
    %1861 = vmatpush.bf16.msra.mxu0 %v1850
    %1862 = vmatpush.bf16.msra.mxu0 %v1849
    %1863 = vmatpush.bf16.msra.mxu0 %v1848
    %1864 = vmatpush.bf16.msra.mxu0 %v1847
    %1865 = vmatpush.bf16.msra.mxu0 %v1846
    %1866 = vmatpush.bf16.msra.mxu0 %v1845
    %1867 = vmatpush.bf16.msra.mxu0 %v1844
    %1868 = vmatmul.bf16.gmra.mxu0 %v1789
    %v1869 = vpop.f32.mrf.mxu0
    %v1870 = vadd.f32 %v1810, %v1869
    %v1871 = vpop.f32.mrf.mxu0
    %v1872 = vadd.f32 %v1810, %v1871
    %1873 = vdwg.mxu0
    %v1874 = vpack.c.bf16 %v1870, %v1870
    %v1875 = vpack.c.bf16 %v1872, %v1872
    %s1876 = scalar_lea.vmem %s6, 16
    %v1877 = vld [vmem:[%s1876] sm:$0xf]
    %v1878 = vld [vmem:[%s1876 + $0x4] sm:$0xf]
    %v1879 = vld [vmem:[%s1876 + $0x8] sm:$0xf]
    %v1880 = vld [vmem:[%s1876 + $0xc] sm:$0xf]
    %s1881 = scalar_lea.vmem %s7, 1
    %v1882 = vld [vmem:[%s1881] sm:$0x1]
    %v1884 = vunpack.c.l.b16 %v1874
    %v1885 = vpack.c.b16 %v1884, %v1884
    %1886 = vrot.lane.b32.xlu0 %v1885, 96
    %v1887 = vpop.permute.xlu0 %1886
    %v1889 = vsel %vm188, %v1874, 0
    %v1892 = vsel %vm188, %v1887, 0
    %1894 = vmatpush.bf16.xpose.msra.mxu0 0
    %1895 = vmatpush.bf16.xpose.msra.mxu0 0
    %1896 = vmatpush.bf16.xpose.msra.mxu0 0
    %1897 = vmatpush.bf16.xpose.msra.mxu0 0
    %1898 = vmatpush.bf16.xpose.msra.mxu0 0
    %1899 = vmatpush.bf16.xpose.msra.mxu0 0
    %1900 = vmatpush.bf16.xpose.msra.mxu0 0
    %1901 = vmatpush.bf16.xpose.msra.mxu0 %v1892
    %1902 = vmatmul.bf16.gmra.mxu0 %v1889
    %v1903 = vpop.f32.mrf.mxu0
    %v1904 = vadd.f32 %v89, %v1903
    %v1905 = vpop.f32.mrf.mxu0
    %1906 = vdwg.mxu0
    %v1908 = vunpack.c.l.b16 %v1875
    %v1909 = vpack.c.b16 %v1908, %v1908
    %1910 = vrot.lane.b32.xlu0 %v1909, 96
    %v1911 = vpop.permute.xlu0 %1910
    %v1913 = vsel %vm188, %v1875, 0
    %v1916 = vsel %vm188, %v1911, 0
    %1918 = vmatpush.bf16.xpose.msra.mxu0 0
    %1919 = vmatpush.bf16.xpose.msra.mxu0 0
    %1920 = vmatpush.bf16.xpose.msra.mxu0 0
    %1921 = vmatpush.bf16.xpose.msra.mxu0 0
    %1922 = vmatpush.bf16.xpose.msra.mxu0 0
    %1923 = vmatpush.bf16.xpose.msra.mxu0 0
    %1924 = vmatpush.bf16.xpose.msra.mxu0 0
    %1925 = vmatpush.bf16.xpose.msra.mxu0 %v1916
    %1926 = vmatmul.bf16.gmra.mxu0 %v1913
    %v1927 = vpop.f32.mrf.mxu0
    %v1928 = vadd.f32 %v90, %v1927
    %v1929 = vpop.f32.mrf.mxu0
    %1930 = vdwg.mxu0
    %v1931 = vsel %vm188, %v1904, -inf
    %1932 = vmax.xlane.f32.xlu0 %v1931
    %v1933 = vpop.xlane.xlu0 %1932
    %v1934 = vsel %vm188, %v1928, -inf
    %1935 = vmax.xlane.f32.xlu0 %v1934
    %v1936 = vpop.xlane.xlu0 %1935
    %v1937 = vsub.f32 %v1904, %v1933
    %v1938 = vsub.f32 %v1928, %v1936
    %v1939 = vmul.f32 %v1937, 1.442695
    %v1940 = vpow.pop %v1939
    %v1941 = vmul.f32 %v1938, 1.442695
    %v1942 = vpow.pop %v1941
    %v1943 = vsel %vm188, %v1940, 0.0
    %1944 = vadd.xlane.f32.xlu0 %v1943
    %v1945 = vpop.xlane.xlu0 %1944
    %v1946 = vsel %vm188, %v1942, 0.0
    %1947 = vadd.xlane.f32.xlu0 %v1946
    %v1948 = vpop.xlane.xlu0 %1947
    %v1949 = vrcp.pop %v1945
    %v1950 = vrcp.pop %v1948
    %v1951 = vmul.f32 %v1940, %v1949
    %v1952 = vmul.f32 %v1942, %v1950
    %v1953 = vpack.c.bf16 %v1951, %v1951
    %v1954 = vpack.c.bf16 %v1952, %v1952
    %1955 = vrot.lane.b32.xlu0 %v1885, 64
    %v1956 = vpop.permute.xlu0 %1955
    %v1958 = vsel %vm188, %v1953, 0
    %v1961 = vsel %vm261, %v1956, 0
    %1963 = vmatpush.bf16.msra.mxu0 0
    %1964 = vmatpush.bf16.msra.mxu0 0
    %1965 = vmatpush.bf16.msra.mxu0 0
    %1966 = vmatpush.bf16.msra.mxu0 0
    %1967 = vmatpush.bf16.msra.mxu0 0
    %1968 = vmatpush.bf16.msra.mxu0 0
    %1969 = vmatpush.bf16.msra.mxu0 0
    %1970 = vmatpush.bf16.msra.mxu0 %v1961
    %1971 = vmatmul.bf16.gmra.mxu0 %v1958
    %v1972 = vpop.f32.mrf.mxu0
    %v1973 = vadd.f32 0.0, %v1972
    %v1974 = vpop.f32.mrf.mxu0
    %1975 = vdwg.mxu0
    %1976 = vrot.lane.b32.xlu0 %v1909, 64
    %v1977 = vpop.permute.xlu0 %1976
    %v1979 = vsel %vm188, %v1954, 0
    %v1982 = vsel %vm261, %v1977, 0
    %1984 = vmatpush.bf16.msra.mxu0 0
    %1985 = vmatpush.bf16.msra.mxu0 0
    %1986 = vmatpush.bf16.msra.mxu0 0
    %1987 = vmatpush.bf16.msra.mxu0 0
    %1988 = vmatpush.bf16.msra.mxu0 0
    %1989 = vmatpush.bf16.msra.mxu0 0
    %1990 = vmatpush.bf16.msra.mxu0 0
    %1991 = vmatpush.bf16.msra.mxu0 %v1982
    %1992 = vmatmul.bf16.gmra.mxu0 %v1979
    %v1993 = vpop.f32.mrf.mxu0
    %v1994 = vadd.f32 0.0, %v1993
    %v1995 = vpop.f32.mrf.mxu0
    %1996 = vdwg.mxu0
    %v1997 = vpack.c.bf16 %v1994, %v1973
    %1998 = vrot.lane.b32.xlu0 %v1885, 120
    %v1999 = vpop.permute.xlu0 %1998
    %2000 = vrot.lane.b32.xlu0 %v1885, 88
    %v2001 = vpop.permute.xlu0 %2000
    %v2003 = vsel %vm188, %v1999, 0
    %v2006 = vsel %vm188, %v2001, 0
    %2008 = vmatpush.bf16.xpose.msra.mxu0 0
    %2009 = vmatpush.bf16.xpose.msra.mxu0 0
    %2010 = vmatpush.bf16.xpose.msra.mxu0 0
    %2011 = vmatpush.bf16.xpose.msra.mxu0 0
    %2012 = vmatpush.bf16.xpose.msra.mxu0 0
    %2013 = vmatpush.bf16.xpose.msra.mxu0 0
    %2014 = vmatpush.bf16.xpose.msra.mxu0 0
    %2015 = vmatpush.bf16.xpose.msra.mxu0 %v2006
    %2016 = vmatmul.bf16.gmra.mxu0 %v2003
    %v2017 = vpop.f32.mrf.mxu0
    %v2018 = vadd.f32 %v89, %v2017
    %v2019 = vpop.f32.mrf.mxu0
    %2020 = vdwg.mxu0
    %2021 = vrot.lane.b32.xlu0 %v1909, 120
    %v2022 = vpop.permute.xlu0 %2021
    %2023 = vrot.lane.b32.xlu0 %v1909, 88
    %v2024 = vpop.permute.xlu0 %2023
    %v2026 = vsel %vm188, %v2022, 0
    %v2029 = vsel %vm188, %v2024, 0
    %2031 = vmatpush.bf16.xpose.msra.mxu0 0
    %2032 = vmatpush.bf16.xpose.msra.mxu0 0
    %2033 = vmatpush.bf16.xpose.msra.mxu0 0
    %2034 = vmatpush.bf16.xpose.msra.mxu0 0
    %2035 = vmatpush.bf16.xpose.msra.mxu0 0
    %2036 = vmatpush.bf16.xpose.msra.mxu0 0
    %2037 = vmatpush.bf16.xpose.msra.mxu0 0
    %2038 = vmatpush.bf16.xpose.msra.mxu0 %v2029
    %2039 = vmatmul.bf16.gmra.mxu0 %v2026
    %v2040 = vpop.f32.mrf.mxu0
    %v2041 = vadd.f32 %v90, %v2040
    %v2042 = vpop.f32.mrf.mxu0
    %2043 = vdwg.mxu0
    %v2044 = vsel %vm188, %v2018, -inf
    %2045 = vmax.xlane.f32.xlu0 %v2044
    %v2046 = vpop.xlane.xlu0 %2045
    %v2047 = vsel %vm188, %v2041, -inf
    %2048 = vmax.xlane.f32.xlu0 %v2047
    %v2049 = vpop.xlane.xlu0 %2048
    %v2050 = vsub.f32 %v2018, %v2046
    %v2051 = vsub.f32 %v2041, %v2049
    %v2052 = vmul.f32 %v2050, 1.442695
    %v2053 = vpow.pop %v2052
    %v2054 = vmul.f32 %v2051, 1.442695
    %v2055 = vpow.pop %v2054
    %v2056 = vsel %vm188, %v2053, 0.0
    %2057 = vadd.xlane.f32.xlu0 %v2056
    %v2058 = vpop.xlane.xlu0 %2057
    %v2059 = vsel %vm188, %v2055, 0.0
    %2060 = vadd.xlane.f32.xlu0 %v2059
    %v2061 = vpop.xlane.xlu0 %2060
    %v2062 = vrcp.pop %v2058
    %v2063 = vrcp.pop %v2061
    %v2064 = vmul.f32 %v2053, %v2062
    %v2065 = vmul.f32 %v2055, %v2063
    %v2066 = vpack.c.bf16 %v2064, %v2064
    %v2067 = vpack.c.bf16 %v2065, %v2065
    %2068 = vrot.lane.b32.xlu0 %v1885, 56
    %v2069 = vpop.permute.xlu0 %2068
    %v2071 = vsel %vm188, %v2066, 0
    %v2074 = vsel %vm261, %v2069, 0
    %2076 = vmatpush.bf16.msra.mxu0 0
    %2077 = vmatpush.bf16.msra.mxu0 0
    %2078 = vmatpush.bf16.msra.mxu0 0
    %2079 = vmatpush.bf16.msra.mxu0 0
    %2080 = vmatpush.bf16.msra.mxu0 0
    %2081 = vmatpush.bf16.msra.mxu0 0
    %2082 = vmatpush.bf16.msra.mxu0 0
    %2083 = vmatpush.bf16.msra.mxu0 %v2074
    %2084 = vmatmul.bf16.gmra.mxu0 %v2071
    %v2085 = vpop.f32.mrf.mxu0
    %v2086 = vadd.f32 0.0, %v2085
    %v2087 = vpop.f32.mrf.mxu0
    %2088 = vdwg.mxu0
    %2089 = vrot.lane.b32.xlu0 %v1909, 56
    %v2090 = vpop.permute.xlu0 %2089
    %v2092 = vsel %vm188, %v2067, 0
    %v2095 = vsel %vm261, %v2090, 0
    %2097 = vmatpush.bf16.msra.mxu0 0
    %2098 = vmatpush.bf16.msra.mxu0 0
    %2099 = vmatpush.bf16.msra.mxu0 0
    %2100 = vmatpush.bf16.msra.mxu0 0
    %2101 = vmatpush.bf16.msra.mxu0 0
    %2102 = vmatpush.bf16.msra.mxu0 0
    %2103 = vmatpush.bf16.msra.mxu0 0
    %2104 = vmatpush.bf16.msra.mxu0 %v2095
    %2105 = vmatmul.bf16.gmra.mxu0 %v2092
    %v2106 = vpop.f32.mrf.mxu0
    %v2107 = vadd.f32 0.0, %v2106
    %v2108 = vpop.f32.mrf.mxu0
    %2109 = vdwg.mxu0
    %v2110 = vpack.c.bf16 %v2107, %v2086
    %v2112 = vsel %vm188, %v2110, 0
    %v2115 = vsel %vm261, %v1878, 0
    %2117 = vmatpush.bf16.msra.mxu0 0
    %2118 = vmatpush.bf16.msra.mxu0 0
    %2119 = vmatpush.bf16.msra.mxu0 0
    %2120 = vmatpush.bf16.msra.mxu0 0
    %2121 = vmatpush.bf16.msra.mxu0 0
    %2122 = vmatpush.bf16.msra.mxu0 0
    %2123 = vmatpush.bf16.msra.mxu0 0
    %2124 = vmatpush.bf16.msra.mxu0 %v2115
    %2125 = vmatmul.bf16.gmra.mxu0 %v2112
    %v2126 = vpop.f32.mrf.mxu0
    %v2127 = vadd.f32 0.0, %v2126
    %v2128 = vpop.f32.mrf.mxu0
    %v2129 = vadd.f32 0.0, %v2128
    %2130 = vdwg.mxu0
    %v2132 = vsel %vm188, %v1997, 0
    %v2135 = vsel %vm261, %v1877, 0
    %2137 = vmatpush.bf16.msra.mxu0 0
    %2138 = vmatpush.bf16.msra.mxu0 0
    %2139 = vmatpush.bf16.msra.mxu0 0
    %2140 = vmatpush.bf16.msra.mxu0 0
    %2141 = vmatpush.bf16.msra.mxu0 0
    %2142 = vmatpush.bf16.msra.mxu0 0
    %2143 = vmatpush.bf16.msra.mxu0 0
    %2144 = vmatpush.bf16.msra.mxu0 %v2135
    %2145 = vmatmul.bf16.gmra.mxu0 %v2132
    %v2146 = vpop.f32.mrf.mxu0
    %v2147 = vadd.f32 %v2127, %v2146
    %v2148 = vpop.f32.mrf.mxu0
    %v2149 = vadd.f32 %v2129, %v2148
    %2150 = vdwg.mxu0
    %2151 = vrot.lane.b32.xlu0 %v1885, 112
    %v2152 = vpop.permute.xlu0 %2151
    %2153 = vrot.lane.b32.xlu0 %v1885, 80
    %v2154 = vpop.permute.xlu0 %2153
    %v2156 = vsel %vm188, %v2152, 0
    %v2159 = vsel %vm188, %v2154, 0
    %2161 = vmatpush.bf16.xpose.msra.mxu0 0
    %2162 = vmatpush.bf16.xpose.msra.mxu0 0
    %2163 = vmatpush.bf16.xpose.msra.mxu0 0
    %2164 = vmatpush.bf16.xpose.msra.mxu0 0
    %2165 = vmatpush.bf16.xpose.msra.mxu0 0
    %2166 = vmatpush.bf16.xpose.msra.mxu0 0
    %2167 = vmatpush.bf16.xpose.msra.mxu0 0
    %2168 = vmatpush.bf16.xpose.msra.mxu0 %v2159
    %2169 = vmatmul.bf16.gmra.mxu0 %v2156
    %v2170 = vpop.f32.mrf.mxu0
    %v2171 = vadd.f32 %v89, %v2170
    %v2172 = vpop.f32.mrf.mxu0
    %2173 = vdwg.mxu0
    %2174 = vrot.lane.b32.xlu0 %v1909, 112
    %v2175 = vpop.permute.xlu0 %2174
    %2176 = vrot.lane.b32.xlu0 %v1909, 80
    %v2177 = vpop.permute.xlu0 %2176
    %v2179 = vsel %vm188, %v2175, 0
    %v2182 = vsel %vm188, %v2177, 0
    %2184 = vmatpush.bf16.xpose.msra.mxu0 0
    %2185 = vmatpush.bf16.xpose.msra.mxu0 0
    %2186 = vmatpush.bf16.xpose.msra.mxu0 0
    %2187 = vmatpush.bf16.xpose.msra.mxu0 0
    %2188 = vmatpush.bf16.xpose.msra.mxu0 0
    %2189 = vmatpush.bf16.xpose.msra.mxu0 0
    %2190 = vmatpush.bf16.xpose.msra.mxu0 0
    %2191 = vmatpush.bf16.xpose.msra.mxu0 %v2182
    %2192 = vmatmul.bf16.gmra.mxu0 %v2179
    %v2193 = vpop.f32.mrf.mxu0
    %v2194 = vadd.f32 %v90, %v2193
    %v2195 = vpop.f32.mrf.mxu0
    %2196 = vdwg.mxu0
    %v2197 = vsel %vm188, %v2171, -inf
    %2198 = vmax.xlane.f32.xlu0 %v2197
    %v2199 = vpop.xlane.xlu0 %2198
    %v2200 = vsel %vm188, %v2194, -inf
    %2201 = vmax.xlane.f32.xlu0 %v2200
    %v2202 = vpop.xlane.xlu0 %2201
    %v2203 = vsub.f32 %v2171, %v2199
    %v2204 = vsub.f32 %v2194, %v2202
    %v2205 = vmul.f32 %v2203, 1.442695
    %v2206 = vpow.pop %v2205
    %v2207 = vmul.f32 %v2204, 1.442695
    %v2208 = vpow.pop %v2207
    %v2209 = vsel %vm188, %v2206, 0.0
    %2210 = vadd.xlane.f32.xlu0 %v2209
    %v2211 = vpop.xlane.xlu0 %2210
    %v2212 = vsel %vm188, %v2208, 0.0
    %2213 = vadd.xlane.f32.xlu0 %v2212
    %v2214 = vpop.xlane.xlu0 %2213
    %v2215 = vrcp.pop %v2211
    %v2216 = vrcp.pop %v2214
    %v2217 = vmul.f32 %v2206, %v2215
    %v2218 = vmul.f32 %v2208, %v2216
    %v2219 = vpack.c.bf16 %v2217, %v2217
    %v2220 = vpack.c.bf16 %v2218, %v2218
    %2221 = vrot.lane.b32.xlu0 %v1885, 48
    %v2222 = vpop.permute.xlu0 %2221
    %v2224 = vsel %vm188, %v2219, 0
    %v2227 = vsel %vm261, %v2222, 0
    %2229 = vmatpush.bf16.msra.mxu0 0
    %2230 = vmatpush.bf16.msra.mxu0 0
    %2231 = vmatpush.bf16.msra.mxu0 0
    %2232 = vmatpush.bf16.msra.mxu0 0
    %2233 = vmatpush.bf16.msra.mxu0 0
    %2234 = vmatpush.bf16.msra.mxu0 0
    %2235 = vmatpush.bf16.msra.mxu0 0
    %2236 = vmatpush.bf16.msra.mxu0 %v2227
    %2237 = vmatmul.bf16.gmra.mxu0 %v2224
    %v2238 = vpop.f32.mrf.mxu0
    %v2239 = vadd.f32 0.0, %v2238
    %v2240 = vpop.f32.mrf.mxu0
    %2241 = vdwg.mxu0
    %2242 = vrot.lane.b32.xlu0 %v1909, 48
    %v2243 = vpop.permute.xlu0 %2242
    %v2245 = vsel %vm188, %v2220, 0
    %v2248 = vsel %vm261, %v2243, 0
    %2250 = vmatpush.bf16.msra.mxu0 0
    %2251 = vmatpush.bf16.msra.mxu0 0
    %2252 = vmatpush.bf16.msra.mxu0 0
    %2253 = vmatpush.bf16.msra.mxu0 0
    %2254 = vmatpush.bf16.msra.mxu0 0
    %2255 = vmatpush.bf16.msra.mxu0 0
    %2256 = vmatpush.bf16.msra.mxu0 0
    %2257 = vmatpush.bf16.msra.mxu0 %v2248
    %2258 = vmatmul.bf16.gmra.mxu0 %v2245
    %v2259 = vpop.f32.mrf.mxu0
    %v2260 = vadd.f32 0.0, %v2259
    %v2261 = vpop.f32.mrf.mxu0
    %2262 = vdwg.mxu0
    %v2263 = vpack.c.bf16 %v2260, %v2239
    %v2265 = vsel %vm188, %v2263, 0
    %v2268 = vsel %vm261, %v1879, 0
    %2270 = vmatpush.bf16.msra.mxu0 0
    %2271 = vmatpush.bf16.msra.mxu0 0
    %2272 = vmatpush.bf16.msra.mxu0 0
    %2273 = vmatpush.bf16.msra.mxu0 0
    %2274 = vmatpush.bf16.msra.mxu0 0
    %2275 = vmatpush.bf16.msra.mxu0 0
    %2276 = vmatpush.bf16.msra.mxu0 0
    %2277 = vmatpush.bf16.msra.mxu0 %v2268
    %2278 = vmatmul.bf16.gmra.mxu0 %v2265
    %v2279 = vpop.f32.mrf.mxu0
    %v2280 = vadd.f32 0.0, %v2279
    %v2281 = vpop.f32.mrf.mxu0
    %v2282 = vadd.f32 0.0, %v2281
    %2283 = vdwg.mxu0
    %v2284 = vadd.f32 %v2147, %v2280
    %v2285 = vadd.f32 %v2149, %v2282
    %2286 = vrot.lane.b32.xlu0 %v1885, 104
    %v2287 = vpop.permute.xlu0 %2286
    %2288 = vrot.lane.b32.xlu0 %v1885, 72
    %v2289 = vpop.permute.xlu0 %2288
    %v2291 = vsel %vm188, %v2287, 0
    %v2294 = vsel %vm188, %v2289, 0
    %2296 = vmatpush.bf16.xpose.msra.mxu0 0
    %2297 = vmatpush.bf16.xpose.msra.mxu0 0
    %2298 = vmatpush.bf16.xpose.msra.mxu0 0
    %2299 = vmatpush.bf16.xpose.msra.mxu0 0
    %2300 = vmatpush.bf16.xpose.msra.mxu0 0
    %2301 = vmatpush.bf16.xpose.msra.mxu0 0
    %2302 = vmatpush.bf16.xpose.msra.mxu0 0
    %2303 = vmatpush.bf16.xpose.msra.mxu0 %v2294
    %2304 = vmatmul.bf16.gmra.mxu0 %v2291
    %v2305 = vpop.f32.mrf.mxu0
    %v2306 = vadd.f32 %v89, %v2305
    %v2307 = vpop.f32.mrf.mxu0
    %2308 = vdwg.mxu0
    %2309 = vrot.lane.b32.xlu0 %v1909, 104
    %v2310 = vpop.permute.xlu0 %2309
    %2311 = vrot.lane.b32.xlu0 %v1909, 72
    %v2312 = vpop.permute.xlu0 %2311
    %v2314 = vsel %vm188, %v2310, 0
    %v2317 = vsel %vm188, %v2312, 0
    %2319 = vmatpush.bf16.xpose.msra.mxu0 0
    %2320 = vmatpush.bf16.xpose.msra.mxu0 0
    %2321 = vmatpush.bf16.xpose.msra.mxu0 0
    %2322 = vmatpush.bf16.xpose.msra.mxu0 0
    %2323 = vmatpush.bf16.xpose.msra.mxu0 0
    %2324 = vmatpush.bf16.xpose.msra.mxu0 0
    %2325 = vmatpush.bf16.xpose.msra.mxu0 0
    %2326 = vmatpush.bf16.xpose.msra.mxu0 %v2317
    %2327 = vmatmul.bf16.gmra.mxu0 %v2314
    %v2328 = vpop.f32.mrf.mxu0
    %v2329 = vadd.f32 %v90, %v2328
    %v2330 = vpop.f32.mrf.mxu0
    %2331 = vdwg.mxu0
    %v2332 = vsel %vm188, %v2306, -inf
    %2333 = vmax.xlane.f32.xlu0 %v2332
    %v2334 = vpop.xlane.xlu0 %2333
    %v2335 = vsel %vm188, %v2329, -inf
    %2336 = vmax.xlane.f32.xlu0 %v2335
    %v2337 = vpop.xlane.xlu0 %2336
    %v2338 = vsub.f32 %v2306, %v2334
    %v2339 = vsub.f32 %v2329, %v2337
    %v2340 = vmul.f32 %v2338, 1.442695
    %v2341 = vpow.pop %v2340
    %v2342 = vmul.f32 %v2339, 1.442695
    %v2343 = vpow.pop %v2342
    %v2344 = vsel %vm188, %v2341, 0.0
    %2345 = vadd.xlane.f32.xlu0 %v2344
    %v2346 = vpop.xlane.xlu0 %2345
    %v2347 = vsel %vm188, %v2343, 0.0
    %2348 = vadd.xlane.f32.xlu0 %v2347
    %v2349 = vpop.xlane.xlu0 %2348
    %v2350 = vrcp.pop %v2346
    %v2351 = vrcp.pop %v2349
    %v2352 = vmul.f32 %v2341, %v2350
    %v2353 = vmul.f32 %v2343, %v2351
    %v2354 = vpack.c.bf16 %v2352, %v2352
    %v2355 = vpack.c.bf16 %v2353, %v2353
    %2356 = vrot.lane.b32.xlu0 %v1885, 40
    %v2357 = vpop.permute.xlu0 %2356
    %v2359 = vsel %vm188, %v2354, 0
    %v2362 = vsel %vm261, %v2357, 0
    %2364 = vmatpush.bf16.msra.mxu0 0
    %2365 = vmatpush.bf16.msra.mxu0 0
    %2366 = vmatpush.bf16.msra.mxu0 0
    %2367 = vmatpush.bf16.msra.mxu0 0
    %2368 = vmatpush.bf16.msra.mxu0 0
    %2369 = vmatpush.bf16.msra.mxu0 0
    %2370 = vmatpush.bf16.msra.mxu0 0
    %2371 = vmatpush.bf16.msra.mxu0 %v2362
    %2372 = vmatmul.bf16.gmra.mxu0 %v2359
    %v2373 = vpop.f32.mrf.mxu0
    %v2374 = vadd.f32 0.0, %v2373
    %v2375 = vpop.f32.mrf.mxu0
    %2376 = vdwg.mxu0
    %2377 = vrot.lane.b32.xlu0 %v1909, 40
    %v2378 = vpop.permute.xlu0 %2377
    %v2380 = vsel %vm188, %v2355, 0
    %v2383 = vsel %vm261, %v2378, 0
    %2385 = vmatpush.bf16.msra.mxu0 0
    %2386 = vmatpush.bf16.msra.mxu0 0
    %2387 = vmatpush.bf16.msra.mxu0 0
    %2388 = vmatpush.bf16.msra.mxu0 0
    %2389 = vmatpush.bf16.msra.mxu0 0
    %2390 = vmatpush.bf16.msra.mxu0 0
    %2391 = vmatpush.bf16.msra.mxu0 0
    %2392 = vmatpush.bf16.msra.mxu0 %v2383
    %2393 = vmatmul.bf16.gmra.mxu0 %v2380
    %v2394 = vpop.f32.mrf.mxu0
    %v2395 = vadd.f32 0.0, %v2394
    %v2396 = vpop.f32.mrf.mxu0
    %2397 = vdwg.mxu0
    %v2398 = vpack.c.bf16 %v2395, %v2374
    %v2400 = vsel %vm188, %v2398, 0
    %v2403 = vsel %vm261, %v1880, 0
    %2405 = vmatpush.bf16.msra.mxu0 0
    %2406 = vmatpush.bf16.msra.mxu0 0
    %2407 = vmatpush.bf16.msra.mxu0 0
    %2408 = vmatpush.bf16.msra.mxu0 0
    %2409 = vmatpush.bf16.msra.mxu0 0
    %2410 = vmatpush.bf16.msra.mxu0 0
    %2411 = vmatpush.bf16.msra.mxu0 0
    %2412 = vmatpush.bf16.msra.mxu0 %v2403
    %2413 = vmatmul.bf16.gmra.mxu0 %v2400
    %v2414 = vpop.f32.mrf.mxu0
    %v2415 = vadd.f32 0.0, %v2414
    %v2416 = vpop.f32.mrf.mxu0
    %v2417 = vadd.f32 0.0, %v2416
    %2418 = vdwg.mxu0
    %v2419 = vadd.f32 %v2284, %v2415
    %v2420 = vadd.f32 %v2285, %v2417
    %v2422 = vperm.slane %v1882, 0
    %v2424 = vadd.f32 %v2419, %v2422
    %v2425 = vadd.f32 %v2420, %v2422
    %v2426 = vadd.f32 %v1787, %v2424
    %v2427 = vadd.f32 %v1788, %v2425
    %s2428 = scalar_lea.vmem %s8, 1
    %v2429 = vld [vmem:[%s2428] sm:$0x1]
    %s2430 = scalar_lea.vmem %s9, 1
    %v2431 = vld [vmem:[%s2430] sm:$0x1]
    %v2432 = vmul.f32 %v2426, %v83
    %v2433 = vmul.f32 %v2427, %v83
    %2434 = vadd.xlane.f32.xlu0 %v2432
    %v2435 = vpop.xlane.xlu0 %2434
    %2436 = vadd.xlane.f32.xlu0 %v2433
    %v2437 = vpop.xlane.xlu0 %2436
    %v2438 = vmul.f32 %v2435, 0.03125
    %v2439 = vmul.f32 %v2437, 0.03125
    %v2440 = vsub.f32 %v2432, %v2438
    %v2441 = vsub.f32 %v2433, %v2439
    %v2442 = vmul.f32 %v2440, %v83
    %v2443 = vmul.f32 %v2441, %v83
    %v2444 = vmul.f32 %v2442, %v2442
    %v2445 = vmul.f32 %v2443, %v2443
    %2446 = vadd.xlane.f32.xlu0 %v2444
    %v2447 = vpop.xlane.xlu0 %2446
    %2448 = vadd.xlane.f32.xlu0 %v2445
    %v2449 = vpop.xlane.xlu0 %2448
    %v2450 = vmul.f32 %v2447, 0.03125
    %v2451 = vmul.f32 %v2449, 0.03125
    %v2452 = vadd.f32 %v2450, 1e-05
    %v2453 = vadd.f32 %v2451, 1e-05
    %v2454 = vrsqrt.pop %v2452
    %v2455 = vmul.f32 %v2454, %v2452
    %v2456 = vmul.f32 %v2455, %v2454
    %v2457 = vmul.f32 0.5, %v2456
    %v2458 = vsub.f32 1.5, %v2457
    %v2459 = vmul.f32 %v2454, %v2458
    %vm2460 = vweird.f32 %v2452
    %vm2461 = vweird.f32 %v2454
    %vm2462 = vmor %vm2460, %vm2461
    %v2463 = vsel %vm2462, %v2454, %v2459
    %v2464 = vrsqrt.pop %v2453
    %v2465 = vmul.f32 %v2464, %v2453
    %v2466 = vmul.f32 %v2465, %v2464
    %v2467 = vmul.f32 0.5, %v2466
    %v2468 = vsub.f32 1.5, %v2467
    %v2469 = vmul.f32 %v2464, %v2468
    %vm2470 = vweird.f32 %v2453
    %vm2471 = vweird.f32 %v2464
    %vm2472 = vmor %vm2470, %vm2471
    %v2473 = vsel %vm2472, %v2464, %v2469
    %v2474 = vmul.f32 %v2442, %v2463
    %v2475 = vmul.f32 %v2443, %v2473
    %v2477 = vperm.slane %v2429, 0
    %v2479 = vmul.f32 %v2474, %v2477
    %v2480 = vmul.f32 %v2475, %v2477
    %v2482 = vperm.slane %v2431, 0
    %v2484 = vadd.f32 %v2479, %v2482
    %v2485 = vadd.f32 %v2480, %v2482
    %v2486 = vpack.c.bf16 %v2485, %v2484
    %s2487 = scalar_lea.vmem %s10, 64
    %v2488 = vld [vmem:[%s2487] sm:$0xf]
    %v2489 = vld [vmem:[%s2487 + $0x4] sm:$0xf]
    %v2490 = vld [vmem:[%s2487 + $0x8] sm:$0xf]
    %v2491 = vld [vmem:[%s2487 + $0xc] sm:$0xf]
    %v2492 = vld [vmem:[%s2487 + $0x10] sm:$0xf]
    %v2493 = vld [vmem:[%s2487 + $0x14] sm:$0xf]
    %v2494 = vld [vmem:[%s2487 + $0x18] sm:$0xf]
    %v2495 = vld [vmem:[%s2487 + $0x1c] sm:$0xf]
    %v2496 = vld [vmem:[%s2487 + $0x20] sm:$0xf]
    %v2497 = vld [vmem:[%s2487 + $0x24] sm:$0xf]
    %v2498 = vld [vmem:[%s2487 + $0x28] sm:$0xf]
    %v2499 = vld [vmem:[%s2487 + $0x2c] sm:$0xf]
    %v2500 = vld [vmem:[%s2487 + $0x30] sm:$0xf]
    %v2501 = vld [vmem:[%s2487 + $0x34] sm:$0xf]
    %v2502 = vld [vmem:[%s2487 + $0x38] sm:$0xf]
    %v2503 = vld [vmem:[%s2487 + $0x3c] sm:$0xf]
    %s2504 = scalar_lea.vmem %s11, 1
    %v2505 = vld [vmem:[%s2504] sm:$0x1]
    %v2507 = vperm.slane %v2505, 0
    %v2525 = vunpack.c.l.b16 %v2488
    %v2526 = vunpack.c.l.b16 %v2489
    %v2527 = vunpack.c.l.b16 %v2490
    %v2528 = vunpack.c.l.b16 %v2491
    %v2529 = vunpack.c.l.b16 %v2492
    %v2530 = vunpack.c.l.b16 %v2493
    %v2531 = vunpack.c.l.b16 %v2494
    %v2532 = vunpack.c.l.b16 %v2495
    %v2533 = vunpack.c.l.b16 %v2496
    %v2534 = vunpack.c.l.b16 %v2497
    %v2535 = vunpack.c.l.b16 %v2498
    %v2536 = vunpack.c.l.b16 %v2499
    %v2537 = vunpack.c.l.b16 %v2500
    %v2538 = vunpack.c.l.b16 %v2501
    %v2539 = vunpack.c.l.b16 %v2502
    %v2540 = vunpack.c.l.b16 %v2503
    %v2541 = vpack.c.b16 %v2526, %v2525
    %v2542 = vpack.c.b16 %v2528, %v2527
    %v2543 = vpack.c.b16 %v2530, %v2529
    %v2544 = vpack.c.b16 %v2532, %v2531
    %v2545 = vpack.c.b16 %v2534, %v2533
    %v2546 = vpack.c.b16 %v2536, %v2535
    %v2547 = vpack.c.b16 %v2538, %v2537
    %v2548 = vpack.c.b16 %v2540, %v2539
    %2557 = vmatpush.bf16.msra.mxu0 %v2548
    %2558 = vmatpush.bf16.msra.mxu0 %v2547
    %2559 = vmatpush.bf16.msra.mxu0 %v2546
    %2560 = vmatpush.bf16.msra.mxu0 %v2545
    %2561 = vmatpush.bf16.msra.mxu0 %v2544
    %2562 = vmatpush.bf16.msra.mxu0 %v2543
    %2563 = vmatpush.bf16.msra.mxu0 %v2542
    %2564 = vmatpush.bf16.msra.mxu0 %v2541
    %2565 = vmatmul.bf16.gmra.mxu0 %v2486
    %v2566 = vpop.f32.mrf.mxu0
    %v2567 = vadd.f32 %v2507, %v2566
    %v2568 = vpop.f32.mrf.mxu0
    %v2569 = vadd.f32 %v2507, %v2568
    %2570 = vdwg.mxu0
    %v2571 = vpack.c.bf16 %v2567, %v2567
    %v2572 = vpack.c.bf16 %v2569, %v2569
    %s2573 = scalar_lea.vmem %s12, 64
    %v2574 = vld [vmem:[%s2573] sm:$0xf]
    %v2575 = vld [vmem:[%s2573 + $0x4] sm:$0xf]
    %v2576 = vld [vmem:[%s2573 + $0x8] sm:$0xf]
    %v2577 = vld [vmem:[%s2573 + $0xc] sm:$0xf]
    %v2578 = vld [vmem:[%s2573 + $0x10] sm:$0xf]
    %v2579 = vld [vmem:[%s2573 + $0x14] sm:$0xf]
    %v2580 = vld [vmem:[%s2573 + $0x18] sm:$0xf]
    %v2581 = vld [vmem:[%s2573 + $0x1c] sm:$0xf]
    %v2582 = vld [vmem:[%s2573 + $0x20] sm:$0xf]
    %v2583 = vld [vmem:[%s2573 + $0x24] sm:$0xf]
    %v2584 = vld [vmem:[%s2573 + $0x28] sm:$0xf]
    %v2585 = vld [vmem:[%s2573 + $0x2c] sm:$0xf]
    %v2586 = vld [vmem:[%s2573 + $0x30] sm:$0xf]
    %v2587 = vld [vmem:[%s2573 + $0x34] sm:$0xf]
    %v2588 = vld [vmem:[%s2573 + $0x38] sm:$0xf]
    %v2589 = vld [vmem:[%s2573 + $0x3c] sm:$0xf]
    %s2590 = scalar_lea.vmem %s13, 1
    %v2591 = vld [vmem:[%s2590] sm:$0x1]
    %v2593 = vperm.slane %v2591, 0
    %v2611 = vunpack.c.l.b16 %v2574
    %v2612 = vunpack.c.l.b16 %v2575
    %v2613 = vunpack.c.l.b16 %v2576
    %v2614 = vunpack.c.l.b16 %v2577
    %v2615 = vunpack.c.l.b16 %v2578
    %v2616 = vunpack.c.l.b16 %v2579
    %v2617 = vunpack.c.l.b16 %v2580
    %v2618 = vunpack.c.l.b16 %v2581
    %v2619 = vunpack.c.l.b16 %v2582
    %v2620 = vunpack.c.l.b16 %v2583
    %v2621 = vunpack.c.l.b16 %v2584
    %v2622 = vunpack.c.l.b16 %v2585
    %v2623 = vunpack.c.l.b16 %v2586
    %v2624 = vunpack.c.l.b16 %v2587
    %v2625 = vunpack.c.l.b16 %v2588
    %v2626 = vunpack.c.l.b16 %v2589
    %v2627 = vpack.c.b16 %v2612, %v2611
    %v2628 = vpack.c.b16 %v2614, %v2613
    %v2629 = vpack.c.b16 %v2616, %v2615
    %v2630 = vpack.c.b16 %v2618, %v2617
    %v2631 = vpack.c.b16 %v2620, %v2619
    %v2632 = vpack.c.b16 %v2622, %v2621
    %v2633 = vpack.c.b16 %v2624, %v2623
    %v2634 = vpack.c.b16 %v2626, %v2625
    %2643 = vmatpush.bf16.msra.mxu0 %v2634
    %2644 = vmatpush.bf16.msra.mxu0 %v2633
    %2645 = vmatpush.bf16.msra.mxu0 %v2632
    %2646 = vmatpush.bf16.msra.mxu0 %v2631
    %2647 = vmatpush.bf16.msra.mxu0 %v2630
    %2648 = vmatpush.bf16.msra.mxu0 %v2629
    %2649 = vmatpush.bf16.msra.mxu0 %v2628
    %2650 = vmatpush.bf16.msra.mxu0 %v2627
    %2651 = vmatmul.bf16.gmra.mxu0 %v88
    %v2652 = vpop.f32.mrf.mxu0
    %v2653 = vadd.f32 %v2593, %v2652
    %v2654 = vpop.f32.mrf.mxu0
    %v2655 = vadd.f32 %v2593, %v2654
    %2656 = vdwg.mxu0
    %v2657 = vpack.c.bf16 %v2653, %v2653
    %v2658 = vpack.c.bf16 %v2655, %v2655
    %s2659 = scalar_lea.vmem %s14, 16
    %v2660 = vld [vmem:[%s2659] sm:$0xf]
    %v2661 = vld [vmem:[%s2659 + $0x4] sm:$0xf]
    %v2662 = vld [vmem:[%s2659 + $0x8] sm:$0xf]
    %v2663 = vld [vmem:[%s2659 + $0xc] sm:$0xf]
    %s2664 = scalar_lea.vmem %s15, 1
    %v2665 = vld [vmem:[%s2664] sm:$0x1]
    %v2667 = vsel %vm188, %v2571, 0
    %v2670 = vsel %vm188, %v2657, 0
    %2672 = vmatpush.bf16.xpose.msra.mxu0 0
    %2673 = vmatpush.bf16.xpose.msra.mxu0 0
    %2674 = vmatpush.bf16.xpose.msra.mxu0 0
    %2675 = vmatpush.bf16.xpose.msra.mxu0 0
    %2676 = vmatpush.bf16.xpose.msra.mxu0 0
    %2677 = vmatpush.bf16.xpose.msra.mxu0 0
    %2678 = vmatpush.bf16.xpose.msra.mxu0 0
    %2679 = vmatpush.bf16.xpose.msra.mxu0 %v2670
    %2680 = vmatmul.bf16.gmra.mxu0 %v2667
    %v2681 = vpop.f32.mrf.mxu0
    %v2682 = vadd.f32 %v91, %v2681
    %v2683 = vpop.f32.mrf.mxu0
    %2684 = vdwg.mxu0
    %v2686 = vsel %vm188, %v2572, 0
    %v2689 = vsel %vm188, %v2658, 0
    %2691 = vmatpush.bf16.xpose.msra.mxu0 0
    %2692 = vmatpush.bf16.xpose.msra.mxu0 0
    %2693 = vmatpush.bf16.xpose.msra.mxu0 0
    %2694 = vmatpush.bf16.xpose.msra.mxu0 0
    %2695 = vmatpush.bf16.xpose.msra.mxu0 0
    %2696 = vmatpush.bf16.xpose.msra.mxu0 0
    %2697 = vmatpush.bf16.xpose.msra.mxu0 0
    %2698 = vmatpush.bf16.xpose.msra.mxu0 %v2689
    %2699 = vmatmul.bf16.gmra.mxu0 %v2686
    %v2700 = vpop.f32.mrf.mxu0
    %v2701 = vadd.f32 %v92, %v2700
    %v2702 = vpop.f32.mrf.mxu0
    %2703 = vdwg.mxu0
    %v2704 = vsel %vm188, %v2682, -inf
    %2705 = vmax.xlane.f32.xlu0 %v2704
    %v2706 = vpop.xlane.xlu0 %2705
    %v2707 = vsel %vm188, %v2701, -inf
    %2708 = vmax.xlane.f32.xlu0 %v2707
    %v2709 = vpop.xlane.xlu0 %2708
    %v2710 = vsub.f32 %v2682, %v2706
    %v2711 = vsub.f32 %v2701, %v2709
    %v2712 = vmul.f32 %v2710, 1.442695
    %v2713 = vpow.pop %v2712
    %v2714 = vmul.f32 %v2711, 1.442695
    %v2715 = vpow.pop %v2714
    %v2716 = vsel %vm188, %v2713, 0.0
    %2717 = vadd.xlane.f32.xlu0 %v2716
    %v2718 = vpop.xlane.xlu0 %2717
    %v2719 = vsel %vm188, %v2715, 0.0
    %2720 = vadd.xlane.f32.xlu0 %v2719
    %v2721 = vpop.xlane.xlu0 %2720
    %v2722 = vrcp.pop %v2718
    %v2723 = vrcp.pop %v2721
    %v2724 = vmul.f32 %v2713, %v2722
    %v2725 = vmul.f32 %v2715, %v2723
    %v2726 = vpack.c.bf16 %v2724, %v2724
    %v2727 = vpack.c.bf16 %v2725, %v2725
    %v2729 = vunpack.c.l.b16 %v2657
    %v2730 = vpack.c.b16 %v2729, %v2729
    %2731 = vrot.lane.b32.xlu0 %v2730, 96
    %v2732 = vpop.permute.xlu0 %2731
    %v2734 = vsel %vm188, %v2726, 0
    %v2737 = vsel %vm261, %v2732, 0
    %2739 = vmatpush.bf16.msra.mxu0 0
    %2740 = vmatpush.bf16.msra.mxu0 0
    %2741 = vmatpush.bf16.msra.mxu0 0
    %2742 = vmatpush.bf16.msra.mxu0 0
    %2743 = vmatpush.bf16.msra.mxu0 0
    %2744 = vmatpush.bf16.msra.mxu0 0
    %2745 = vmatpush.bf16.msra.mxu0 0
    %2746 = vmatpush.bf16.msra.mxu0 %v2737
    %2747 = vmatmul.bf16.gmra.mxu0 %v2734
    %v2748 = vpop.f32.mrf.mxu0
    %v2749 = vadd.f32 0.0, %v2748
    %v2750 = vpop.f32.mrf.mxu0
    %2751 = vdwg.mxu0
    %v2753 = vunpack.c.l.b16 %v2658
    %v2754 = vpack.c.b16 %v2753, %v2753
    %2755 = vrot.lane.b32.xlu0 %v2754, 96
    %v2756 = vpop.permute.xlu0 %2755
    %v2758 = vsel %vm188, %v2727, 0
    %v2761 = vsel %vm261, %v2756, 0
    %2763 = vmatpush.bf16.msra.mxu0 0
    %2764 = vmatpush.bf16.msra.mxu0 0
    %2765 = vmatpush.bf16.msra.mxu0 0
    %2766 = vmatpush.bf16.msra.mxu0 0
    %2767 = vmatpush.bf16.msra.mxu0 0
    %2768 = vmatpush.bf16.msra.mxu0 0
    %2769 = vmatpush.bf16.msra.mxu0 0
    %2770 = vmatpush.bf16.msra.mxu0 %v2761
    %2771 = vmatmul.bf16.gmra.mxu0 %v2758
    %v2772 = vpop.f32.mrf.mxu0
    %v2773 = vadd.f32 0.0, %v2772
    %v2774 = vpop.f32.mrf.mxu0
    %2775 = vdwg.mxu0
    %v2776 = vpack.c.bf16 %v2773, %v2749
    %v2778 = vunpack.c.l.b16 %v2571
    %v2779 = vpack.c.b16 %v2778, %v2778
    %2780 = vrot.lane.b32.xlu0 %v2779, 120
    %v2781 = vpop.permute.xlu0 %2780
    %2782 = vrot.lane.b32.xlu0 %v2730, 120
    %v2783 = vpop.permute.xlu0 %2782
    %v2785 = vsel %vm188, %v2781, 0
    %v2788 = vsel %vm188, %v2783, 0
    %2790 = vmatpush.bf16.xpose.msra.mxu0 0
    %2791 = vmatpush.bf16.xpose.msra.mxu0 0
    %2792 = vmatpush.bf16.xpose.msra.mxu0 0
    %2793 = vmatpush.bf16.xpose.msra.mxu0 0
    %2794 = vmatpush.bf16.xpose.msra.mxu0 0
    %2795 = vmatpush.bf16.xpose.msra.mxu0 0
    %2796 = vmatpush.bf16.xpose.msra.mxu0 0
    %2797 = vmatpush.bf16.xpose.msra.mxu0 %v2788
    %2798 = vmatmul.bf16.gmra.mxu0 %v2785
    %v2799 = vpop.f32.mrf.mxu0
    %v2800 = vadd.f32 %v91, %v2799
    %v2801 = vpop.f32.mrf.mxu0
    %2802 = vdwg.mxu0
    %v2804 = vunpack.c.l.b16 %v2572
    %v2805 = vpack.c.b16 %v2804, %v2804
    %2806 = vrot.lane.b32.xlu0 %v2805, 120
    %v2807 = vpop.permute.xlu0 %2806
    %2808 = vrot.lane.b32.xlu0 %v2754, 120
    %v2809 = vpop.permute.xlu0 %2808
    %v2811 = vsel %vm188, %v2807, 0
    %v2814 = vsel %vm188, %v2809, 0
    %2816 = vmatpush.bf16.xpose.msra.mxu0 0
    %2817 = vmatpush.bf16.xpose.msra.mxu0 0
    %2818 = vmatpush.bf16.xpose.msra.mxu0 0
    %2819 = vmatpush.bf16.xpose.msra.mxu0 0
    %2820 = vmatpush.bf16.xpose.msra.mxu0 0
    %2821 = vmatpush.bf16.xpose.msra.mxu0 0
    %2822 = vmatpush.bf16.xpose.msra.mxu0 0
    %2823 = vmatpush.bf16.xpose.msra.mxu0 %v2814
    %2824 = vmatmul.bf16.gmra.mxu0 %v2811
    %v2825 = vpop.f32.mrf.mxu0
    %v2826 = vadd.f32 %v92, %v2825
    %v2827 = vpop.f32.mrf.mxu0
    %2828 = vdwg.mxu0
    %v2829 = vsel %vm188, %v2800, -inf
    %2830 = vmax.xlane.f32.xlu0 %v2829
    %v2831 = vpop.xlane.xlu0 %2830
    %v2832 = vsel %vm188, %v2826, -inf
    %2833 = vmax.xlane.f32.xlu0 %v2832
    %v2834 = vpop.xlane.xlu0 %2833
    %v2835 = vsub.f32 %v2800, %v2831
    %v2836 = vsub.f32 %v2826, %v2834
    %v2837 = vmul.f32 %v2835, 1.442695
    %v2838 = vpow.pop %v2837
    %v2839 = vmul.f32 %v2836, 1.442695
    %v2840 = vpow.pop %v2839
    %v2841 = vsel %vm188, %v2838, 0.0
    %2842 = vadd.xlane.f32.xlu0 %v2841
    %v2843 = vpop.xlane.xlu0 %2842
    %v2844 = vsel %vm188, %v2840, 0.0
    %2845 = vadd.xlane.f32.xlu0 %v2844
    %v2846 = vpop.xlane.xlu0 %2845
    %v2847 = vrcp.pop %v2843
    %v2848 = vrcp.pop %v2846
    %v2849 = vmul.f32 %v2838, %v2847
    %v2850 = vmul.f32 %v2840, %v2848
    %v2851 = vpack.c.bf16 %v2849, %v2849
    %v2852 = vpack.c.bf16 %v2850, %v2850
    %2853 = vrot.lane.b32.xlu0 %v2730, 88
    %v2854 = vpop.permute.xlu0 %2853
    %v2856 = vsel %vm188, %v2851, 0
    %v2859 = vsel %vm261, %v2854, 0
    %2861 = vmatpush.bf16.msra.mxu0 0
    %2862 = vmatpush.bf16.msra.mxu0 0
    %2863 = vmatpush.bf16.msra.mxu0 0
    %2864 = vmatpush.bf16.msra.mxu0 0
    %2865 = vmatpush.bf16.msra.mxu0 0
    %2866 = vmatpush.bf16.msra.mxu0 0
    %2867 = vmatpush.bf16.msra.mxu0 0
    %2868 = vmatpush.bf16.msra.mxu0 %v2859
    %2869 = vmatmul.bf16.gmra.mxu0 %v2856
    %v2870 = vpop.f32.mrf.mxu0
    %v2871 = vadd.f32 0.0, %v2870
    %v2872 = vpop.f32.mrf.mxu0
    %2873 = vdwg.mxu0
    %2874 = vrot.lane.b32.xlu0 %v2754, 88
    %v2875 = vpop.permute.xlu0 %2874
    %v2877 = vsel %vm188, %v2852, 0
    %v2880 = vsel %vm261, %v2875, 0
    %2882 = vmatpush.bf16.msra.mxu0 0
    %2883 = vmatpush.bf16.msra.mxu0 0
    %2884 = vmatpush.bf16.msra.mxu0 0
    %2885 = vmatpush.bf16.msra.mxu0 0
    %2886 = vmatpush.bf16.msra.mxu0 0
    %2887 = vmatpush.bf16.msra.mxu0 0
    %2888 = vmatpush.bf16.msra.mxu0 0
    %2889 = vmatpush.bf16.msra.mxu0 %v2880
    %2890 = vmatmul.bf16.gmra.mxu0 %v2877
    %v2891 = vpop.f32.mrf.mxu0
    %v2892 = vadd.f32 0.0, %v2891
    %v2893 = vpop.f32.mrf.mxu0
    %2894 = vdwg.mxu0
    %v2895 = vpack.c.bf16 %v2892, %v2871
    %v2897 = vsel %vm188, %v2895, 0
    %v2900 = vsel %vm261, %v2661, 0
    %2902 = vmatpush.bf16.msra.mxu0 0
    %2903 = vmatpush.bf16.msra.mxu0 0
    %2904 = vmatpush.bf16.msra.mxu0 0
    %2905 = vmatpush.bf16.msra.mxu0 0
    %2906 = vmatpush.bf16.msra.mxu0 0
    %2907 = vmatpush.bf16.msra.mxu0 0
    %2908 = vmatpush.bf16.msra.mxu0 0
    %2909 = vmatpush.bf16.msra.mxu0 %v2900
    %2910 = vmatmul.bf16.gmra.mxu0 %v2897
    %v2911 = vpop.f32.mrf.mxu0
    %v2912 = vadd.f32 0.0, %v2911
    %v2913 = vpop.f32.mrf.mxu0
    %v2914 = vadd.f32 0.0, %v2913
    %2915 = vdwg.mxu0
    %v2917 = vsel %vm188, %v2776, 0
    %v2920 = vsel %vm261, %v2660, 0
    %2922 = vmatpush.bf16.msra.mxu0 0
    %2923 = vmatpush.bf16.msra.mxu0 0
    %2924 = vmatpush.bf16.msra.mxu0 0
    %2925 = vmatpush.bf16.msra.mxu0 0
    %2926 = vmatpush.bf16.msra.mxu0 0
    %2927 = vmatpush.bf16.msra.mxu0 0
    %2928 = vmatpush.bf16.msra.mxu0 0
    %2929 = vmatpush.bf16.msra.mxu0 %v2920
    %2930 = vmatmul.bf16.gmra.mxu0 %v2917
    %v2931 = vpop.f32.mrf.mxu0
    %v2932 = vadd.f32 %v2912, %v2931
    %v2933 = vpop.f32.mrf.mxu0
    %v2934 = vadd.f32 %v2914, %v2933
    %2935 = vdwg.mxu0
    %2936 = vrot.lane.b32.xlu0 %v2779, 112
    %v2937 = vpop.permute.xlu0 %2936
    %2938 = vrot.lane.b32.xlu0 %v2730, 112
    %v2939 = vpop.permute.xlu0 %2938
    %v2941 = vsel %vm188, %v2937, 0
    %v2944 = vsel %vm188, %v2939, 0
    %2946 = vmatpush.bf16.xpose.msra.mxu0 0
    %2947 = vmatpush.bf16.xpose.msra.mxu0 0
    %2948 = vmatpush.bf16.xpose.msra.mxu0 0
    %2949 = vmatpush.bf16.xpose.msra.mxu0 0
    %2950 = vmatpush.bf16.xpose.msra.mxu0 0
    %2951 = vmatpush.bf16.xpose.msra.mxu0 0
    %2952 = vmatpush.bf16.xpose.msra.mxu0 0
    %2953 = vmatpush.bf16.xpose.msra.mxu0 %v2944
    %2954 = vmatmul.bf16.gmra.mxu0 %v2941
    %v2955 = vpop.f32.mrf.mxu0
    %v2956 = vadd.f32 %v91, %v2955
    %v2957 = vpop.f32.mrf.mxu0
    %2958 = vdwg.mxu0
    %2959 = vrot.lane.b32.xlu0 %v2805, 112
    %v2960 = vpop.permute.xlu0 %2959
    %2961 = vrot.lane.b32.xlu0 %v2754, 112
    %v2962 = vpop.permute.xlu0 %2961
    %v2964 = vsel %vm188, %v2960, 0
    %v2967 = vsel %vm188, %v2962, 0
    %2969 = vmatpush.bf16.xpose.msra.mxu0 0
    %2970 = vmatpush.bf16.xpose.msra.mxu0 0
    %2971 = vmatpush.bf16.xpose.msra.mxu0 0
    %2972 = vmatpush.bf16.xpose.msra.mxu0 0
    %2973 = vmatpush.bf16.xpose.msra.mxu0 0
    %2974 = vmatpush.bf16.xpose.msra.mxu0 0
    %2975 = vmatpush.bf16.xpose.msra.mxu0 0
    %2976 = vmatpush.bf16.xpose.msra.mxu0 %v2967
    %2977 = vmatmul.bf16.gmra.mxu0 %v2964
    %v2978 = vpop.f32.mrf.mxu0
    %v2979 = vadd.f32 %v92, %v2978
    %v2980 = vpop.f32.mrf.mxu0
    %2981 = vdwg.mxu0
    %v2982 = vsel %vm188, %v2956, -inf
    %2983 = vmax.xlane.f32.xlu0 %v2982
    %v2984 = vpop.xlane.xlu0 %2983
    %v2985 = vsel %vm188, %v2979, -inf
    %2986 = vmax.xlane.f32.xlu0 %v2985
    %v2987 = vpop.xlane.xlu0 %2986
    %v2988 = vsub.f32 %v2956, %v2984
    %v2989 = vsub.f32 %v2979, %v2987
    %v2990 = vmul.f32 %v2988, 1.442695
    %v2991 = vpow.pop %v2990
    %v2992 = vmul.f32 %v2989, 1.442695
    %v2993 = vpow.pop %v2992
    %v2994 = vsel %vm188, %v2991, 0.0
    %2995 = vadd.xlane.f32.xlu0 %v2994
    %v2996 = vpop.xlane.xlu0 %2995
    %v2997 = vsel %vm188, %v2993, 0.0
    %2998 = vadd.xlane.f32.xlu0 %v2997
    %v2999 = vpop.xlane.xlu0 %2998
    %v3000 = vrcp.pop %v2996
    %v3001 = vrcp.pop %v2999
    %v3002 = vmul.f32 %v2991, %v3000
    %v3003 = vmul.f32 %v2993, %v3001
    %v3004 = vpack.c.bf16 %v3002, %v3002
    %v3005 = vpack.c.bf16 %v3003, %v3003
    %3006 = vrot.lane.b32.xlu0 %v2730, 80
    %v3007 = vpop.permute.xlu0 %3006
    %v3009 = vsel %vm188, %v3004, 0
    %v3012 = vsel %vm261, %v3007, 0
    %3014 = vmatpush.bf16.msra.mxu0 0
    %3015 = vmatpush.bf16.msra.mxu0 0
    %3016 = vmatpush.bf16.msra.mxu0 0
    %3017 = vmatpush.bf16.msra.mxu0 0
    %3018 = vmatpush.bf16.msra.mxu0 0
    %3019 = vmatpush.bf16.msra.mxu0 0
    %3020 = vmatpush.bf16.msra.mxu0 0
    %3021 = vmatpush.bf16.msra.mxu0 %v3012
    %3022 = vmatmul.bf16.gmra.mxu0 %v3009
    %v3023 = vpop.f32.mrf.mxu0
    %v3024 = vadd.f32 0.0, %v3023
    %v3025 = vpop.f32.mrf.mxu0
    %3026 = vdwg.mxu0
    %3027 = vrot.lane.b32.xlu0 %v2754, 80
    %v3028 = vpop.permute.xlu0 %3027
    %v3030 = vsel %vm188, %v3005, 0
    %v3033 = vsel %vm261, %v3028, 0
    %3035 = vmatpush.bf16.msra.mxu0 0
    %3036 = vmatpush.bf16.msra.mxu0 0
    %3037 = vmatpush.bf16.msra.mxu0 0
    %3038 = vmatpush.bf16.msra.mxu0 0
    %3039 = vmatpush.bf16.msra.mxu0 0
    %3040 = vmatpush.bf16.msra.mxu0 0
    %3041 = vmatpush.bf16.msra.mxu0 0
    %3042 = vmatpush.bf16.msra.mxu0 %v3033
    %3043 = vmatmul.bf16.gmra.mxu0 %v3030
    %v3044 = vpop.f32.mrf.mxu0
    %v3045 = vadd.f32 0.0, %v3044
    %v3046 = vpop.f32.mrf.mxu0
    %3047 = vdwg.mxu0
    %v3048 = vpack.c.bf16 %v3045, %v3024
    %v3050 = vsel %vm188, %v3048, 0
    %v3053 = vsel %vm261, %v2662, 0
    %3055 = vmatpush.bf16.msra.mxu0 0
    %3056 = vmatpush.bf16.msra.mxu0 0
    %3057 = vmatpush.bf16.msra.mxu0 0
    %3058 = vmatpush.bf16.msra.mxu0 0
    %3059 = vmatpush.bf16.msra.mxu0 0
    %3060 = vmatpush.bf16.msra.mxu0 0
    %3061 = vmatpush.bf16.msra.mxu0 0
    %3062 = vmatpush.bf16.msra.mxu0 %v3053
    %3063 = vmatmul.bf16.gmra.mxu0 %v3050
    %v3064 = vpop.f32.mrf.mxu0
    %v3065 = vadd.f32 0.0, %v3064
    %v3066 = vpop.f32.mrf.mxu0
    %v3067 = vadd.f32 0.0, %v3066
    %3068 = vdwg.mxu0
    %v3069 = vadd.f32 %v2932, %v3065
    %v3070 = vadd.f32 %v2934, %v3067
    %3071 = vrot.lane.b32.xlu0 %v2779, 104
    %v3072 = vpop.permute.xlu0 %3071
    %3073 = vrot.lane.b32.xlu0 %v2730, 104
    %v3074 = vpop.permute.xlu0 %3073
    %v3076 = vsel %vm188, %v3072, 0
    %v3079 = vsel %vm188, %v3074, 0
    %3081 = vmatpush.bf16.xpose.msra.mxu0 0
    %3082 = vmatpush.bf16.xpose.msra.mxu0 0
    %3083 = vmatpush.bf16.xpose.msra.mxu0 0
    %3084 = vmatpush.bf16.xpose.msra.mxu0 0
    %3085 = vmatpush.bf16.xpose.msra.mxu0 0
    %3086 = vmatpush.bf16.xpose.msra.mxu0 0
    %3087 = vmatpush.bf16.xpose.msra.mxu0 0
    %3088 = vmatpush.bf16.xpose.msra.mxu0 %v3079
    %3089 = vmatmul.bf16.gmra.mxu0 %v3076
    %v3090 = vpop.f32.mrf.mxu0
    %v3091 = vadd.f32 %v91, %v3090
    %v3092 = vpop.f32.mrf.mxu0
    %3093 = vdwg.mxu0
    %3094 = vrot.lane.b32.xlu0 %v2805, 104
    %v3095 = vpop.permute.xlu0 %3094
    %3096 = vrot.lane.b32.xlu0 %v2754, 104
    %v3097 = vpop.permute.xlu0 %3096
    %v3099 = vsel %vm188, %v3095, 0
    %v3102 = vsel %vm188, %v3097, 0
    %3104 = vmatpush.bf16.xpose.msra.mxu0 0
    %3105 = vmatpush.bf16.xpose.msra.mxu0 0
    %3106 = vmatpush.bf16.xpose.msra.mxu0 0
    %3107 = vmatpush.bf16.xpose.msra.mxu0 0
    %3108 = vmatpush.bf16.xpose.msra.mxu0 0
    %3109 = vmatpush.bf16.xpose.msra.mxu0 0
    %3110 = vmatpush.bf16.xpose.msra.mxu0 0
    %3111 = vmatpush.bf16.xpose.msra.mxu0 %v3102
    %3112 = vmatmul.bf16.gmra.mxu0 %v3099
    %v3113 = vpop.f32.mrf.mxu0
    %v3114 = vadd.f32 %v92, %v3113
    %v3115 = vpop.f32.mrf.mxu0
    %3116 = vdwg.mxu0
    %v3117 = vsel %vm188, %v3091, -inf
    %3118 = vmax.xlane.f32.xlu0 %v3117
    %v3119 = vpop.xlane.xlu0 %3118
    %v3120 = vsel %vm188, %v3114, -inf
    %3121 = vmax.xlane.f32.xlu0 %v3120
    %v3122 = vpop.xlane.xlu0 %3121
    %v3123 = vsub.f32 %v3091, %v3119
    %v3124 = vsub.f32 %v3114, %v3122
    %v3125 = vmul.f32 %v3123, 1.442695
    %v3126 = vpow.pop %v3125
    %v3127 = vmul.f32 %v3124, 1.442695
    %v3128 = vpow.pop %v3127
    %v3129 = vsel %vm188, %v3126, 0.0
    %3130 = vadd.xlane.f32.xlu0 %v3129
    %v3131 = vpop.xlane.xlu0 %3130
    %v3132 = vsel %vm188, %v3128, 0.0
    %3133 = vadd.xlane.f32.xlu0 %v3132
    %v3134 = vpop.xlane.xlu0 %3133
    %v3135 = vrcp.pop %v3131
    %v3136 = vrcp.pop %v3134
    %v3137 = vmul.f32 %v3126, %v3135
    %v3138 = vmul.f32 %v3128, %v3136
    %v3139 = vpack.c.bf16 %v3137, %v3137
    %v3140 = vpack.c.bf16 %v3138, %v3138
    %3141 = vrot.lane.b32.xlu0 %v2730, 72
    %v3142 = vpop.permute.xlu0 %3141
    %v3144 = vsel %vm188, %v3139, 0
    %v3147 = vsel %vm261, %v3142, 0
    %3149 = vmatpush.bf16.msra.mxu0 0
    %3150 = vmatpush.bf16.msra.mxu0 0
    %3151 = vmatpush.bf16.msra.mxu0 0
    %3152 = vmatpush.bf16.msra.mxu0 0
    %3153 = vmatpush.bf16.msra.mxu0 0
    %3154 = vmatpush.bf16.msra.mxu0 0
    %3155 = vmatpush.bf16.msra.mxu0 0
    %3156 = vmatpush.bf16.msra.mxu0 %v3147
    %3157 = vmatmul.bf16.gmra.mxu0 %v3144
    %v3158 = vpop.f32.mrf.mxu0
    %v3159 = vadd.f32 0.0, %v3158
    %v3160 = vpop.f32.mrf.mxu0
    %3161 = vdwg.mxu0
    %3162 = vrot.lane.b32.xlu0 %v2754, 72
    %v3163 = vpop.permute.xlu0 %3162
    %v3165 = vsel %vm188, %v3140, 0
    %v3168 = vsel %vm261, %v3163, 0
    %3170 = vmatpush.bf16.msra.mxu0 0
    %3171 = vmatpush.bf16.msra.mxu0 0
    %3172 = vmatpush.bf16.msra.mxu0 0
    %3173 = vmatpush.bf16.msra.mxu0 0
    %3174 = vmatpush.bf16.msra.mxu0 0
    %3175 = vmatpush.bf16.msra.mxu0 0
    %3176 = vmatpush.bf16.msra.mxu0 0
    %3177 = vmatpush.bf16.msra.mxu0 %v3168
    %3178 = vmatmul.bf16.gmra.mxu0 %v3165
    %v3179 = vpop.f32.mrf.mxu0
    %v3180 = vadd.f32 0.0, %v3179
    %v3181 = vpop.f32.mrf.mxu0
    %3182 = vdwg.mxu0
    %v3183 = vpack.c.bf16 %v3180, %v3159
    %v3185 = vsel %vm188, %v3183, 0
    %v3188 = vsel %vm261, %v2663, 0
    %3190 = vmatpush.bf16.msra.mxu0 0
    %3191 = vmatpush.bf16.msra.mxu0 0
    %3192 = vmatpush.bf16.msra.mxu0 0
    %3193 = vmatpush.bf16.msra.mxu0 0
    %3194 = vmatpush.bf16.msra.mxu0 0
    %3195 = vmatpush.bf16.msra.mxu0 0
    %3196 = vmatpush.bf16.msra.mxu0 0
    %3197 = vmatpush.bf16.msra.mxu0 %v3188
    %3198 = vmatmul.bf16.gmra.mxu0 %v3185
    %v3199 = vpop.f32.mrf.mxu0
    %v3200 = vadd.f32 0.0, %v3199
    %v3201 = vpop.f32.mrf.mxu0
    %v3202 = vadd.f32 0.0, %v3201
    %3203 = vdwg.mxu0
    %v3204 = vadd.f32 %v3069, %v3200
    %v3205 = vadd.f32 %v3070, %v3202
    %v3207 = vperm.slane %v2665, 0
    %v3209 = vadd.f32 %v3204, %v3207
    %v3210 = vadd.f32 %v3205, %v3207
    %v3211 = vadd.f32 %v2484, %v3209
    %v3212 = vadd.f32 %v2485, %v3210
    %s3213 = scalar_lea.vmem %s16, 1
    %v3214 = vld [vmem:[%s3213] sm:$0x1]
    %s3215 = scalar_lea.vmem %s17, 1
    %v3216 = vld [vmem:[%s3215] sm:$0x1]
    %v3217 = vmul.f32 %v3211, %v83
    %v3218 = vmul.f32 %v3212, %v83
    %3219 = vadd.xlane.f32.xlu0 %v3217
    %v3220 = vpop.xlane.xlu0 %3219
    %3221 = vadd.xlane.f32.xlu0 %v3218
    %v3222 = vpop.xlane.xlu0 %3221
    %v3223 = vmul.f32 %v3220, 0.03125
    %v3224 = vmul.f32 %v3222, 0.03125
    %v3225 = vsub.f32 %v3217, %v3223
    %v3226 = vsub.f32 %v3218, %v3224
    %v3227 = vmul.f32 %v3225, %v83
    %v3228 = vmul.f32 %v3226, %v83
    %v3229 = vmul.f32 %v3227, %v3227
    %v3230 = vmul.f32 %v3228, %v3228
    %3231 = vadd.xlane.f32.xlu0 %v3229
    %v3232 = vpop.xlane.xlu0 %3231
    %3233 = vadd.xlane.f32.xlu0 %v3230
    %v3234 = vpop.xlane.xlu0 %3233
    %v3235 = vmul.f32 %v3232, 0.03125
    %v3236 = vmul.f32 %v3234, 0.03125
    %v3237 = vadd.f32 %v3235, 1e-05
    %v3238 = vadd.f32 %v3236, 1e-05
    %v3239 = vrsqrt.pop %v3237
    %v3240 = vmul.f32 %v3239, %v3237
    %v3241 = vmul.f32 %v3240, %v3239
    %v3242 = vmul.f32 0.5, %v3241
    %v3243 = vsub.f32 1.5, %v3242
    %v3244 = vmul.f32 %v3239, %v3243
    %vm3245 = vweird.f32 %v3237
    %vm3246 = vweird.f32 %v3239
    %vm3247 = vmor %vm3245, %vm3246
    %v3248 = vsel %vm3247, %v3239, %v3244
    %v3249 = vrsqrt.pop %v3238
    %v3250 = vmul.f32 %v3249, %v3238
    %v3251 = vmul.f32 %v3250, %v3249
    %v3252 = vmul.f32 0.5, %v3251
    %v3253 = vsub.f32 1.5, %v3252
    %v3254 = vmul.f32 %v3249, %v3253
    %vm3255 = vweird.f32 %v3238
    %vm3256 = vweird.f32 %v3249
    %vm3257 = vmor %vm3255, %vm3256
    %v3258 = vsel %vm3257, %v3249, %v3254
    %v3259 = vmul.f32 %v3227, %v3248
    %v3260 = vmul.f32 %v3228, %v3258
    %v3262 = vperm.slane %v3214, 0
    %v3264 = vmul.f32 %v3259, %v3262
    %v3265 = vmul.f32 %v3260, %v3262
    %v3267 = vperm.slane %v3216, 0
    %v3269 = vadd.f32 %v3264, %v3267
    %v3270 = vadd.f32 %v3265, %v3267
    %v3271 = vpack.c.bf16 %v3270, %v3269
    %s3272 = scalar_lea.vmem %s18, 64
    %v3273 = vld [vmem:[%s3272] sm:$0xf]
    %v3274 = vld [vmem:[%s3272 + $0x4] sm:$0xf]
    %v3275 = vld [vmem:[%s3272 + $0x8] sm:$0xf]
    %v3276 = vld [vmem:[%s3272 + $0xc] sm:$0xf]
    %v3277 = vld [vmem:[%s3272 + $0x10] sm:$0xf]
    %v3278 = vld [vmem:[%s3272 + $0x14] sm:$0xf]
    %v3279 = vld [vmem:[%s3272 + $0x18] sm:$0xf]
    %v3280 = vld [vmem:[%s3272 + $0x1c] sm:$0xf]
    %v3281 = vld [vmem:[%s3272 + $0x20] sm:$0xf]
    %v3282 = vld [vmem:[%s3272 + $0x24] sm:$0xf]
    %v3283 = vld [vmem:[%s3272 + $0x28] sm:$0xf]
    %v3284 = vld [vmem:[%s3272 + $0x2c] sm:$0xf]
    %v3285 = vld [vmem:[%s3272 + $0x30] sm:$0xf]
    %v3286 = vld [vmem:[%s3272 + $0x34] sm:$0xf]
    %v3287 = vld [vmem:[%s3272 + $0x38] sm:$0xf]
    %v3288 = vld [vmem:[%s3272 + $0x3c] sm:$0xf]
    %s3289 = scalar_lea.vmem %s19, 1
    %v3290 = vld [vmem:[%s3289] sm:$0x1]
    %v3292 = vperm.slane %v3290, 0
    %v3310 = vunpack.c.l.b16 %v3273
    %v3311 = vunpack.c.l.b16 %v3274
    %v3312 = vunpack.c.l.b16 %v3275
    %v3313 = vunpack.c.l.b16 %v3276
    %v3314 = vunpack.c.l.b16 %v3277
    %v3315 = vunpack.c.l.b16 %v3278
    %v3316 = vunpack.c.l.b16 %v3279
    %v3317 = vunpack.c.l.b16 %v3280
    %v3318 = vunpack.c.l.b16 %v3281
    %v3319 = vunpack.c.l.b16 %v3282
    %v3320 = vunpack.c.l.b16 %v3283
    %v3321 = vunpack.c.l.b16 %v3284
    %v3322 = vunpack.c.l.b16 %v3285
    %v3323 = vunpack.c.l.b16 %v3286
    %v3324 = vunpack.c.l.b16 %v3287
    %v3325 = vunpack.c.l.b16 %v3288
    %v3326 = vpack.c.b16 %v3311, %v3310
    %v3327 = vpack.c.b16 %v3313, %v3312
    %v3328 = vpack.c.b16 %v3315, %v3314
    %v3329 = vpack.c.b16 %v3317, %v3316
    %v3330 = vpack.c.b16 %v3319, %v3318
    %v3331 = vpack.c.b16 %v3321, %v3320
    %v3332 = vpack.c.b16 %v3323, %v3322
    %v3333 = vpack.c.b16 %v3325, %v3324
    %3342 = vmatpush.bf16.msra.mxu0 %v3333
    %3343 = vmatpush.bf16.msra.mxu0 %v3332
    %3344 = vmatpush.bf16.msra.mxu0 %v3331
    %3345 = vmatpush.bf16.msra.mxu0 %v3330
    %3346 = vmatpush.bf16.msra.mxu0 %v3329
    %3347 = vmatpush.bf16.msra.mxu0 %v3328
    %3348 = vmatpush.bf16.msra.mxu0 %v3327
    %3349 = vmatpush.bf16.msra.mxu0 %v3326
    %3350 = vmatmul.bf16.gmra.mxu0 %v3271
    %v3351 = vpop.f32.mrf.mxu0
    %v3352 = vadd.f32 %v3292, %v3351
    %v3353 = vpop.f32.mrf.mxu0
    %v3354 = vadd.f32 %v3292, %v3353
    %3355 = vdwg.mxu0
    %v3356 = vmax.f32 %v3352, 0.0
    %v3357 = vmax.f32 %v3354, 0.0
    %v3358 = vpack.c.bf16 %v3357, %v3356
    %s3359 = scalar_lea.vmem %s20, 64
    %v3360 = vld [vmem:[%s3359] sm:$0xf]
    %v3361 = vld [vmem:[%s3359 + $0x4] sm:$0xf]
    %v3362 = vld [vmem:[%s3359 + $0x8] sm:$0xf]
    %v3363 = vld [vmem:[%s3359 + $0xc] sm:$0xf]
    %v3364 = vld [vmem:[%s3359 + $0x10] sm:$0xf]
    %v3365 = vld [vmem:[%s3359 + $0x14] sm:$0xf]
    %v3366 = vld [vmem:[%s3359 + $0x18] sm:$0xf]
    %v3367 = vld [vmem:[%s3359 + $0x1c] sm:$0xf]
    %v3368 = vld [vmem:[%s3359 + $0x20] sm:$0xf]
    %v3369 = vld [vmem:[%s3359 + $0x24] sm:$0xf]
    %v3370 = vld [vmem:[%s3359 + $0x28] sm:$0xf]
    %v3371 = vld [vmem:[%s3359 + $0x2c] sm:$0xf]
    %v3372 = vld [vmem:[%s3359 + $0x30] sm:$0xf]
    %v3373 = vld [vmem:[%s3359 + $0x34] sm:$0xf]
    %v3374 = vld [vmem:[%s3359 + $0x38] sm:$0xf]
    %v3375 = vld [vmem:[%s3359 + $0x3c] sm:$0xf]
    %s3376 = scalar_lea.vmem %s21, 1
    %v3377 = vld [vmem:[%s3376] sm:$0x1]
    %v3379 = vperm.slane %v3377, 0
    %v3397 = vunpack.c.l.b16 %v3360
    %v3398 = vunpack.c.l.b16 %v3361
    %v3399 = vunpack.c.l.b16 %v3362
    %v3400 = vunpack.c.l.b16 %v3363
    %v3401 = vunpack.c.l.b16 %v3364
    %v3402 = vunpack.c.l.b16 %v3365
    %v3403 = vunpack.c.l.b16 %v3366
    %v3404 = vunpack.c.l.b16 %v3367
    %v3405 = vunpack.c.l.b16 %v3368
    %v3406 = vunpack.c.l.b16 %v3369
    %v3407 = vunpack.c.l.b16 %v3370
    %v3408 = vunpack.c.l.b16 %v3371
    %v3409 = vunpack.c.l.b16 %v3372
    %v3410 = vunpack.c.l.b16 %v3373
    %v3411 = vunpack.c.l.b16 %v3374
    %v3412 = vunpack.c.l.b16 %v3375
    %v3413 = vpack.c.b16 %v3398, %v3397
    %v3414 = vpack.c.b16 %v3400, %v3399
    %v3415 = vpack.c.b16 %v3402, %v3401
    %v3416 = vpack.c.b16 %v3404, %v3403
    %v3417 = vpack.c.b16 %v3406, %v3405
    %v3418 = vpack.c.b16 %v3408, %v3407
    %v3419 = vpack.c.b16 %v3410, %v3409
    %v3420 = vpack.c.b16 %v3412, %v3411
    %3429 = vmatpush.bf16.msra.mxu0 %v3420
    %3430 = vmatpush.bf16.msra.mxu0 %v3419
    %3431 = vmatpush.bf16.msra.mxu0 %v3418
    %3432 = vmatpush.bf16.msra.mxu0 %v3417
    %3433 = vmatpush.bf16.msra.mxu0 %v3416
    %3434 = vmatpush.bf16.msra.mxu0 %v3415
    %3435 = vmatpush.bf16.msra.mxu0 %v3414
    %3436 = vmatpush.bf16.msra.mxu0 %v3413
    %3437 = vmatmul.bf16.gmra.mxu0 %v3358
    %v3438 = vpop.f32.mrf.mxu0
    %v3439 = vadd.f32 %v3379, %v3438
    %v3440 = vpop.f32.mrf.mxu0
    %v3441 = vadd.f32 %v3379, %v3440
    %3442 = vdwg.mxu0
    %v3443 = vadd.f32 %v3269, %v3439
    %v3444 = vadd.f32 %v3270, %v3441
    %s3445 = scalar_lea.vmem %s22, 1
    %v3446 = vld [vmem:[%s3445] sm:$0x1]
    %s3447 = scalar_lea.vmem %s23, 1
    %v3448 = vld [vmem:[%s3447] sm:$0x1]
    %v3449 = vmul.f32 %v3443, %v83
    %v3450 = vmul.f32 %v3444, %v83
    %3451 = vadd.xlane.f32.xlu0 %v3449
    %v3452 = vpop.xlane.xlu0 %3451
    %3453 = vadd.xlane.f32.xlu0 %v3450
    %v3454 = vpop.xlane.xlu0 %3453
    %v3455 = vmul.f32 %v3452, 0.03125
    %v3456 = vmul.f32 %v3454, 0.03125
    %v3457 = vsub.f32 %v3449, %v3455
    %v3458 = vsub.f32 %v3450, %v3456
    %v3459 = vmul.f32 %v3457, %v83
    %v3460 = vmul.f32 %v3458, %v83
    %v3461 = vmul.f32 %v3459, %v3459
    %v3462 = vmul.f32 %v3460, %v3460
    %3463 = vadd.xlane.f32.xlu0 %v3461
    %v3464 = vpop.xlane.xlu0 %3463
    %3465 = vadd.xlane.f32.xlu0 %v3462
    %v3466 = vpop.xlane.xlu0 %3465
    %v3467 = vmul.f32 %v3464, 0.03125
    %v3468 = vmul.f32 %v3466, 0.03125
    %v3469 = vadd.f32 %v3467, 1e-05
    %v3470 = vadd.f32 %v3468, 1e-05
    %v3471 = vrsqrt.pop %v3469
    %v3472 = vmul.f32 %v3471, %v3469
    %v3473 = vmul.f32 %v3472, %v3471
    %v3474 = vmul.f32 0.5, %v3473
    %v3475 = vsub.f32 1.5, %v3474
    %v3476 = vmul.f32 %v3471, %v3475
    %vm3477 = vweird.f32 %v3469
    %vm3478 = vweird.f32 %v3471
    %vm3479 = vmor %vm3477, %vm3478
    %v3480 = vsel %vm3479, %v3471, %v3476
    %v3481 = vrsqrt.pop %v3470
    %v3482 = vmul.f32 %v3481, %v3470
    %v3483 = vmul.f32 %v3482, %v3481
    %v3484 = vmul.f32 0.5, %v3483
    %v3485 = vsub.f32 1.5, %v3484
    %v3486 = vmul.f32 %v3481, %v3485
    %vm3487 = vweird.f32 %v3470
    %vm3488 = vweird.f32 %v3481
    %vm3489 = vmor %vm3487, %vm3488
    %v3490 = vsel %vm3489, %v3481, %v3486
    %v3491 = vmul.f32 %v3459, %v3480
    %v3492 = vmul.f32 %v3460, %v3490
    %v3494 = vperm.slane %v3446, 0
    %v3496 = vmul.f32 %v3491, %v3494
    %v3497 = vmul.f32 %v3492, %v3494
    %v3499 = vperm.slane %v3448, 0
    %v3501 = vadd.f32 %v3496, %v3499
    %v3502 = vadd.f32 %v3497, %v3499
    %3503 = vst [vmem:[#allocation2] sm:$0xff] %v3501
    %3504 = vst [vmem:[#allocation2 + $0x8] sm:$0xff] %v3502
    // Predicated region
    $region98: #{tpu_custom_call.1} parent=1 // pred_check
      _
    $region99: #{tpu_custom_call.1} parent=1 // pred_check_branch
      %3506 = sbr.rel (0) target = $region101
    $region100: #{tpu_custom_call.1} parent=1 // pred_region
      %3508 = vsyncadd [#allocation3], 0
      %s3509 = sshll.u32 [#allocation2], 4
      %s3510 = int_to_ptr.vmem [resolvable:$true] %s3509
      %s3511 = sshll.u32 %s24, 4
      %s3512 = int_to_ptr.hbm [resolvable:$true] %s3511
      %3517 = dma.vmem_to_hbm [thread:$0]  %s3510, 256, %s3512, [#allocation3], 128, 128, 8
    $region101: #{tpu_custom_call.1} parent=1 // pred_fallthru
      _
    // Predicated region
    $region102: #{tpu_custom_call.1} parent=1 // pred_check
      _
    $region103: #{tpu_custom_call.1} parent=1 // pred_check_branch
      %3519 = sbr.rel (0) target = $region105
    $region104: #{tpu_custom_call.1} parent=1 // pred_region
      %3521 = dma.done [#allocation3], 256
    $region105: #{tpu_custom_call.1} parent=1 // pred_fallthru
      _
    %3522 = vsyncpa [#allocation3], 1

</llo_original>
